<compile_context>
chip_gen: v7x
topology: tpu7x:2x2x1
jax: 0.10.0
libtpu: 0.0.40
codegen_flags: <defaults>
</compile_context>

<pallas_src>
import functools
import math

import jax
import jax.numpy as jnp
from jax.experimental import pallas as pl
from jax.experimental.pallas import tpu as pltpu


_HIDDEN = 512  # encoder/decoder hidden width from the PyTorch module


def _whole(shape):
    """Whole-array block (block_shape == array shape), constant index map."""
    return pl.BlockSpec(shape, lambda *_: (0,) * len(shape))


def _tpu_info():
    try:
        return pltpu.get_tpu_info()
    except Exception:
        return None


def _vmem_capacity_bytes(info):
    try:
        v = int(getattr(info, "vmem_capacity_bytes"))
        if v > 0:
            return v
    except Exception:
        pass
    return 64 << 20  # conservative default (v7x per-TensorCore VMEM)


def _tensorcores_per_chip(info, vmem_cap):
    """Best-effort TensorCore-per-chip count (clamped to [1, 2] by caller)."""
    for name in ("num_cores", "core_count", "num_tensorcores",
                 "tensorcore_count", "cores_per_chip", "tensor_cores_per_chip"):
        v = getattr(info, name, None)
        try:
            v = int(v)
        except (TypeError, ValueError):
            continue
        if v >= 1:
            return v
    # Heuristic fallback: among the targeted generations (v5e/v6e/v7x) only
    # v7x has <= 64 MiB VMEM per TensorCore, and it is the only one with 2
    # TensorCores per chip.  Wrong guesses only cost a few % (see col_split).
    return 2 if vmem_cap <= (64 << 20) else 1


def _pick_tile(total, cap):
    """Largest 128-multiple tile <= cap.

    Prefers an exact divisor of `total` within [cap/2, cap] (no partial last
    tile).  If none exists, returns the largest 128-multiple <= cap and the
    caller uses a cdiv grid with a short, masked last tile instead of
    collapsing to a tiny tile (silent perf cliff)."""
    total = int(total)
    cap = max(128, min(int(cap), total))
    best = (cap // 128) * 128
    t = best
    while t >= max(128, best // 2):
        if total % t == 0:
            return t
        t -= 128
    return best


# --------------------------------------------------------------------------
# Kernels
# --------------------------------------------------------------------------
def _enc1_matmul_kernel(x_ref, w_ref, h_ref, acc_ref, *, valid_last, mask_last):
    """K-streamed x @ W_enc1 into an f32 accumulator.

    Grid = (col_split, kt_steps); axis 0 splits the 512 output columns across
    TensorCores (parallel), axis 1 is the K reduction (arbitrary).  If the
    last K tile is short (mask_last), its out-of-bounds weight rows are
    masked to zero (x is zero-padded by the wrapper)."""
    k = pl.program_id(1)
    nk = pl.num_programs(1)

    @pl.when(k == 0)
    def _():
        acc_ref[...] = jnp.zeros_like(acc_ref)

    if not mask_last:
        acc_ref[...] += jnp.dot(x_ref[...], w_ref[...],
                                preferred_element_type=jnp.float32)
    else:
        @pl.when(k < nk - 1)
        def _():
            acc_ref[...] += jnp.dot(x_ref[...], w_ref[...],
                                    preferred_element_type=jnp.float32)

        @pl.when(k == nk - 1)
        def _():
            rows = jax.lax.broadcasted_iota(jnp.int32, w_ref.shape, 0)
            w = jnp.where(rows < valid_last, w_ref[...], 0).astype(w_ref.dtype)
            acc_ref[...] += jnp.dot(x_ref[...], w,
                                    preferred_element_type=jnp.float32)

    @pl.when(k == nk - 1)
    def _():
        h_ref[...] = acc_ref[...]


def _mid_kernel(h1_ref, eb1_ref, ew2_ref, eb2_ref, ew3_ref, eb3_ref,
                dw1_ref, db1_ref, dw2_ref, db2_ref, emb_ref, d2_ref):
    """Epilogue: bias+ReLU on h1, encoder L2/L3, softmax, decoder L1/L2."""
    f32 = jnp.float32
    cd = ew2_ref.dtype  # streamed-weight / activation compute dtype (bf16)

    h = jnp.maximum(h1_ref[...] + eb1_ref[...].astype(f32), 0.0).astype(cd)
    h = jnp.dot(h, ew2_ref[...], preferred_element_type=f32) + eb2_ref[...].astype(f32)
    h = jnp.maximum(h, 0.0).astype(cd)
    logits = jnp.dot(h, ew3_ref[...], preferred_element_type=f32) + eb3_ref[...].astype(f32)

    # softmax over the archetype axis (dim=1).  NOTE: padded batch rows see
    # zero logits -> uniform embedding; they are sliced off by the wrapper.
    m = jnp.max(logits, axis=1, keepdims=True)
    e = jnp.exp(logits - m)
    emb = e / jnp.sum(e, axis=1, keepdims=True)
    emb_ref[...] = emb.astype(emb_ref.dtype)

    d = jnp.dot(emb.astype(cd), dw1_ref[...], preferred_element_type=f32)
    d = jnp.maximum(d + db1_ref[...].astype(f32), 0.0).astype(cd)
    d = jnp.dot(d, dw2_ref[...], preferred_element_type=f32)
    d = jnp.maximum(d + db2_ref[...].astype(f32), 0.0)
    d2_ref[...] = d.astype(d2_ref.dtype)


def _decoder_tail_kernel(d2_ref, dw3_ref, db3_ref, out_ref):
    """Final decoder layer, N-streamed: each grid step consumes one (512, TN)
    column block of W_dec3 and writes a lane-dense bf16 output slab."""
    d = jnp.dot(d2_ref[...], dw3_ref[...], preferred_element_type=jnp.float32)
    d = d + db3_ref[...].astype(jnp.float32)
    out_ref[...] = jnp.maximum(d, 0.0).astype(out_ref.dtype)


# --------------------------------------------------------------------------
# Wrapper
# --------------------------------------------------------------------------
@functools.partial(
    jax.jit,
    static_argnames=("max_token_length", "token_dimensions", "tk", "tn",
                     "col_split"))
def archetypal_head_forward(x, params, *, max_token_length, token_dimensions,
                            tk=None, tn=None, col_split=None):
    """Reproduces ArchetypalHead.forward.

    x: (batch, seq_len, token_dims) -> (output, embedding) with
    output: (batch, seq_len, token_dims), embedding: (batch, num_archetypes).
    """
    input_size = max_token_length * token_dimensions
    assert input_size % 128 == 0, "input_size must be a multiple of 128"
    # TODO(synk): the PyTorch module pads the flattened input to the
    # hard-coded constant 393216, which only type-checks against its own
    # Linear(input_size, 512) when input_size == 393216 (the production
    # 512 x 768 config); we pad to input_size, identical at that config.

    (ew1, eb1, ew2, eb2, ew3, eb3, dw1, db1, dw2, db2, dw3, db3) = params
    num_archetypes = ew3.shape[1]
    hidden = ew1.shape[1]
    cd = ew1.dtype                       # streamed-weight / activation dtype
    wb = jnp.dtype(cd).itemsize

    batch, seq_len = x.shape[0], x.shape[1]
    x_flat = x.reshape(batch, -1)
    if x_flat.shape[1] > input_size:
        raise ValueError(
            f"flattened input ({x_flat.shape[1]}) exceeds input_size "
            f"({input_size}); seq_len must be <= max_token_length")

    # bf16 packs 2 rows per sublane pair -> pad batch to 16 for 16-bit dtypes.
    sub = 16 if wb == 2 else 8
    batch_pad = max(sub, -(-batch // sub) * sub)

    # ---- per-generation VMEM budget, core split, tile sizing ----
    info = _tpu_info()
    vmem_cap = _vmem_capacity_bytes(info)
    vmem_limit = min(int(vmem_cap * 3 // 4), 100 << 20)   # 48 MiB v7x, 96 MiB v5e/v6e
    stream_budget = int(vmem_limit * 0.7)                 # 2 double-buffered streams

    if col_split is None:
        col_split = _tensorcores_per_chip(info, vmem_cap)
    col_split = max(1, min(int(col_split), 2))
    assert hidden % col_split == 0
    hidden_split = hidden // col_split

    # kernel 1a: per K step we double-buffer a (tk, hidden_split) weight tile
    # and a (batch_pad, tk) activation tile.
    tk_cap = tk if tk is not None else (
        stream_budget // (2 * wb * (hidden_split + batch_pad)))
    tk = _pick_tile(input_size, tk_cap)
    kt_steps = -(-input_size // tk)
    k_pad = kt_steps * tk
    valid_last = input_size - (kt_steps - 1) * tk
    mask_last = (valid_last != tk)

    # kernel 2: per N step we double-buffer a (hidden, tn) weight tile, a
    # (batch_pad, tn) output slab and a (1, tn) bias slice.
    tn_cap = tn if tn is not None else (
        stream_budget // (2 * (hidden * wb + batch_pad * wb + 4)))
    tn = _pick_tile(input_size, tn_cap)
    nt_steps = -(-input_size // tn)

    # ---- glue: flatten, zero-pad features to the K grid, pad batch ----
    x_flat = jnp.pad(x_flat, ((0, batch_pad - batch),
                              (0, k_pad - x_flat.shape[1]))).astype(cd)

    # ---- kernel 1a: x @ W_enc1, K-streamed, output columns split over cores
    enc1 = functools.partial(_enc1_matmul_kernel,
                             valid_last=valid_last, mask_last=mask_last)
    h1 = pl.pallas_call(
        enc1,
        out_shape=jax.ShapeDtypeStruct((batch_pad, hidden), jnp.float32),
        grid_spec=pltpu.PrefetchScalarGridSpec(
            num_scalar_prefetch=0,
            grid=(col_split, kt_steps),
            in_specs=[
                pl.BlockSpec((batch_pad, tk), lambda j, k: (0, k)),        # x tile
                pl.BlockSpec((tk, hidden_split), lambda j, k: (k, j)),     # W_enc1 tile
            ],
            out_specs=pl.BlockSpec((batch_pad, hidden_split),
                                   lambda j, k: (0, j)),
            scratch_shapes=[pltpu.VMEM((batch_pad, hidden_split), jnp.float32)],
        ),
        compiler_params=pltpu.CompilerParams(
            dimension_semantics=("parallel", "arbitrary"),
            vmem_limit_bytes=vmem_limit),
        cost_estimate=pl.CostEstimate(
            flops=2 * batch_pad * input_size * hidden,
            transcendentals=0,
            bytes_accessed=(input_size * hidden * wb
                            + col_split * batch_pad * k_pad * wb
                            + batch_pad * hidden * 4)),
    )(x_flat, ew1)

    # ---- kernel 1b: epilogue (small middle layers + softmax) ----
    emb, d2 = pl.pallas_call(
        _mid_kernel,
        out_shape=(
            jax.ShapeDtypeStruct((batch_pad, num_archetypes), jnp.float32),
            jax.ShapeDtypeStruct((batch_pad, hidden), cd),
        ),
        grid_spec=pltpu.PrefetchScalarGridSpec(
            num_scalar_prefetch=0,
            grid=(1,),
            in_specs=[
                _whole((batch_pad, hidden)),
                _whole(eb1.shape), _whole(ew2.shape), _whole(eb2.shape),
                _whole(ew3.shape), _whole(eb3.shape),
                _whole(dw1.shape), _whole(db1.shape),
                _whole(dw2.shape), _whole(db2.shape),
            ],
            out_specs=(
                _whole((batch_pad, num_archetypes)),
                _whole((batch_pad, hidden)),
            ),
        ),
        compiler_params=pltpu.CompilerParams(
            dimension_semantics=("arbitrary",),
            vmem_limit_bytes=vmem_limit),
        cost_estimate=pl.CostEstimate(
            flops=2 * batch_pad * (2 * hidden * hidden
                                   + 2 * hidden * num_archetypes),
            transcendentals=batch_pad * num_archetypes,
            bytes_accessed=(2 * hidden * hidden + 2 * hidden * num_archetypes) * wb
                           + 2 * batch_pad * hidden * 4),
    )(h1, eb1, ew2, eb2, ew3, eb3, dw1, db1, dw2, db2)

    # ---- kernel 2: final decoder layer, N-streamed, bf16 output ----
    decoded = pl.pallas_call(
        _decoder_tail_kernel,
        out_shape=jax.ShapeDtypeStruct((batch_pad, input_size), cd),
        grid_spec=pltpu.PrefetchScalarGridSpec(
            num_scalar_prefetch=0,
            grid=(nt_steps,),
            in_specs=[
                _whole((batch_pad, hidden)),                       # d2 (resident)
                pl.BlockSpec((hidden, tn), lambda n: (0, n)),      # W_dec3 tile
                pl.BlockSpec((1, tn), lambda n: (0, n)),           # b_dec3 tile
            ],
            out_specs=pl.BlockSpec((batch_pad, tn), lambda n: (0, n)),
        ),
        compiler_params=pltpu.CompilerParams(
            dimension_semantics=("parallel",),
            vmem_limit_bytes=vmem_limit),
        cost_estimate=pl.CostEstimate(
            flops=2 * batch_pad * hidden * input_size,
            transcendentals=0,
            bytes_accessed=(hidden * input_size * wb + input_size * 4
                            + batch_pad * hidden * wb
                            + batch_pad * input_size * wb)),
    )(d2, dw3, db3)

    # ---- glue: un-pad batch, reshape, slice back to seq_len, cast to f32 ----
    output = decoded[:batch].reshape(batch, max_token_length, token_dimensions)
    output = output[:, :seq_len, :].astype(jnp.float32)
    return output, emb[:batch]


# --------------------------------------------------------------------------
# Parameters and pure-JAX reference
# --------------------------------------------------------------------------
def make_params(key, max_token_length, token_dimensions, num_archetypes,
                hidden=_HIDDEN, weight_dtype=jnp.bfloat16, bias_dtype=jnp.float32):
    """Synthetic parameters matching the module's shapes.

    Weights stored (in_features, out_features) in bf16 (halves HBM traffic of
    the two big streamed layers); biases (1, out_features) in f32."""
    input_size = max_token_length * token_dimensions
    dims = [
        (input_size, hidden), (hidden, hidden), (hidden, num_archetypes),   # encoder
        (num_archetypes, hidden), (hidden, hidden), (hidden, input_size),   # decoder
    ]
    keys = jax.random.split(key, len(dims))
    params = []
    for k, (din, dout) in zip(keys, dims):
        kw, kb = jax.random.split(k)
        bound = 1.0 / math.sqrt(din)  # PyTorch Linear default init range
        w = jax.random.uniform(kw, (din, dout), jnp.float32, -bound, bound)
        b = jax.random.uniform(kb, (1, dout), jnp.float32, -bound, bound)
        params.extend([w.astype(weight_dtype), b.astype(bias_dtype)])
    return tuple(params)


def _reference_forward(x, params, max_token_length, token_dimensions):
    """Pure-JAX reference mirroring the kernel's mixed-precision recipe."""
    (ew1, eb1, ew2, eb2, ew3, eb3, dw1, db1, dw2, db2, dw3, db3) = params
    input_size = max_token_length * token_dimensions
    b, s, _ = x.shape
    cd = ew1.dtype
    f32 = jnp.float32

    xf = x.reshape(b, -1)
    xf = jnp.pad(xf, ((0, 0), (0, input_size - xf.shape[1]))).astype(cd)

    h = jnp.dot(xf, ew1, preferred_element_type=f32) + eb1.astype(f32)
    h = jnp.maximum(h, 0.0).astype(cd)
    h = jnp.dot(h, ew2, preferred_element_type=f32) + eb2.astype(f32)
    h = jnp.maximum(h, 0.0).astype(cd)
    logits = jnp.dot(h, ew3, preferred_element_type=f32) + eb3.astype(f32)
    emb = jax.nn.softmax(logits, axis=1)

    o = jnp.dot(emb.astype(cd), dw1, preferred_element_type=f32) + db1.astype(f32)
    o = jnp.maximum(o, 0.0).astype(cd)
    o = jnp.dot(o, dw2, preferred_element_type=f32) + db2.astype(f32)
    o = jnp.maximum(o, 0.0).astype(cd)
    o = jnp.dot(o, dw3, preferred_element_type=f32) + db3.astype(f32)
    o = jnp.maximum(o, 0.0).astype(cd)          # kernel 2 stores bf16
    o = o.reshape(b, max_token_length, token_dimensions)[:, :s, :].astype(f32)
    return o, emb


if __name__ == "__main__":
    def run_case(case_id, *, max_token_length, token_dimensions, num_archetypes,
                 batch, seq_len, tk=None, tn=None, col_split=None):
        kx, kp = jax.random.split(jax.random.fold_in(jax.random.PRNGKey(0), case_id))
        x = jax.random.normal(kx, (batch, seq_len, token_dimensions), jnp.float32)
        params = make_params(kp, max_token_length, token_dimensions, num_archetypes)

        out, emb = archetypal_head_forward(
            x, params, max_token_length=max_token_length,
            token_dimensions=token_dimensions, tk=tk, tn=tn, col_split=col_split)
        jax.block_until_ready((out, emb))

        ref_out, ref_emb = _reference_forward(x, params, max_token_length,
                                              token_dimensions)
        assert out.shape == (batch, seq_len, token_dimensions)
        assert emb.shape == (batch, num_archetypes)
        assert jnp.allclose(out, ref_out, atol=2e-2, rtol=2e-2), (
            case_id, float(jnp.max(jnp.abs(out - ref_out))))
        assert jnp.allclose(emb, ref_emb, atol=2e-2, rtol=2e-2), (
            case_id, float(jnp.max(jnp.abs(emb - ref_emb))))

    # Case 0: exact-dividing tiles, forced 2-way column split of W_enc1 (the
    # v7x path), multi-step K and N grids, batch/seq padding exercised.
    run_case(0, max_token_length=8, token_dimensions=32, num_archetypes=16,
             batch=2, seq_len=6, tk=128, tn=128, col_split=2)
    # Case 1: non-dividing tile caps (input_size=640, tile=384) -> short
    # masked last K tile + partial final output slab (cdiv grids).
    run_case(1, max_token_length=8, token_dimensions=80, num_archetypes=16,
             batch=3, seq_len=5, tk=384, tn=384, col_split=1)
    # Case 2: fully automatic tile sizing / core-split detection path.
    run_case(2, max_token_length=8, token_dimensions=32, num_archetypes=16,
             batch=2, seq_len=8)

    print("KERNEL_OK")
</pallas_src>

<mosaic_0001>
module attributes {stable_mosaic.version = 11 : i64} {
  func.func @_decoder_tail_kernel(%arg0: i32, %arg1: memref<16x512xbf16, #tpu.memory_space<vmem>>, %arg2: memref<512x128xbf16, #tpu.memory_space<vmem>>, %arg3: memref<1x128xf32, #tpu.memory_space<vmem>>, %arg4: memref<16x128xbf16, #tpu.memory_space<vmem>>) attributes {dimension_semantics = [#tpu.dimension_semantics<parallel>], iteration_bounds = array<i64: 2>, scalar_prefetch = 0 : i64, scratch_operands = 0 : i64, tpu.core_type = #tpu.core_type<tc>, window_params = [{pipeline_mode = #tpu.pipeline_mode<synchronous>, transform_indices = @transform_0, window_bounds = array<i64: 16, 512>}, {transform_indices = @transform_1, window_bounds = array<i64: 512, 128>}, {transform_indices = @transform_2, window_bounds = array<i64: 1, 128>}, {transform_indices = @transform_3, window_bounds = array<i64: 16, 128>}]} {
    %c0 = arith.constant 0 : index
    %c0_0 = arith.constant 0 : index
    %0 = vector.load %arg1[%c0, %c0_0] : memref<16x512xbf16, #tpu.memory_space<vmem>>, vector<16x512xbf16>
    %c0_1 = arith.constant 0 : index
    %c0_2 = arith.constant 0 : index
    %1 = vector.load %arg2[%c0_1, %c0_2] : memref<512x128xbf16, #tpu.memory_space<vmem>>, vector<512x128xbf16>
    %cst = arith.constant dense<0.000000e+00> : vector<16x128xf32>
    %2 = tpu.matmul %0, %1, %cst {dimension_numbers = #tpu.dot_dimension_numbers<[1], [0], [0], [1], [0, 0, 1, 1], [], []>} : vector<16x512xbf16>, vector<512x128xbf16>, vector<16x128xf32> -> vector<16x128xf32>
    %c0_3 = arith.constant 0 : index
    %c0_4 = arith.constant 0 : index
    %3 = vector.load %arg3[%c0_3, %c0_4] : memref<1x128xf32, #tpu.memory_space<vmem>>, vector<1x128xf32>
    %4 = vector.broadcast %3 : vector<1x128xf32> to vector<16x128xf32>
    %5 = arith.addf %2, %4 : vector<16x128xf32>
    %cst_5 = arith.constant 0.000000e+00 : f32
    %6 = vector.broadcast %cst_5 : f32 to vector<16x128xf32>
    %7 = arith.maximumf %5, %6 : vector<16x128xf32>
    %8 = arith.truncf %7 : vector<16x128xf32> to vector<16x128xbf16>
    %c0_6 = arith.constant 0 : index
    %c0_7 = arith.constant 0 : index
    %9 = vector.load %arg4[%c0_6, %c0_7] : memref<16x128xbf16, #tpu.memory_space<vmem>>, vector<16x128xbf16>
    tpu.vector_store %arg4[%c0_6, %c0_7], %8 {strides = array<i32>} : memref<16x128xbf16, #tpu.memory_space<vmem>>, vector<16x128xbf16>,
    return
  }
  func.func @transform_0(%arg0: i32) -> (i32, i32) {
    %c0_i32 = arith.constant 0 : i32
    %c0_i32_0 = arith.constant 0 : i32
    %c0_i32_1 = arith.constant 0 : i32
    return %c0_i32, %c0_i32_0 : i32, i32
  }
  func.func @transform_1(%arg0: i32) -> (i32, i32) {
    %c0_i32 = arith.constant 0 : i32
    %c0_i32_0 = arith.constant 0 : i32
    return %c0_i32, %arg0 : i32, i32
  }
  func.func @transform_2(%arg0: i32) -> (i32, i32) {
    %c0_i32 = arith.constant 0 : i32
    %c0_i32_0 = arith.constant 0 : i32
    return %c0_i32, %arg0 : i32, i32
  }
  func.func @transform_3(%arg0: i32) -> (i32, i32) {
    %c0_i32 = arith.constant 0 : i32
    %c0_i32_0 = arith.constant 0 : i32
    return %c0_i32, %arg0 : i32, i32
  }
}

module attributes {stable_mosaic.version = 11 : i64} {
  func.func @_mid_kernel(%arg0: i32, %arg1: memref<16x512xf32, #tpu.memory_space<vmem>>, %arg2: memref<1x512xf32, #tpu.memory_space<vmem>>, %arg3: memref<512x512xbf16, #tpu.memory_space<vmem>>, %arg4: memref<1x512xf32, #tpu.memory_space<vmem>>, %arg5: memref<512x16xbf16, #tpu.memory_space<vmem>>, %arg6: memref<1x16xf32, #tpu.memory_space<vmem>>, %arg7: memref<16x512xbf16, #tpu.memory_space<vmem>>, %arg8: memref<1x512xf32, #tpu.memory_space<vmem>>, %arg9: memref<512x512xbf16, #tpu.memory_space<vmem>>, %arg10: memref<1x512xf32, #tpu.memory_space<vmem>>, %arg11: memref<16x16xf32, #tpu.memory_space<vmem>>, %arg12: memref<16x512xbf16, #tpu.memory_space<vmem>>) attributes {dimension_semantics = [#tpu.dimension_semantics<arbitrary>], iteration_bounds = array<i64: 1>, scalar_prefetch = 0 : i64, scratch_operands = 0 : i64, tpu.core_type = #tpu.core_type<tc>, window_params = [{pipeline_mode = #tpu.pipeline_mode<synchronous>, transform_indices = @transform_0, window_bounds = array<i64: 16, 512>}, {pipeline_mode = #tpu.pipeline_mode<synchronous>, transform_indices = @transform_1, window_bounds = array<i64: 1, 512>}, {pipeline_mode = #tpu.pipeline_mode<synchronous>, transform_indices = @transform_2, window_bounds = array<i64: 512, 512>}, {pipeline_mode = #tpu.pipeline_mode<synchronous>, transform_indices = @transform_3, window_bounds = array<i64: 1, 512>}, {pipeline_mode = #tpu.pipeline_mode<synchronous>, transform_indices = @transform_4, window_bounds = array<i64: 512, 16>}, {pipeline_mode = #tpu.pipeline_mode<synchronous>, transform_indices = @transform_5, window_bounds = array<i64: 1, 16>}, {pipeline_mode = #tpu.pipeline_mode<synchronous>, transform_indices = @transform_6, window_bounds = array<i64: 16, 512>}, {pipeline_mode = #tpu.pipeline_mode<synchronous>, transform_indices = @transform_7, window_bounds = array<i64: 1, 512>}, {pipeline_mode = #tpu.pipeline_mode<synchronous>, transform_indices = @transform_8, window_bounds = array<i64: 512, 512>}, {pipeline_mode = #tpu.pipeline_mode<synchronous>, transform_indices = @transform_9, window_bounds = array<i64: 1, 512>}, {pipeline_mode = #tpu.pipeline_mode<synchronous>, transform_indices = @transform_10, window_bounds = array<i64: 16, 16>}, {pipeline_mode = #tpu.pipeline_mode<synchronous>, transform_indices = @transform_11, window_bounds = array<i64: 16, 512>}]} {
    %c0 = arith.constant 0 : index
    %c0_0 = arith.constant 0 : index
    %0 = vector.load %arg1[%c0, %c0_0] : memref<16x512xf32, #tpu.memory_space<vmem>>, vector<16x512xf32>
    %c0_1 = arith.constant 0 : index
    %c0_2 = arith.constant 0 : index
    %1 = vector.load %arg2[%c0_1, %c0_2] : memref<1x512xf32, #tpu.memory_space<vmem>>, vector<1x512xf32>
    %2 = vector.broadcast %1 : vector<1x512xf32> to vector<16x512xf32>
    %3 = arith.addf %0, %2 : vector<16x512xf32>
    %cst = arith.constant 0.000000e+00 : f32
    %4 = vector.broadcast %cst : f32 to vector<16x512xf32>
    %5 = arith.maximumf %3, %4 : vector<16x512xf32>
    %6 = arith.truncf %5 : vector<16x512xf32> to vector<16x512xbf16>
    %c0_3 = arith.constant 0 : index
    %c0_4 = arith.constant 0 : index
    %7 = vector.load %arg3[%c0_3, %c0_4] : memref<512x512xbf16, #tpu.memory_space<vmem>>, vector<512x512xbf16>
    %cst_5 = arith.constant dense<0.000000e+00> : vector<16x512xf32>
    %8 = tpu.matmul %6, %7, %cst_5 {dimension_numbers = #tpu.dot_dimension_numbers<[1], [0], [0], [1], [0, 0, 1, 1], [], []>} : vector<16x512xbf16>, vector<512x512xbf16>, vector<16x512xf32> -> vector<16x512xf32>
    %c0_6 = arith.constant 0 : index
    %c0_7 = arith.constant 0 : index
    %9 = vector.load %arg4[%c0_6, %c0_7] : memref<1x512xf32, #tpu.memory_space<vmem>>, vector<1x512xf32>
    %10 = vector.broadcast %9 : vector<1x512xf32> to vector<16x512xf32>
    %11 = arith.addf %8, %10 : vector<16x512xf32>
    %cst_8 = arith.constant 0.000000e+00 : f32
    %12 = vector.broadcast %cst_8 : f32 to vector<16x512xf32>
    %13 = arith.maximumf %11, %12 : vector<16x512xf32>
    %14 = arith.truncf %13 : vector<16x512xf32> to vector<16x512xbf16>
    %c0_9 = arith.constant 0 : index
    %c0_10 = arith.constant 0 : index
    %15 = vector.load %arg5[%c0_9, %c0_10] : memref<512x16xbf16, #tpu.memory_space<vmem>>, vector<512x16xbf16>
    %cst_11 = arith.constant dense<0.000000e+00> : vector<16x16xf32>
    %16 = tpu.matmul %14, %15, %cst_11 {dimension_numbers = #tpu.dot_dimension_numbers<[1], [0], [0], [1], [0, 0, 1, 1], [], []>} : vector<16x512xbf16>, vector<512x16xbf16>, vector<16x16xf32> -> vector<16x16xf32>
    %c0_12 = arith.constant 0 : index
    %c0_13 = arith.constant 0 : index
    %17 = vector.load %arg6[%c0_12, %c0_13] : memref<1x16xf32, #tpu.memory_space<vmem>>, vector<1x16xf32>
    %18 = vector.broadcast %17 : vector<1x16xf32> to vector<16x16xf32>
    %19 = arith.addf %16, %18 : vector<16x16xf32>
    %cst_14 = arith.constant dense<0xFF800000> : vector<16xf32>
    %20 = vector.multi_reduction <maximumf>, %19, %cst_14 [1] : vector<16x16xf32> to vector<16xf32>
    %21 = vector.shape_cast %20 : vector<16xf32> to vector<16x1xf32>
    %22 = vector.broadcast %21 : vector<16x1xf32> to vector<16x16xf32>
    %23 = arith.subf %19, %22 : vector<16x16xf32>
    %24 = math.exp %23 : vector<16x16xf32>
    %cst_15 = arith.constant dense<0.000000e+00> : vector<16xf32>
    %25 = vector.multi_reduction <add>, %24, %cst_15 [1] : vector<16x16xf32> to vector<16xf32>
    %26 = vector.shape_cast %25 : vector<16xf32> to vector<16x1xf32>
    %27 = vector.broadcast %26 : vector<16x1xf32> to vector<16x16xf32>
    %28 = arith.divf %24, %27 : vector<16x16xf32>
    %c0_16 = arith.constant 0 : index
    %c0_17 = arith.constant 0 : index
    %29 = vector.load %arg11[%c0_16, %c0_17] : memref<16x16xf32, #tpu.memory_space<vmem>>, vector<16x16xf32>
    tpu.vector_store %arg11[%c0_16, %c0_17], %28 {strides = array<i32>} : memref<16x16xf32, #tpu.memory_space<vmem>>, vector<16x16xf32>,
    %30 = arith.truncf %28 : vector<16x16xf32> to vector<16x16xbf16>
    %c0_18 = arith.constant 0 : index
    %c0_19 = arith.constant 0 : index
    %31 = vector.load %arg7[%c0_18, %c0_19] : memref<16x512xbf16, #tpu.memory_space<vmem>>, vector<16x512xbf16>
    %cst_20 = arith.constant dense<0.000000e+00> : vector<16x512xf32>
    %32 = tpu.matmul %30, %31, %cst_20 {dimension_numbers = #tpu.dot_dimension_numbers<[1], [0], [0], [1], [0, 0, 1, 1], [], []>} : vector<16x16xbf16>, vector<16x512xbf16>, vector<16x512xf32> -> vector<16x512xf32>
    %c0_21 = arith.constant 0 : index
    %c0_22 = arith.constant 0 : index
    %33 = vector.load %arg8[%c0_21, %c0_22] : memref<1x512xf32, #tpu.memory_space<vmem>>, vector<1x512xf32>
    %34 = vector.broadcast %33 : vector<1x512xf32> to vector<16x512xf32>
    %35 = arith.addf %32, %34 : vector<16x512xf32>
    %cst_23 = arith.constant 0.000000e+00 : f32
    %36 = vector.broadcast %cst_23 : f32 to vector<16x512xf32>
    %37 = arith.maximumf %35, %36 : vector<16x512xf32>
    %38 = arith.truncf %37 : vector<16x512xf32> to vector<16x512xbf16>
    %c0_24 = arith.constant 0 : index
    %c0_25 = arith.constant 0 : index
    %39 = vector.load %arg9[%c0_24, %c0_25] : memref<512x512xbf16, #tpu.memory_space<vmem>>, vector<512x512xbf16>
    %cst_26 = arith.constant dense<0.000000e+00> : vector<16x512xf32>
    %40 = tpu.matmul %38, %39, %cst_26 {dimension_numbers = #tpu.dot_dimension_numbers<[1], [0], [0], [1], [0, 0, 1, 1], [], []>} : vector<16x512xbf16>, vector<512x512xbf16>, vector<16x512xf32> -> vector<16x512xf32>
    %c0_27 = arith.constant 0 : index
    %c0_28 = arith.constant 0 : index
    %41 = vector.load %arg10[%c0_27, %c0_28] : memref<1x512xf32, #tpu.memory_space<vmem>>, vector<1x512xf32>
    %42 = vector.broadcast %41 : vector<1x512xf32> to vector<16x512xf32>
    %43 = arith.addf %40, %42 : vector<16x512xf32>
    %cst_29 = arith.constant 0.000000e+00 : f32
    %44 = vector.broadcast %cst_29 : f32 to vector<16x512xf32>
    %45 = arith.maximumf %43, %44 : vector<16x512xf32>
    %46 = arith.truncf %45 : vector<16x512xf32> to vector<16x512xbf16>
    %c0_30 = arith.constant 0 : index
    %c0_31 = arith.constant 0 : index
    %47 = vector.load %arg12[%c0_30, %c0_31] : memref<16x512xbf16, #tpu.memory_space<vmem>>, vector<16x512xbf16>
    tpu.vector_store %arg12[%c0_30, %c0_31], %46 {strides = array<i32>} : memref<16x512xbf16, #tpu.memory_space<vmem>>, vector<16x512xbf16>,
    return
  }
  func.func @transform_0(%arg0: i32) -> (i32, i32) {
    %c0_i32 = arith.constant 0 : i32
    %c0_i32_0 = arith.constant 0 : i32
    %c0_i32_1 = arith.constant 0 : i32
    return %c0_i32, %c0_i32_0 : i32, i32
  }
  func.func @transform_1(%arg0: i32) -> (i32, i32) {
    %c0_i32 = arith.constant 0 : i32
    %c0_i32_0 = arith.constant 0 : i32
    %c0_i32_1 = arith.constant 0 : i32
    return %c0_i32, %c0_i32_0 : i32, i32
  }
  func.func @transform_2(%arg0: i32) -> (i32, i32) {
    %c0_i32 = arith.constant 0 : i32
    %c0_i32_0 = arith.constant 0 : i32
    %c0_i32_1 = arith.constant 0 : i32
    return %c0_i32, %c0_i32_0 : i32, i32
  }
  func.func @transform_3(%arg0: i32) -> (i32, i32) {
    %c0_i32 = arith.constant 0 : i32
    %c0_i32_0 = arith.constant 0 : i32
    %c0_i32_1 = arith.constant 0 : i32
    return %c0_i32, %c0_i32_0 : i32, i32
  }
  func.func @transform_4(%arg0: i32) -> (i32, i32) {
    %c0_i32 = arith.constant 0 : i32
    %c0_i32_0 = arith.constant 0 : i32
    %c0_i32_1 = arith.constant 0 : i32
    return %c0_i32, %c0_i32_0 : i32, i32
  }
  func.func @transform_5(%arg0: i32) -> (i32, i32) {
    %c0_i32 = arith.constant 0 : i32
    %c0_i32_0 = arith.constant 0 : i32
    %c0_i32_1 = arith.constant 0 : i32
    return %c0_i32, %c0_i32_0 : i32, i32
  }
  func.func @transform_6(%arg0: i32) -> (i32, i32) {
    %c0_i32 = arith.constant 0 : i32
    %c0_i32_0 = arith.constant 0 : i32
    %c0_i32_1 = arith.constant 0 : i32
    return %c0_i32, %c0_i32_0 : i32, i32
  }
  func.func @transform_7(%arg0: i32) -> (i32, i32) {
    %c0_i32 = arith.constant 0 : i32
    %c0_i32_0 = arith.constant 0 : i32
    %c0_i32_1 = arith.constant 0 : i32
    return %c0_i32, %c0_i32_0 : i32, i32
  }
  func.func @transform_8(%arg0: i32) -> (i32, i32) {
    %c0_i32 = arith.constant 0 : i32
    %c0_i32_0 = arith.constant 0 : i32
    %c0_i32_1 = arith.constant 0 : i32
    return %c0_i32, %c0_i32_0 : i32, i32
  }
  func.func @transform_9(%arg0: i32) -> (i32, i32) {
    %c0_i32 = arith.constant 0 : i32
    %c0_i32_0 = arith.constant 0 : i32
    %c0_i32_1 = arith.constant 0 : i32
    return %c0_i32, %c0_i32_0 : i32, i32
  }
  func.func @transform_10(%arg0: i32) -> (i32, i32) {
    %c0_i32 = arith.constant 0 : i32
    %c0_i32_0 = arith.constant 0 : i32
    %c0_i32_1 = arith.constant 0 : i32
    return %c0_i32, %c0_i32_0 : i32, i32
  }
  func.func @transform_11(%arg0: i32) -> (i32, i32) {
    %c0_i32 = arith.constant 0 : i32
    %c0_i32_0 = arith.constant 0 : i32
    %c0_i32_1 = arith.constant 0 : i32
    return %c0_i32, %c0_i32_0 : i32, i32
  }
}

module attributes {stable_mosaic.version = 11 : i64} {
  func.func @_enc1_matmul_kernel(%arg0: i32, %arg1: i32, %arg2: memref<16x128xbf16, #tpu.memory_space<vmem>>, %arg3: memref<128x256xbf16, #tpu.memory_space<vmem>>, %arg4: memref<16x256xf32, #tpu.memory_space<vmem>>, %arg5: memref<16x256xf32, #tpu.memory_space<vmem>>) attributes {dimension_semantics = [#tpu.dimension_semantics<parallel>, #tpu.dimension_semantics<arbitrary>], iteration_bounds = array<i64: 2, 2>, scalar_prefetch = 0 : i64, scratch_operands = 1 : i64, tpu.core_type = #tpu.core_type<tc>, window_params = [{transform_indices = @transform_0, window_bounds = array<i64: 16, 128>}, {transform_indices = @transform_1, window_bounds = array<i64: 128, 256>}, {transform_indices = @transform_2, window_bounds = array<i64: 16, 256>}]} {
    %c0_i32 = arith.constant 0 : i32
    %0 = arith.cmpi eq, %arg1, %c0_i32 : i32
    %1 = arith.extui %0 : i1 to i32
    %c0_i32_0 = arith.constant 0 : i32
    %2 = arith.cmpi ne, %1, %c0_i32_0 : i32
    scf.if %2 {
      %cst_9 = arith.constant 0.000000e+00 : f32
      %12 = vector.broadcast %cst_9 : f32 to vector<16x256xf32>
      %c0_10 = arith.constant 0 : index
      %c0_11 = arith.constant 0 : index
      %13 = vector.load %arg5[%c0_10, %c0_11] : memref<16x256xf32, #tpu.memory_space<vmem>>, vector<16x256xf32>
      tpu.vector_store %arg5[%c0_10, %c0_11], %12 {strides = array<i32>} : memref<16x256xf32, #tpu.memory_space<vmem>>, vector<16x256xf32>,
    } else {
    }
    %c0 = arith.constant 0 : index
    %c0_1 = arith.constant 0 : index
    %3 = vector.load %arg5[%c0, %c0_1] : memref<16x256xf32, #tpu.memory_space<vmem>>, vector<16x256xf32>
    %c0_2 = arith.constant 0 : index
    %c0_3 = arith.constant 0 : index
    %4 = vector.load %arg2[%c0_2, %c0_3] : memref<16x128xbf16, #tpu.memory_space<vmem>>, vector<16x128xbf16>
    %c0_4 = arith.constant 0 : index
    %c0_5 = arith.constant 0 : index
    %5 = vector.load %arg3[%c0_4, %c0_5] : memref<128x256xbf16, #tpu.memory_space<vmem>>, vector<128x256xbf16>
    %cst = arith.constant dense<0.000000e+00> : vector<16x256xf32>
    %6 = tpu.matmul %4, %5, %cst {dimension_numbers = #tpu.dot_dimension_numbers<[1], [0], [0], [1], [0, 0, 1, 1], [], []>} : vector<16x128xbf16>, vector<128x256xbf16>, vector<16x256xf32> -> vector<16x256xf32>
    %7 = arith.addf %3, %6 : vector<16x256xf32>
    %c0_6 = arith.constant 0 : index
    %c0_7 = arith.constant 0 : index
    %8 = vector.load %arg5[%c0_6, %c0_7] : memref<16x256xf32, #tpu.memory_space<vmem>>, vector<16x256xf32>
    tpu.vector_store %arg5[%c0_6, %c0_7], %7 {strides = array<i32>} : memref<16x256xf32, #tpu.memory_space<vmem>>, vector<16x256xf32>,
    %c1_i32 = arith.constant 1 : i32
    %9 = arith.cmpi eq, %arg1, %c1_i32 : i32
    %10 = arith.extui %9 : i1 to i32
    %c0_i32_8 = arith.constant 0 : i32
    %11 = arith.cmpi ne, %10, %c0_i32_8 : i32
    scf.if %11 {
      %c0_9 = arith.constant 0 : index
      %c0_10 = arith.constant 0 : index
      %12 = vector.load %arg5[%c0_9, %c0_10] : memref<16x256xf32, #tpu.memory_space<vmem>>, vector<16x256xf32>
      %c0_11 = arith.constant 0 : index
      %c0_12 = arith.constant 0 : index
      %13 = vector.load %arg4[%c0_11, %c0_12] : memref<16x256xf32, #tpu.memory_space<vmem>>, vector<16x256xf32>
      tpu.vector_store %arg4[%c0_11, %c0_12], %12 {strides = array<i32>} : memref<16x256xf32, #tpu.memory_space<vmem>>, vector<16x256xf32>,
    } else {
    }
    return
  }
  func.func @transform_0(%arg0: i32, %arg1: i32) -> (i32, i32) {
    %c0_i32 = arith.constant 0 : i32
    %c0_i32_0 = arith.constant 0 : i32
    return %c0_i32, %arg1 : i32, i32
  }
  func.func @transform_1(%arg0: i32, %arg1: i32) -> (i32, i32) {
    %c0_i32 = arith.constant 0 : i32
    return %arg1, %arg0 : i32, i32
  }
  func.func @transform_2(%arg0: i32, %arg1: i32) -> (i32, i32) {
    %c0_i32 = arith.constant 0 : i32
    %c0_i32_0 = arith.constant 0 : i32
    return %c0_i32, %arg0 : i32, i32
  }
}

</mosaic_0001>

<llo_original>
// kernel: archetypal_head_forward.3
$region0: #{archetypal_head_forward.3}
  #allocation0 [shape = 'u32[]', space=smem, size = 0x4, offset = 0x4, fixed_abs, tag = 'smem constant byte address 0x4 - core index']
  #allocation1 [shape = 'u32[144,128]{1,0:T(1,128)}', space=vmem, size = 0x12000, scoped, tag = 'internal scratch']
  #allocation2 [shape = 'f32[16,256]{1,0:T(8,128)}', space=vmem, size = 0x4000, scoped, tag = 'scratch operand']
  %s0 = inlined_call_operand.vmem [shape: bf16[16,256], index: 0, kind: input, shape index: {}]
  %s1 = inlined_call_operand.hbm [shape: bf16[256,512], index: 1, kind: input, shape index: {}]
  %s2 = inlined_call_operand.vmem [shape: f32[16,512], index: 2, kind: output, shape index: {}]
  %s3 = sld [smem:[#allocation0]]
  $region113: #{archetypal_head_forward.3} parent=0
    _
  %s5 = ssub.s32 1, %s3
  %s6 = scalar_select 0, %s5, %s3
  $region1: #{archetypal_head_forward.3} parent=0
    #allocation3 [shape = 'u8[8192]{0}', space=vmem, size = 0x2000, scoped, tag = 'input window, operand 0']
    #allocation4 [shape = 'u8[131072]{0}', space=vmem, size = 0x20000, scoped, tag = 'input window, operand 1']
    #allocation5 [shape = 's32[2]{0}', space=sflag, size = 0x8, scoped, tag = 'scoped memory for archetypal_head_forward.3']
    #allocation6 [shape = 'u8[32768]{0}', space=vmem, size = 0x8000, scoped, tag = 'output window, operand 0']
    %7 = vsyncpa [#allocation5], 0
    %s8 = scalar_lea.sflag [#allocation5], 1
    %9 = vsyncpa %s8, 0
    loop: start=0, step=1, limit=6
    $region2: #{archetypal_head_forward.3} parent=1 // loop_pre_header
      _
    $region3: #{archetypal_head_forward.3} parent=1 // loop_header
      %s11 = sphi 0, %s15
      %p12 = scmp.ge.s32.totalorder %s11, 6
      %s18 = sphi 0, %s30
      %s19 = sphi 0, %s26
      %s20 = sphi 0, %s18
      %s21 = sphi 0, %s19
      %s22 = sphi 0, %s20
      %s23 = sphi 0, %s21
      %s33 = sphi 0, %s35
      %s36 = sphi 0, %s33
      %s37 = sphi 0, %s36
      %s53 = sphi 0, %s37
      %s61 = sphi 0, %s63
      %s64 = sphi 0, %s61
      %s65 = sphi 0, %s64
      %s81 = sphi 0, %s65
      %s87 = sphi 0, %s89
      %s90 = sphi 0, %s87
      %s91 = sphi 0, %s90
      %s107 = sphi 0, %s91
    $region4: #{archetypal_head_forward.3} parent=1 // loop_header_branch
      %14 = sbr.rel (%p12) target = $region8
    $region5: #{archetypal_head_forward.3} parent=1 // loop_body
      %s16 = ssub.s32 %s11, 1
      %s17 = ssub.s32 %s11, 2
      %s24 = sadd.s32 1, %s19
      %p25 = scmp.ge.s32.totalorder %s24, 2
      %s26 = scalar_select %p25, 0, %s24
      %s27 = sadd.s32 1, %s18
      %s28 = scalar_select %p25, %s27, %s18
      %p29 = scmp.ge.s32.totalorder %s28, 2
      %s30 = scalar_select %p29, 0, %s28
      %s31 = ssub.s32 %s19, %s26
      %p32 = scmp.eq.s32.totalorder %s31, 0
      %s34 = sadd.s32 %s33, 1
      %s35 = scalar_select %p32, %s33, %s34
      %p38 = pneg %p32
      %p39 = scmp.eq.s32.totalorder %s11, 3
      %p40 = por %p38, %p39
      %p41 = scmp.ne.s32.totalorder %s33, %s36
      %p42 = scmp.eq.s32.totalorder %s11, 0
      %p43 = por %p41, %p42
      %p44 = scmp.ne.s32.totalorder %s33, %s36
      %p45 = scmp.eq.s32.totalorder %s16, 3
      %p46 = por %p44, %p45
      %p47 = scmp.ne.s32.totalorder %s36, %s37
      %p48 = scmp.eq.s32.totalorder %s16, 0
      %p49 = por %p47, %p48
      %p50 = scmp.ne.s32.totalorder %s36, %s37
      %p51 = scmp.eq.s32.totalorder %s17, 3
      %p52 = por %p50, %p51
      %p54 = scmp.ne.s32.totalorder %s37, %s53
      %p55 = scmp.eq.s32.totalorder %s17, 0
      %p56 = por %p54, %p55
      %s57 = ssub.s32 %s19, %s26
      %s58 = ssub.s32 %s18, %s30
      %s59 = sor.u32 %s57, %s58
      %p60 = scmp.eq.s32.totalorder %s59, 0
      %s62 = sadd.s32 %s61, 1
      %s63 = scalar_select %p60, %s61, %s62
      %p66 = pneg %p60
      %p67 = scmp.eq.s32.totalorder %s11, 3
      %p68 = por %p66, %p67
      %p69 = scmp.ne.s32.totalorder %s61, %s64
      %p70 = scmp.eq.s32.totalorder %s11, 0
      %p71 = por %p69, %p70
      %p72 = scmp.ne.s32.totalorder %s61, %s64
      %p73 = scmp.eq.s32.totalorder %s16, 3
      %p74 = por %p72, %p73
      %p75 = scmp.ne.s32.totalorder %s64, %s65
      %p76 = scmp.eq.s32.totalorder %s16, 0
      %p77 = por %p75, %p76
      %p78 = scmp.ne.s32.totalorder %s64, %s65
      %p79 = scmp.eq.s32.totalorder %s17, 3
      %p80 = por %p78, %p79
      %p82 = scmp.ne.s32.totalorder %s65, %s81
      %p83 = scmp.eq.s32.totalorder %s17, 0
      %p84 = por %p82, %p83
      %s85 = ssub.s32 %s18, %s30
      %p86 = scmp.eq.s32.totalorder %s85, 0
      %s88 = sadd.s32 %s87, 1
      %s89 = scalar_select %p86, %s87, %s88
      %p92 = pneg %p86
      %p93 = scmp.eq.s32.totalorder %s11, 3
      %p94 = por %p92, %p93
      %p95 = scmp.ne.s32.totalorder %s87, %s90
      %p96 = scmp.eq.s32.totalorder %s11, 0
      %p97 = por %p95, %p96
      %p98 = scmp.ne.s32.totalorder %s87, %s90
      %p99 = scmp.eq.s32.totalorder %s16, 3
      %p100 = por %p98, %p99
      %p101 = scmp.ne.s32.totalorder %s90, %s91
      %p102 = scmp.eq.s32.totalorder %s16, 0
      %p103 = por %p101, %p102
      %p104 = scmp.ne.s32.totalorder %s90, %s91
      %p105 = scmp.eq.s32.totalorder %s17, 3
      %p106 = por %p104, %p105
      %p108 = scmp.ne.s32.totalorder %s91, %s107
      %p109 = scmp.eq.s32.totalorder %s17, 0
      %p110 = por %p108, %p109
      %p111 = scmp.le.s32.totalorder 1, %s11
      %p112 = scmp.lt.s32.totalorder %s11, 5
      %p113 = pnand %p111, %p112
      %p114 = pneg %p113
      // Predicated region
      $region9: #{archetypal_head_forward.3} parent=5 // pred_check
        _
      $region10: #{archetypal_head_forward.3} parent=5 // pred_check_branch
        %116 = sbr.rel (%p113) target = $region12
      $region11: #{archetypal_head_forward.3} parent=5 // pred_region
        %s117 = ssub.s32 %s11, 1
      $region12: #{archetypal_head_forward.3} parent=5 // pred_fallthru
        _
      %p118 = scmp.lt.s32.totalorder %s11, 4
      // Predicated region
      $region13: #{archetypal_head_forward.3} parent=5 // pred_check
        %p119 = pneg %p118
      $region14: #{archetypal_head_forward.3} parent=5 // pred_check_branch
        %121 = sbr.rel (%p119) target = $region16
      $region15: #{archetypal_head_forward.3} parent=5 // pred_region
        // Predicated region
        $region17: #{archetypal_head_forward.3} parent=15 // pred_check
          %p122 = pneg %p43
        $region18: #{archetypal_head_forward.3} parent=15 // pred_check_branch
          %124 = sbr.rel (%p122) target = $region20
        $region19: #{archetypal_head_forward.3} parent=15 // pred_region
          %s125 = sand.u32 %s33, 1
          %s126 = sand.u32 %s33, 1
          %s127 = smul.addr %s126, 8
          %s128 = scalar_lea.vmem [#allocation3], %s127
          %s129 = smul.addr %s19, 4
          %s130 = scalar_lea.vmem %s0, %s129
          // Predicated region
          $region21: #{archetypal_head_forward.3} parent=19 // pred_check
            _
          $region22: #{archetypal_head_forward.3} parent=19 // pred_check_branch
            %132 = sbr.rel (0) target = $region24
          $region23: #{archetypal_head_forward.3} parent=19 // pred_region
            // Predicated region
            $region25: #{archetypal_head_forward.3} parent=23 // pred_check
              _
            $region26: #{archetypal_head_forward.3} parent=23 // pred_check_branch
              %134 = sbr.rel target = $region28
            $region27: #{archetypal_head_forward.3} parent=23 // pred_region
              // Predicated region
              $region40: #{archetypal_head_forward.3} parent=27 // pred_check
                _
              $region41: #{archetypal_head_forward.3} parent=27 // pred_check_branch
                %151 = sbr.rel (0) target = $region43
              $region42: #{archetypal_head_forward.3} parent=27 // pred_region
                loop: start=0, step=1, limit=1
                $region44: #{archetypal_head_forward.3} parent=42 // loop_pre_header
                  _
                $region45: #{archetypal_head_forward.3} parent=42 // loop_header
                  %s153 = sphi 0, %s157
                  %p154 = scmp.ge.s32.totalorder %s153, 1
                  %s158 = sphi %s130, %s130
                  %s159 = sphi %s128, %s128
                $region46: #{archetypal_head_forward.3} parent=42 // loop_header_branch
                  %156 = sbr.rel (%p154) target = $region50
                $region47: #{archetypal_head_forward.3} parent=42 // loop_body
                  _
                $region48: #{archetypal_head_forward.3} parent=42 // loop_footer
                  %s157 = sadd.s32 1, %s153
                $region49: #{archetypal_head_forward.3} parent=42 // loop_footer_branch
                  %152 = sbr.rel target = $region45
                $region50: #{archetypal_head_forward.3} parent=42 // loop_exit
                  _
                loop: start=0, step=1, limit=1
                $region51: #{archetypal_head_forward.3} parent=42 // loop_pre_header
                  _
                $region52: #{archetypal_head_forward.3} parent=42 // loop_header
                  %s162 = sphi 0, %s166
                  %p163 = scmp.ge.s32.totalorder %s162, 1
                  %s167 = sphi %s130, %s130
                  %s168 = sphi %s128, %s128
                $region53: #{archetypal_head_forward.3} parent=42 // loop_header_branch
                  %165 = sbr.rel (%p163) target = $region57
                $region54: #{archetypal_head_forward.3} parent=42 // loop_body
                  %v169 = vld [vmem:[%s167] sm:$0xf]
                  %170 = vst [vmem:[%s168] sm:$0xf] %v169
                  %v171 = vld [vmem:[%s167 + $0x8] sm:$0xf]
                  %172 = vst [vmem:[%s168 + $0x4] sm:$0xf] %v171
                $region55: #{archetypal_head_forward.3} parent=42 // loop_footer
                  %s166 = sadd.s32 1, %s162
                $region56: #{archetypal_head_forward.3} parent=42 // loop_footer_branch
                  %161 = sbr.rel target = $region52
                $region57: #{archetypal_head_forward.3} parent=42 // loop_exit
                  _
              $region43: #{archetypal_head_forward.3} parent=27 // pred_fallthru
                _
            $region28: #{archetypal_head_forward.3} parent=23 // pred_fallthru
              _
            // Predicated region
            $region29: #{archetypal_head_forward.3} parent=23 // pred_check
              _
            $region30: #{archetypal_head_forward.3} parent=23 // pred_check_branch
              %136 = sbr.rel (0) target = $region32
            $region31: #{archetypal_head_forward.3} parent=23 // pred_region
              loop: start=0, step=1, limit=1
              $region33: #{archetypal_head_forward.3} parent=31 // loop_pre_header
                _
              $region34: #{archetypal_head_forward.3} parent=31 // loop_header
                %s139 = sphi 0, %s143
                %p140 = scmp.ge.s32.totalorder %s139, 1
                %s144 = sphi %s130, %s130
                %s145 = sphi %s128, %s128
              $region35: #{archetypal_head_forward.3} parent=31 // loop_header_branch
                %142 = sbr.rel (%p140) target = $region39
              $region36: #{archetypal_head_forward.3} parent=31 // loop_body
                %v146 = vld [vmem:[%s144] sm:$0xf]
                %147 = vst [vmem:[%s145] sm:$0xf] %v146
                %v148 = vld [vmem:[%s144 + $0x8] sm:$0xf]
                %149 = vst [vmem:[%s145 + $0x4] sm:$0xf] %v148
              $region37: #{archetypal_head_forward.3} parent=31 // loop_footer
                %s143 = sadd.s32 1, %s139
              $region38: #{archetypal_head_forward.3} parent=31 // loop_footer_branch
                %138 = sbr.rel target = $region34
              $region39: #{archetypal_head_forward.3} parent=31 // loop_exit
                _
            $region32: #{archetypal_head_forward.3} parent=23 // pred_fallthru
              _
          $region24: #{archetypal_head_forward.3} parent=19 // pred_fallthru
            _
          %173 = vnop
        $region20: #{archetypal_head_forward.3} parent=15 // pred_fallthru
          _
        // Predicated region
        $region58: #{archetypal_head_forward.3} parent=15 // pred_check
          %p174 = pneg %p71
        $region59: #{archetypal_head_forward.3} parent=15 // pred_check_branch
          %176 = sbr.rel (%p174) target = $region61
        $region60: #{archetypal_head_forward.3} parent=15 // pred_region
          %s177 = sand.u32 %s61, 1
          %s178 = scalar_lea.sflag [#allocation5], %s177
          %s179 = sand.u32 %s61, 1
          %s180 = smul.addr %s179, 128
          %s181 = scalar_lea.vmem [#allocation4], %s180
          %s182 = smul.u32 16, %s19
          %s183 = smul.u32 2, %s18
          %s185 = ssub.s32 2048, 2048
          %186 = vsyncadd %s178, %s185
          %s187 = smul.addr %s182, 4
          %s188 = sadd.s32 %s183, %s187
          %s189 = smul.addr %s188, 64
          %s190 = scalar_lea.hbm %s1, %s189
          %s191 = sshll.u32 %s181, 4
          %s192 = int_to_ptr.vmem [resolvable:$true] %s191
          %197 = dma.hbm_to_vmem [thread:$0]  %s190, 2048, %s192, %s178, 256, 128, 8
        $region61: #{archetypal_head_forward.3} parent=15 // pred_fallthru
          _
      $region16: #{archetypal_head_forward.3} parent=5 // pred_fallthru
        _
      %p198 = scmp.le.s32.totalorder 1, %s11
      %p199 = scmp.lt.s32.totalorder %s11, 5
      %p200 = pnand %p198, %p199
      %p201 = pneg %p200
      // Predicated region
      $region62: #{archetypal_head_forward.3} parent=5 // pred_check
        _
      $region63: #{archetypal_head_forward.3} parent=5 // pred_check_branch
        %203 = sbr.rel (%p200) target = $region65
      $region64: #{archetypal_head_forward.3} parent=5 // pred_region
        %s204 = ssub.s32 %s11, 1
        %s205 = sand.u32 %s36, 1
        %s206 = sand.u32 %s36, 1
        %s207 = smul.addr %s206, 8
        %s208 = scalar_lea.vmem [#allocation3], %s207
        // Predicated region
        $region66: #{archetypal_head_forward.3} parent=64 // pred_check
          %p209 = pneg %p49
        $region67: #{archetypal_head_forward.3} parent=64 // pred_check_branch
          %211 = sbr.rel (%p209) target = $region69
        $region68: #{archetypal_head_forward.3} parent=64 // pred_region
          _
        $region69: #{archetypal_head_forward.3} parent=64 // pred_fallthru
          _
        %s212 = sand.u32 %s64, 1
        %s213 = scalar_lea.sflag [#allocation5], %s212
        %s214 = sand.u32 %s64, 1
        %s215 = smul.addr %s214, 128
        %s216 = scalar_lea.vmem [#allocation4], %s215
        // Predicated region
        $region70: #{archetypal_head_forward.3} parent=64 // pred_check
          %p217 = pneg %p77
        $region71: #{archetypal_head_forward.3} parent=64 // pred_check_branch
          %219 = sbr.rel (%p217) target = $region73
        $region72: #{archetypal_head_forward.3} parent=64 // pred_region
          %220 = dma.done %s213, 2048
        $region73: #{archetypal_head_forward.3} parent=64 // pred_fallthru
          _
        %s221 = sand.u32 %s36, 1
        %s222 = sand.u32 %s36, 1
        %s223 = smul.addr %s222, 8
        %s224 = scalar_lea.vmem [#allocation3], %s223
        %p225 = pneg %p49
        %p226 = pneg %p46
        %s227 = sand.u32 %s64, 1
        %s228 = scalar_lea.sflag [#allocation5], %s227
        %s229 = sand.u32 %s64, 1
        %s230 = smul.addr %s229, 128
        %s231 = scalar_lea.vmem [#allocation4], %s230
        %p232 = pneg %p77
        %p233 = pneg %p74
        %p234 = pneg %p103
        %p235 = pneg %p100
        %s236 = sand.u32 %s90, 1
        %s237 = sand.u32 %s90, 1
        %s238 = smul.addr %s237, 32
        %s239 = scalar_lea.vmem [#allocation6], %s238
        %s240 = smul.u32 16, %s21
        %s241 = smul.u32 2, %s20
        %s242 = smul.u32 2, %s20
        %p244 = scmp.eq.s32.totalorder %s21, 0
        // Predicated region
        $region74: #{archetypal_head_forward.3} parent=64 // pred_check
          %p245 = pneg %p244
        $region75: #{archetypal_head_forward.3} parent=64 // pred_check_branch
          %247 = sbr.rel (%p245) target = $region77
        $region76: #{archetypal_head_forward.3} parent=64 // pred_region
          %248 = vst [vmem:[#allocation2] sm:$0xff] 0.0
          %249 = vst [vmem:[#allocation2 + $0x8] sm:$0xff] 0.0
          %250 = vst [vmem:[#allocation2 + $0x10] sm:$0xff] 0.0
          %251 = vst [vmem:[#allocation2 + $0x18] sm:$0xff] 0.0
        $region77: #{archetypal_head_forward.3} parent=64 // pred_fallthru
          _
        %v252 = vld [vmem:[#allocation2] sm:$0xff]
        %v253 = vld [vmem:[#allocation2 + $0x8] sm:$0xff]
        %v254 = vld [vmem:[#allocation2 + $0x10] sm:$0xff]
        %v255 = vld [vmem:[#allocation2 + $0x18] sm:$0xff]
        %v256 = vld [vmem:[%s208] sm:$0xf]
        %v257 = vld [vmem:[%s208 + $0x4] sm:$0xf]
        %v258 = vld [vmem:[%s216] sm:$0xff]
        %v259 = vld [vmem:[%s216 + $0x8] sm:$0xff]
        %v260 = vld [vmem:[%s216 + $0x10] sm:$0xff]
        %v261 = vld [vmem:[%s216 + $0x18] sm:$0xff]
        %v262 = vld [vmem:[%s216 + $0x20] sm:$0xff]
        %v263 = vld [vmem:[%s216 + $0x28] sm:$0xff]
        %v264 = vld [vmem:[%s216 + $0x30] sm:$0xff]
        %v265 = vld [vmem:[%s216 + $0x38] sm:$0xff]
        %v266 = vld [vmem:[%s216 + $0x40] sm:$0xff]
        %v267 = vld [vmem:[%s216 + $0x48] sm:$0xff]
        %v268 = vld [vmem:[%s216 + $0x50] sm:$0xff]
        %v269 = vld [vmem:[%s216 + $0x58] sm:$0xff]
        %v270 = vld [vmem:[%s216 + $0x60] sm:$0xff]
        %v271 = vld [vmem:[%s216 + $0x68] sm:$0xff]
        %v272 = vld [vmem:[%s216 + $0x70] sm:$0xff]
        %v273 = vld [vmem:[%s216 + $0x78] sm:$0xff]
        %v276 = vunpack.c.l.b16 %v256
        %v277 = vunpack.c.l.b16 %v257
        %v278 = vpack.c.b16 %v277, %v276
        %v296 = vunpack.c.l.b16 %v258
        %v297 = vunpack.c.h.b16 %v258
        %v298 = vunpack.c.l.b16 %v259
        %v299 = vunpack.c.h.b16 %v259
        %v300 = vunpack.c.l.b16 %v260
        %v301 = vunpack.c.h.b16 %v260
        %v302 = vunpack.c.l.b16 %v261
        %v303 = vunpack.c.h.b16 %v261
        %v304 = vunpack.c.l.b16 %v262
        %v305 = vunpack.c.h.b16 %v262
        %v306 = vunpack.c.l.b16 %v263
        %v307 = vunpack.c.h.b16 %v263
        %v308 = vunpack.c.l.b16 %v264
        %v309 = vunpack.c.h.b16 %v264
        %v310 = vunpack.c.l.b16 %v265
        %v311 = vunpack.c.h.b16 %v265
        %v312 = vunpack.c.l.b16 %v266
        %v313 = vunpack.c.h.b16 %v266
        %v314 = vunpack.c.l.b16 %v267
        %v315 = vunpack.c.h.b16 %v267
        %v316 = vunpack.c.l.b16 %v268
        %v317 = vunpack.c.h.b16 %v268
        %v318 = vunpack.c.l.b16 %v269
        %v319 = vunpack.c.h.b16 %v269
        %v320 = vunpack.c.l.b16 %v270
        %v321 = vunpack.c.h.b16 %v270
        %v322 = vunpack.c.l.b16 %v271
        %v323 = vunpack.c.h.b16 %v271
        %v324 = vunpack.c.l.b16 %v272
        %v325 = vunpack.c.h.b16 %v272
        %v326 = vunpack.c.l.b16 %v273
        %v327 = vunpack.c.h.b16 %v273
        %v328 = vpack.c.b16 %v298, %v296
        %v329 = vpack.c.b16 %v299, %v297
        %v330 = vpack.c.b16 %v302, %v300
        %v331 = vpack.c.b16 %v303, %v301
        %v332 = vpack.c.b16 %v306, %v304
        %v333 = vpack.c.b16 %v307, %v305
        %v334 = vpack.c.b16 %v310, %v308
        %v335 = vpack.c.b16 %v311, %v309
        %v336 = vpack.c.b16 %v314, %v312
        %v337 = vpack.c.b16 %v315, %v313
        %v338 = vpack.c.b16 %v318, %v316
        %v339 = vpack.c.b16 %v319, %v317
        %v340 = vpack.c.b16 %v322, %v320
        %v341 = vpack.c.b16 %v323, %v321
        %v342 = vpack.c.b16 %v326, %v324
        %v343 = vpack.c.b16 %v327, %v325
        %360 = vmatprep.subr.bf16.mxu0 %v329
        %361 = vmatpush1.bf16.msra.mxu0 %v328
        %362 = vmatprep.subr.bf16.mxu0 %v331
        %363 = vmatpush1.bf16.msra.mxu0 %v330
        %364 = vmatprep.subr.bf16.mxu0 %v333
        %365 = vmatpush1.bf16.msra.mxu0 %v332
        %366 = vmatprep.subr.bf16.mxu0 %v335
        %367 = vmatpush1.bf16.msra.mxu0 %v334
        %368 = vmatprep.subr.bf16.mxu0 %v337
        %369 = vmatpush1.bf16.msra.mxu0 %v336
        %370 = vmatprep.subr.bf16.mxu0 %v339
        %371 = vmatpush1.bf16.msra.mxu0 %v338
        %372 = vmatprep.subr.bf16.mxu0 %v341
        %373 = vmatpush1.bf16.msra.mxu0 %v340
        %374 = vmatprep.subr.bf16.mxu0 %v343
        %375 = vmatpush1.bf16.msra.mxu0 %v342
        %376 = vmatprep.subr.bf16.mxu0 0
        %377 = vmatpush1.bf16.msra.mxu0 0
        %378 = vmatprep.subr.bf16.mxu0 0
        %379 = vmatpush1.bf16.msra.mxu0 0
        %380 = vmatprep.subr.bf16.mxu0 0
        %381 = vmatpush1.bf16.msra.mxu0 0
        %382 = vmatprep.subr.bf16.mxu0 0
        %383 = vmatpush1.bf16.msra.mxu0 0
        %384 = vmatprep.subr.bf16.mxu0 0
        %385 = vmatpush1.bf16.msra.mxu0 0
        %386 = vmatprep.subr.bf16.mxu0 0
        %387 = vmatpush1.bf16.msra.mxu0 0
        %388 = vmatprep.subr.bf16.mxu0 0
        %389 = vmatpush1.bf16.msra.mxu0 0
        %390 = vmatprep.subr.bf16.mxu0 0
        %391 = vmatpush1.bf16.msra.mxu0 0
        %392 = vmatprep.mubr.bf16.mxu0 0
        %393 = vmatmul.mubr.bf16.gmra.mrb[0].mxu0 %v278
        %v394 = vpop.f32.mrb[0].mxu0
        %v395 = vadd.f32 0.0, %v394
        %v396 = vpop.f32.mrb[0].mxu0
        %v397 = vadd.f32 0.0, %v396
        %v398 = vpop.f32.mrb[0].mxu0
        %v399 = vadd.f32 0.0, %v398
        %v400 = vpop.f32.mrb[0].mxu0
        %v401 = vadd.f32 0.0, %v400
        %402 = vdwg.mxu0
        %v403 = vadd.f32 %v252, %v395
        %v404 = vadd.f32 %v253, %v397
        %v405 = vadd.f32 %v254, %v399
        %v406 = vadd.f32 %v255, %v401
        %407 = vst [vmem:[#allocation2] sm:$0xff] %v403
        %408 = vst [vmem:[#allocation2 + $0x8] sm:$0xff] %v404
        %409 = vst [vmem:[#allocation2 + $0x10] sm:$0xff] %v405
        %410 = vst [vmem:[#allocation2 + $0x18] sm:$0xff] %v406
        %p411 = scmp.eq.s32.totalorder %s21, 1
        // Predicated region
        $region78: #{archetypal_head_forward.3} parent=64 // pred_check
          %p412 = pneg %p411
        $region79: #{archetypal_head_forward.3} parent=64 // pred_check_branch
          %414 = sbr.rel (%p412) target = $region81
        $region80: #{archetypal_head_forward.3} parent=64 // pred_region
          %v415 = vld [vmem:[#allocation2] sm:$0xff]
          %v416 = vld [vmem:[#allocation2 + $0x8] sm:$0xff]
          %v417 = vld [vmem:[#allocation2 + $0x10] sm:$0xff]
          %v418 = vld [vmem:[#allocation2 + $0x18] sm:$0xff]
          %419 = vst [vmem:[%s239] sm:$0xff] %v415
          %420 = vst [vmem:[%s239 + $0x8] sm:$0xff] %v416
          %421 = vst [vmem:[%s239 + $0x10] sm:$0xff] %v417
          %422 = vst [vmem:[%s239 + $0x18] sm:$0xff] %v418
        $region81: #{archetypal_head_forward.3} parent=64 // pred_fallthru
          _
        %s423 = sand.u32 %s90, 1
        %s424 = sand.u32 %s90, 1
        %s425 = smul.addr %s424, 32
        %s426 = scalar_lea.vmem [#allocation6], %s425
        // Predicated region
        $region82: #{archetypal_head_forward.3} parent=64 // pred_check
          %p427 = pneg %p100
        $region83: #{archetypal_head_forward.3} parent=64 // pred_check_branch
          %429 = sbr.rel (%p427) target = $region85
        $region84: #{archetypal_head_forward.3} parent=64 // pred_region
          %s430 = smul.u32 2, %s20
          %s431 = smul.addr %s430, 8
          %s432 = scalar_lea.vmem %s2, %s431
          // Predicated region
          $region86: #{archetypal_head_forward.3} parent=84 // pred_check
            _
          $region87: #{archetypal_head_forward.3} parent=84 // pred_check_branch
            %434 = sbr.rel (0) target = $region89
          $region88: #{archetypal_head_forward.3} parent=84 // pred_region
            // Predicated region
            $region90: #{archetypal_head_forward.3} parent=88 // pred_check
              _
            $region91: #{archetypal_head_forward.3} parent=88 // pred_check_branch
              %436 = sbr.rel (0) target = $region93
            $region92: #{archetypal_head_forward.3} parent=88 // pred_region
              loop: start=0, step=1, limit=1
              $region94: #{archetypal_head_forward.3} parent=92 // loop_pre_header
                _
              $region95: #{archetypal_head_forward.3} parent=92 // loop_header
                %s438 = sphi 0, %s442
                %p439 = scmp.ge.s32.totalorder %s438, 1
                %s443 = sphi %s426, %s426
                %s444 = sphi %s432, %s432
              $region96: #{archetypal_head_forward.3} parent=92 // loop_header_branch
                %441 = sbr.rel (%p439) target = $region100
              $region97: #{archetypal_head_forward.3} parent=92 // loop_body
                %v445 = vld [vmem:[%s443] sm:$0xff]
                %446 = vst [vmem:[%s444] sm:$0xff] %v445
                %v447 = vld [vmem:[%s443 + $0x8] sm:$0xff]
                %448 = vst [vmem:[%s444 + $0x8] sm:$0xff] %v447
                %v449 = vld [vmem:[%s443 + $0x10] sm:$0xff]
                %450 = vst [vmem:[%s444 + $0x20] sm:$0xff] %v449
                %v451 = vld [vmem:[%s443 + $0x18] sm:$0xff]
                %452 = vst [vmem:[%s444 + $0x28] sm:$0xff] %v451
              $region98: #{archetypal_head_forward.3} parent=92 // loop_footer
                %s442 = sadd.s32 1, %s438
              $region99: #{archetypal_head_forward.3} parent=92 // loop_footer_branch
                %437 = sbr.rel target = $region95
              $region100: #{archetypal_head_forward.3} parent=92 // loop_exit
                _
            $region93: #{archetypal_head_forward.3} parent=88 // pred_fallthru
              _
            // Predicated region
            $region101: #{archetypal_head_forward.3} parent=88 // pred_check
              _
            $region102: #{archetypal_head_forward.3} parent=88 // pred_check_branch
              %454 = sbr.rel target = $region104
            $region103: #{archetypal_head_forward.3} parent=88 // pred_region
              _
            $region104: #{archetypal_head_forward.3} parent=88 // pred_fallthru
              _
          $region89: #{archetypal_head_forward.3} parent=84 // pred_fallthru
            _
          %455 = vnop
        $region85: #{archetypal_head_forward.3} parent=64 // pred_fallthru
          _
      $region65: #{archetypal_head_forward.3} parent=5 // pred_fallthru
        _
      %p456 = scmp.le.s32.totalorder 2, %s11
      // Predicated region
      $region105: #{archetypal_head_forward.3} parent=5 // pred_check
        %p457 = pneg %p456
      $region106: #{archetypal_head_forward.3} parent=5 // pred_check_branch
        %459 = sbr.rel (%p457) target = $region108
      $region107: #{archetypal_head_forward.3} parent=5 // pred_region
        %s460 = ssub.s32 %s11, 2
        // Predicated region
        $region109: #{archetypal_head_forward.3} parent=107 // pred_check
          %p461 = pneg %p106
        $region110: #{archetypal_head_forward.3} parent=107 // pred_check_branch
          %463 = sbr.rel (%p461) target = $region112
        $region111: #{archetypal_head_forward.3} parent=107 // pred_region
          %s464 = sand.u32 %s91, 1
          %s465 = sand.u32 %s91, 1
          %s466 = smul.addr %s465, 32
          %s467 = scalar_lea.vmem [#allocation6], %s466
        $region112: #{archetypal_head_forward.3} parent=107 // pred_fallthru
          _
      $region108: #{archetypal_head_forward.3} parent=5 // pred_fallthru
        _
    $region6: #{archetypal_head_forward.3} parent=1 // loop_footer
      %s15 = sadd.s32 1, %s11
    $region7: #{archetypal_head_forward.3} parent=1 // loop_footer_branch
      %10 = sbr.rel target = $region3
    $region8: #{archetypal_head_forward.3} parent=1 // loop_exit
      _
    %468 = vsyncpa [#allocation5], 1
    %s469 = scalar_lea.sflag [#allocation5], 1
    %470 = vsyncpa %s469, 1

// kernel: archetypal_head_forward.5
$region0: #{archetypal_head_forward.5}
  #allocation0 [shape = 'u32[]', space=smem, size = 0x4, offset = 0x4, fixed_abs, tag = 'smem constant byte address 0x4 - core index']
  #allocation1 [shape = 'u32[144,128]{1,0:T(1,128)}', space=vmem, size = 0x12000, scoped, tag = 'internal scratch']
  %s0 = inlined_call_operand.vmem [shape: bf16[16,512], index: 0, kind: input, shape index: {}]
  %s1 = inlined_call_operand.vmem [shape: bf16[512,256], index: 1, kind: input, shape index: {}]
  %s2 = inlined_call_operand.vmem [shape: f32[1,256], index: 2, kind: input, shape index: {}]
  %s3 = inlined_call_operand.vmem [shape: bf16[16,256], index: 3, kind: output, shape index: {}]
  %s4 = sld [smem:[#allocation0]]
  $region123: #{archetypal_head_forward.5} parent=0
    _
  %s6 = ssub.s32 1, %s4
  %s7 = scalar_select 0, %s6, %s4
  $region1: #{archetypal_head_forward.5} parent=0
    #allocation2 [shape = 'u8[262144]{0}', space=vmem, size = 0x40000, scoped, tag = 'input window, operand 1']
    #allocation3 [shape = 'u8[8192]{0}', space=vmem, size = 0x2000, scoped, tag = 'output window, operand 0']
    loop: start=0, step=1, limit=4
    $region2: #{archetypal_head_forward.5} parent=1 // loop_pre_header
      _
    $region3: #{archetypal_head_forward.5} parent=1 // loop_header
      %s9 = sphi 0, %s13
      %p10 = scmp.ge.s32.totalorder %s9, 4
      %s17 = sphi 0, %s17
      %s19 = sphi 0, %s17
      %s20 = sphi 0, %s19
      %s34 = sphi 0, %s20
      %s40 = sphi 0, %s42
      %s43 = sphi 0, %s40
      %s44 = sphi 0, %s43
      %s60 = sphi 0, %s44
      %s66 = sphi 0, %s68
      %s69 = sphi 0, %s66
      %s70 = sphi 0, %s69
      %s86 = sphi 0, %s70
      %s92 = sphi 0, %s94
      %s95 = sphi 0, %s92
      %s96 = sphi 0, %s95
      %s112 = sphi 0, %s96
    $region4: #{archetypal_head_forward.5} parent=1 // loop_header_branch
      %12 = sbr.rel (%p10) target = $region8
    $region5: #{archetypal_head_forward.5} parent=1 // loop_body
      %s14 = ssub.s32 %s9, 1
      %s15 = ssub.s32 %s9, 2
      %s16 = sadd.s32 %s9, 1
      %s18 = sadd.s32 %s17, 1
      %p21 = scmp.eq.s32.totalorder %s9, 1
      %p22 = scmp.ne.s32.totalorder %s17, %s19
      %p23 = scmp.eq.s32.totalorder %s9, 0
      %p24 = por %p22, %p23
      %p25 = scmp.ne.s32.totalorder %s17, %s19
      %p26 = scmp.eq.s32.totalorder %s14, 1
      %p27 = por %p25, %p26
      %p28 = scmp.ne.s32.totalorder %s19, %s20
      %p29 = scmp.eq.s32.totalorder %s14, 0
      %p30 = por %p28, %p29
      %p31 = scmp.ne.s32.totalorder %s19, %s20
      %p32 = scmp.eq.s32.totalorder %s15, 1
      %p33 = por %p31, %p32
      %p35 = scmp.ne.s32.totalorder %s20, %s34
      %p36 = scmp.eq.s32.totalorder %s15, 0
      %p37 = por %p35, %p36
      %s38 = ssub.s32 %s9, %s16
      %p39 = scmp.eq.s32.totalorder %s38, 0
      %s41 = sadd.s32 %s40, 1
      %s42 = scalar_select %p39, %s40, %s41
      %p45 = pneg %p39
      %p46 = scmp.eq.s32.totalorder %s9, 1
      %p47 = por %p45, %p46
      %p48 = scmp.ne.s32.totalorder %s40, %s43
      %p49 = scmp.eq.s32.totalorder %s9, 0
      %p50 = por %p48, %p49
      %p51 = scmp.ne.s32.totalorder %s40, %s43
      %p52 = scmp.eq.s32.totalorder %s14, 1
      %p53 = por %p51, %p52
      %p54 = scmp.ne.s32.totalorder %s43, %s44
      %p55 = scmp.eq.s32.totalorder %s14, 0
      %p56 = por %p54, %p55
      %p57 = scmp.ne.s32.totalorder %s43, %s44
      %p58 = scmp.eq.s32.totalorder %s15, 1
      %p59 = por %p57, %p58
      %p61 = scmp.ne.s32.totalorder %s44, %s60
      %p62 = scmp.eq.s32.totalorder %s15, 0
      %p63 = por %p61, %p62
      %s64 = ssub.s32 %s9, %s16
      %p65 = scmp.eq.s32.totalorder %s64, 0
      %s67 = sadd.s32 %s66, 1
      %s68 = scalar_select %p65, %s66, %s67
      %p71 = pneg %p65
      %p72 = scmp.eq.s32.totalorder %s9, 1
      %p73 = por %p71, %p72
      %p74 = scmp.ne.s32.totalorder %s66, %s69
      %p75 = scmp.eq.s32.totalorder %s9, 0
      %p76 = por %p74, %p75
      %p77 = scmp.ne.s32.totalorder %s66, %s69
      %p78 = scmp.eq.s32.totalorder %s14, 1
      %p79 = por %p77, %p78
      %p80 = scmp.ne.s32.totalorder %s69, %s70
      %p81 = scmp.eq.s32.totalorder %s14, 0
      %p82 = por %p80, %p81
      %p83 = scmp.ne.s32.totalorder %s69, %s70
      %p84 = scmp.eq.s32.totalorder %s15, 1
      %p85 = por %p83, %p84
      %p87 = scmp.ne.s32.totalorder %s70, %s86
      %p88 = scmp.eq.s32.totalorder %s15, 0
      %p89 = por %p87, %p88
      %s90 = ssub.s32 %s9, %s16
      %p91 = scmp.eq.s32.totalorder %s90, 0
      %s93 = sadd.s32 %s92, 1
      %s94 = scalar_select %p91, %s92, %s93
      %p97 = pneg %p91
      %p98 = scmp.eq.s32.totalorder %s9, 1
      %p99 = por %p97, %p98
      %p100 = scmp.ne.s32.totalorder %s92, %s95
      %p101 = scmp.eq.s32.totalorder %s9, 0
      %p102 = por %p100, %p101
      %p103 = scmp.ne.s32.totalorder %s92, %s95
      %p104 = scmp.eq.s32.totalorder %s14, 1
      %p105 = por %p103, %p104
      %p106 = scmp.ne.s32.totalorder %s95, %s96
      %p107 = scmp.eq.s32.totalorder %s14, 0
      %p108 = por %p106, %p107
      %p109 = scmp.ne.s32.totalorder %s95, %s96
      %p110 = scmp.eq.s32.totalorder %s15, 1
      %p111 = por %p109, %p110
      %p113 = scmp.ne.s32.totalorder %s96, %s112
      %p114 = scmp.eq.s32.totalorder %s15, 0
      %p115 = por %p113, %p114
      %p116 = scmp.le.s32.totalorder 1, %s9
      %p117 = scmp.lt.s32.totalorder %s9, 3
      %p118 = pnand %p116, %p117
      %p119 = pneg %p118
      // Predicated region
      $region9: #{archetypal_head_forward.5} parent=5 // pred_check
        _
      $region10: #{archetypal_head_forward.5} parent=5 // pred_check_branch
        %121 = sbr.rel (%p118) target = $region12
      $region11: #{archetypal_head_forward.5} parent=5 // pred_region
        %s122 = ssub.s32 %s9, 1
        // Predicated region
        $region13: #{archetypal_head_forward.5} parent=11 // pred_check
          %p123 = pneg %p30
        $region14: #{archetypal_head_forward.5} parent=11 // pred_check_branch
          %125 = sbr.rel (%p123) target = $region16
        $region15: #{archetypal_head_forward.5} parent=11 // pred_region
          _
        $region16: #{archetypal_head_forward.5} parent=11 // pred_fallthru
          _
      $region12: #{archetypal_head_forward.5} parent=5 // pred_fallthru
        _
      %p126 = scmp.lt.s32.totalorder %s9, 2
      // Predicated region
      $region17: #{archetypal_head_forward.5} parent=5 // pred_check
        %p127 = pneg %p126
      $region18: #{archetypal_head_forward.5} parent=5 // pred_check_branch
        %129 = sbr.rel (%p127) target = $region20
      $region19: #{archetypal_head_forward.5} parent=5 // pred_region
        // Predicated region
        $region21: #{archetypal_head_forward.5} parent=19 // pred_check
          %p130 = pneg %p50
        $region22: #{archetypal_head_forward.5} parent=19 // pred_check_branch
          %132 = sbr.rel (%p130) target = $region24
        $region23: #{archetypal_head_forward.5} parent=19 // pred_region
          %s133 = sand.u32 %s40, 1
          %s134 = sand.u32 %s40, 1
          %s135 = smul.addr %s134, 256
          %s136 = scalar_lea.vmem [#allocation2], %s135
          %s137 = smul.addr %s9, 4
          %s138 = scalar_lea.vmem %s1, %s137
          // Predicated region
          $region25: #{archetypal_head_forward.5} parent=23 // pred_check
            _
          $region26: #{archetypal_head_forward.5} parent=23 // pred_check_branch
            %140 = sbr.rel (0) target = $region28
          $region27: #{archetypal_head_forward.5} parent=23 // pred_region
            // Predicated region
            $region29: #{archetypal_head_forward.5} parent=27 // pred_check
              _
            $region30: #{archetypal_head_forward.5} parent=27 // pred_check_branch
              %142 = sbr.rel target = $region32
            $region31: #{archetypal_head_forward.5} parent=27 // pred_region
              // Predicated region
              $region44: #{archetypal_head_forward.5} parent=31 // pred_check
                _
              $region45: #{archetypal_head_forward.5} parent=31 // pred_check_branch
                %283 = sbr.rel (0) target = $region47
              $region46: #{archetypal_head_forward.5} parent=31 // pred_region
                loop: start=0, step=1, limit=1
                $region48: #{archetypal_head_forward.5} parent=46 // loop_pre_header
                  _
                $region49: #{archetypal_head_forward.5} parent=46 // loop_header
                  %s285 = sphi 0, %s289
                  %p286 = scmp.ge.s32.totalorder %s285, 1
                  %s290 = sphi %s138, %s138
                  %s291 = sphi %s136, %s136
                $region50: #{archetypal_head_forward.5} parent=46 // loop_header_branch
                  %288 = sbr.rel (%p286) target = $region54
                $region51: #{archetypal_head_forward.5} parent=46 // loop_body
                  _
                $region52: #{archetypal_head_forward.5} parent=46 // loop_footer
                  %s289 = sadd.s32 1, %s285
                $region53: #{archetypal_head_forward.5} parent=46 // loop_footer_branch
                  %284 = sbr.rel target = $region49
                $region54: #{archetypal_head_forward.5} parent=46 // loop_exit
                  _
                loop: start=0, step=1, limit=1
                $region55: #{archetypal_head_forward.5} parent=46 // loop_pre_header
                  _
                $region56: #{archetypal_head_forward.5} parent=46 // loop_header
                  %s294 = sphi 0, %s298
                  %p295 = scmp.ge.s32.totalorder %s294, 1
                  %s299 = sphi %s138, %s138
                  %s300 = sphi %s136, %s136
                $region57: #{archetypal_head_forward.5} parent=46 // loop_header_branch
                  %297 = sbr.rel (%p295) target = $region61
                $region58: #{archetypal_head_forward.5} parent=46 // loop_body
                  %v301 = vld [vmem:[%s299] sm:$0xf]
                  %302 = vst [vmem:[%s300] sm:$0xf] %v301
                  %v303 = vld [vmem:[%s299 + $0x8] sm:$0xf]
                  %304 = vst [vmem:[%s300 + $0x4] sm:$0xf] %v303
                  %v305 = vld [vmem:[%s299 + $0x10] sm:$0xf]
                  %306 = vst [vmem:[%s300 + $0x8] sm:$0xf] %v305
                  %v307 = vld [vmem:[%s299 + $0x18] sm:$0xf]
                  %308 = vst [vmem:[%s300 + $0xc] sm:$0xf] %v307
                  %v309 = vld [vmem:[%s299 + $0x20] sm:$0xf]
                  %310 = vst [vmem:[%s300 + $0x10] sm:$0xf] %v309
                  %v311 = vld [vmem:[%s299 + $0x28] sm:$0xf]
                  %312 = vst [vmem:[%s300 + $0x14] sm:$0xf] %v311
                  %v313 = vld [vmem:[%s299 + $0x30] sm:$0xf]
                  %314 = vst [vmem:[%s300 + $0x18] sm:$0xf] %v313
                  %v315 = vld [vmem:[%s299 + $0x38] sm:$0xf]
                  %316 = vst [vmem:[%s300 + $0x1c] sm:$0xf] %v315
                  %v317 = vld [vmem:[%s299 + $0x40] sm:$0xf]
                  %318 = vst [vmem:[%s300 + $0x20] sm:$0xf] %v317
                  %v319 = vld [vmem:[%s299 + $0x48] sm:$0xf]
                  %320 = vst [vmem:[%s300 + $0x24] sm:$0xf] %v319
                  %v321 = vld [vmem:[%s299 + $0x50] sm:$0xf]
                  %322 = vst [vmem:[%s300 + $0x28] sm:$0xf] %v321
                  %v323 = vld [vmem:[%s299 + $0x58] sm:$0xf]
                  %324 = vst [vmem:[%s300 + $0x2c] sm:$0xf] %v323
                  %v325 = vld [vmem:[%s299 + $0x60] sm:$0xf]
                  %326 = vst [vmem:[%s300 + $0x30] sm:$0xf] %v325
                  %v327 = vld [vmem:[%s299 + $0x68] sm:$0xf]
                  %328 = vst [vmem:[%s300 + $0x34] sm:$0xf] %v327
                  %v329 = vld [vmem:[%s299 + $0x70] sm:$0xf]
                  %330 = vst [vmem:[%s300 + $0x38] sm:$0xf] %v329
                  %v331 = vld [vmem:[%s299 + $0x78] sm:$0xf]
                  %332 = vst [vmem:[%s300 + $0x3c] sm:$0xf] %v331
                  %v333 = vld [vmem:[%s299 + $0x80] sm:$0xf]
                  %334 = vst [vmem:[%s300 + $0x40] sm:$0xf] %v333
                  %v335 = vld [vmem:[%s299 + $0x88] sm:$0xf]
                  %336 = vst [vmem:[%s300 + $0x44] sm:$0xf] %v335
                  %v337 = vld [vmem:[%s299 + $0x90] sm:$0xf]
                  %338 = vst [vmem:[%s300 + $0x48] sm:$0xf] %v337
                  %v339 = vld [vmem:[%s299 + $0x98] sm:$0xf]
                  %340 = vst [vmem:[%s300 + $0x4c] sm:$0xf] %v339
                  %v341 = vld [vmem:[%s299 + $0xa0] sm:$0xf]
                  %342 = vst [vmem:[%s300 + $0x50] sm:$0xf] %v341
                  %v343 = vld [vmem:[%s299 + $0xa8] sm:$0xf]
                  %344 = vst [vmem:[%s300 + $0x54] sm:$0xf] %v343
                  %v345 = vld [vmem:[%s299 + $0xb0] sm:$0xf]
                  %346 = vst [vmem:[%s300 + $0x58] sm:$0xf] %v345
                  %v347 = vld [vmem:[%s299 + $0xb8] sm:$0xf]
                  %348 = vst [vmem:[%s300 + $0x5c] sm:$0xf] %v347
                  %v349 = vld [vmem:[%s299 + $0xc0] sm:$0xf]
                  %350 = vst [vmem:[%s300 + $0x60] sm:$0xf] %v349
                  %v351 = vld [vmem:[%s299 + $0xc8] sm:$0xf]
                  %352 = vst [vmem:[%s300 + $0x64] sm:$0xf] %v351
                  %v353 = vld [vmem:[%s299 + $0xd0] sm:$0xf]
                  %354 = vst [vmem:[%s300 + $0x68] sm:$0xf] %v353
                  %v355 = vld [vmem:[%s299 + $0xd8] sm:$0xf]
                  %356 = vst [vmem:[%s300 + $0x6c] sm:$0xf] %v355
                  %v357 = vld [vmem:[%s299 + $0xe0] sm:$0xf]
                  %358 = vst [vmem:[%s300 + $0x70] sm:$0xf] %v357
                  %v359 = vld [vmem:[%s299 + $0xe8] sm:$0xf]
                  %360 = vst [vmem:[%s300 + $0x74] sm:$0xf] %v359
                  %v361 = vld [vmem:[%s299 + $0xf0] sm:$0xf]
                  %362 = vst [vmem:[%s300 + $0x78] sm:$0xf] %v361
                  %v363 = vld [vmem:[%s299 + $0xf8] sm:$0xf]
                  %364 = vst [vmem:[%s300 + $0x7c] sm:$0xf] %v363
                  %v365 = vld [vmem:[%s299 + $0x100] sm:$0xf]
                  %366 = vst [vmem:[%s300 + $0x80] sm:$0xf] %v365
                  %v367 = vld [vmem:[%s299 + $0x108] sm:$0xf]
                  %368 = vst [vmem:[%s300 + $0x84] sm:$0xf] %v367
                  %v369 = vld [vmem:[%s299 + $0x110] sm:$0xf]
                  %370 = vst [vmem:[%s300 + $0x88] sm:$0xf] %v369
                  %v371 = vld [vmem:[%s299 + $0x118] sm:$0xf]
                  %372 = vst [vmem:[%s300 + $0x8c] sm:$0xf] %v371
                  %v373 = vld [vmem:[%s299 + $0x120] sm:$0xf]
                  %374 = vst [vmem:[%s300 + $0x90] sm:$0xf] %v373
                  %v375 = vld [vmem:[%s299 + $0x128] sm:$0xf]
                  %376 = vst [vmem:[%s300 + $0x94] sm:$0xf] %v375
                  %v377 = vld [vmem:[%s299 + $0x130] sm:$0xf]
                  %378 = vst [vmem:[%s300 + $0x98] sm:$0xf] %v377
                  %v379 = vld [vmem:[%s299 + $0x138] sm:$0xf]
                  %380 = vst [vmem:[%s300 + $0x9c] sm:$0xf] %v379
                  %v381 = vld [vmem:[%s299 + $0x140] sm:$0xf]
                  %382 = vst [vmem:[%s300 + $0xa0] sm:$0xf] %v381
                  %v383 = vld [vmem:[%s299 + $0x148] sm:$0xf]
                  %384 = vst [vmem:[%s300 + $0xa4] sm:$0xf] %v383
                  %v385 = vld [vmem:[%s299 + $0x150] sm:$0xf]
                  %386 = vst [vmem:[%s300 + $0xa8] sm:$0xf] %v385
                  %v387 = vld [vmem:[%s299 + $0x158] sm:$0xf]
                  %388 = vst [vmem:[%s300 + $0xac] sm:$0xf] %v387
                  %v389 = vld [vmem:[%s299 + $0x160] sm:$0xf]
                  %390 = vst [vmem:[%s300 + $0xb0] sm:$0xf] %v389
                  %v391 = vld [vmem:[%s299 + $0x168] sm:$0xf]
                  %392 = vst [vmem:[%s300 + $0xb4] sm:$0xf] %v391
                  %v393 = vld [vmem:[%s299 + $0x170] sm:$0xf]
                  %394 = vst [vmem:[%s300 + $0xb8] sm:$0xf] %v393
                  %v395 = vld [vmem:[%s299 + $0x178] sm:$0xf]
                  %396 = vst [vmem:[%s300 + $0xbc] sm:$0xf] %v395
                  %v397 = vld [vmem:[%s299 + $0x180] sm:$0xf]
                  %398 = vst [vmem:[%s300 + $0xc0] sm:$0xf] %v397
                  %v399 = vld [vmem:[%s299 + $0x188] sm:$0xf]
                  %400 = vst [vmem:[%s300 + $0xc4] sm:$0xf] %v399
                  %v401 = vld [vmem:[%s299 + $0x190] sm:$0xf]
                  %402 = vst [vmem:[%s300 + $0xc8] sm:$0xf] %v401
                  %v403 = vld [vmem:[%s299 + $0x198] sm:$0xf]
                  %404 = vst [vmem:[%s300 + $0xcc] sm:$0xf] %v403
                  %v405 = vld [vmem:[%s299 + $0x1a0] sm:$0xf]
                  %406 = vst [vmem:[%s300 + $0xd0] sm:$0xf] %v405
                  %v407 = vld [vmem:[%s299 + $0x1a8] sm:$0xf]
                  %408 = vst [vmem:[%s300 + $0xd4] sm:$0xf] %v407
                  %v409 = vld [vmem:[%s299 + $0x1b0] sm:$0xf]
                  %410 = vst [vmem:[%s300 + $0xd8] sm:$0xf] %v409
                  %v411 = vld [vmem:[%s299 + $0x1b8] sm:$0xf]
                  %412 = vst [vmem:[%s300 + $0xdc] sm:$0xf] %v411
                  %v413 = vld [vmem:[%s299 + $0x1c0] sm:$0xf]
                  %414 = vst [vmem:[%s300 + $0xe0] sm:$0xf] %v413
                  %v415 = vld [vmem:[%s299 + $0x1c8] sm:$0xf]
                  %416 = vst [vmem:[%s300 + $0xe4] sm:$0xf] %v415
                  %v417 = vld [vmem:[%s299 + $0x1d0] sm:$0xf]
                  %418 = vst [vmem:[%s300 + $0xe8] sm:$0xf] %v417
                  %v419 = vld [vmem:[%s299 + $0x1d8] sm:$0xf]
                  %420 = vst [vmem:[%s300 + $0xec] sm:$0xf] %v419
                  %v421 = vld [vmem:[%s299 + $0x1e0] sm:$0xf]
                  %422 = vst [vmem:[%s300 + $0xf0] sm:$0xf] %v421
                  %v423 = vld [vmem:[%s299 + $0x1e8] sm:$0xf]
                  %424 = vst [vmem:[%s300 + $0xf4] sm:$0xf] %v423
                  %v425 = vld [vmem:[%s299 + $0x1f0] sm:$0xf]
                  %426 = vst [vmem:[%s300 + $0xf8] sm:$0xf] %v425
                  %v427 = vld [vmem:[%s299 + $0x1f8] sm:$0xf]
                  %428 = vst [vmem:[%s300 + $0xfc] sm:$0xf] %v427
                $region59: #{archetypal_head_forward.5} parent=46 // loop_footer
                  %s298 = sadd.s32 1, %s294
                $region60: #{archetypal_head_forward.5} parent=46 // loop_footer_branch
                  %293 = sbr.rel target = $region56
                $region61: #{archetypal_head_forward.5} parent=46 // loop_exit
                  _
              $region47: #{archetypal_head_forward.5} parent=31 // pred_fallthru
                _
            $region32: #{archetypal_head_forward.5} parent=27 // pred_fallthru
              _
            // Predicated region
            $region33: #{archetypal_head_forward.5} parent=27 // pred_check
              _
            $region34: #{archetypal_head_forward.5} parent=27 // pred_check_branch
              %144 = sbr.rel (0) target = $region36
            $region35: #{archetypal_head_forward.5} parent=27 // pred_region
              loop: start=0, step=1, limit=1
              $region37: #{archetypal_head_forward.5} parent=35 // loop_pre_header
                _
              $region38: #{archetypal_head_forward.5} parent=35 // loop_header
                %s147 = sphi 0, %s151
                %p148 = scmp.ge.s32.totalorder %s147, 1
                %s152 = sphi %s138, %s138
                %s153 = sphi %s136, %s136
              $region39: #{archetypal_head_forward.5} parent=35 // loop_header_branch
                %150 = sbr.rel (%p148) target = $region43
              $region40: #{archetypal_head_forward.5} parent=35 // loop_body
                %v154 = vld [vmem:[%s152] sm:$0xf]
                %155 = vst [vmem:[%s153] sm:$0xf] %v154
                %v156 = vld [vmem:[%s152 + $0x8] sm:$0xf]
                %157 = vst [vmem:[%s153 + $0x4] sm:$0xf] %v156
                %v158 = vld [vmem:[%s152 + $0x10] sm:$0xf]
                %159 = vst [vmem:[%s153 + $0x8] sm:$0xf] %v158
                %v160 = vld [vmem:[%s152 + $0x18] sm:$0xf]
                %161 = vst [vmem:[%s153 + $0xc] sm:$0xf] %v160
                %v162 = vld [vmem:[%s152 + $0x20] sm:$0xf]
                %163 = vst [vmem:[%s153 + $0x10] sm:$0xf] %v162
                %v164 = vld [vmem:[%s152 + $0x28] sm:$0xf]
                %165 = vst [vmem:[%s153 + $0x14] sm:$0xf] %v164
                %v166 = vld [vmem:[%s152 + $0x30] sm:$0xf]
                %167 = vst [vmem:[%s153 + $0x18] sm:$0xf] %v166
                %v168 = vld [vmem:[%s152 + $0x38] sm:$0xf]
                %169 = vst [vmem:[%s153 + $0x1c] sm:$0xf] %v168
                %v170 = vld [vmem:[%s152 + $0x40] sm:$0xf]
                %171 = vst [vmem:[%s153 + $0x20] sm:$0xf] %v170
                %v172 = vld [vmem:[%s152 + $0x48] sm:$0xf]
                %173 = vst [vmem:[%s153 + $0x24] sm:$0xf] %v172
                %v174 = vld [vmem:[%s152 + $0x50] sm:$0xf]
                %175 = vst [vmem:[%s153 + $0x28] sm:$0xf] %v174
                %v176 = vld [vmem:[%s152 + $0x58] sm:$0xf]
                %177 = vst [vmem:[%s153 + $0x2c] sm:$0xf] %v176
                %v178 = vld [vmem:[%s152 + $0x60] sm:$0xf]
                %179 = vst [vmem:[%s153 + $0x30] sm:$0xf] %v178
                %v180 = vld [vmem:[%s152 + $0x68] sm:$0xf]
                %181 = vst [vmem:[%s153 + $0x34] sm:$0xf] %v180
                %v182 = vld [vmem:[%s152 + $0x70] sm:$0xf]
                %183 = vst [vmem:[%s153 + $0x38] sm:$0xf] %v182
                %v184 = vld [vmem:[%s152 + $0x78] sm:$0xf]
                %185 = vst [vmem:[%s153 + $0x3c] sm:$0xf] %v184
                %v186 = vld [vmem:[%s152 + $0x80] sm:$0xf]
                %187 = vst [vmem:[%s153 + $0x40] sm:$0xf] %v186
                %v188 = vld [vmem:[%s152 + $0x88] sm:$0xf]
                %189 = vst [vmem:[%s153 + $0x44] sm:$0xf] %v188
                %v190 = vld [vmem:[%s152 + $0x90] sm:$0xf]
                %191 = vst [vmem:[%s153 + $0x48] sm:$0xf] %v190
                %v192 = vld [vmem:[%s152 + $0x98] sm:$0xf]
                %193 = vst [vmem:[%s153 + $0x4c] sm:$0xf] %v192
                %v194 = vld [vmem:[%s152 + $0xa0] sm:$0xf]
                %195 = vst [vmem:[%s153 + $0x50] sm:$0xf] %v194
                %v196 = vld [vmem:[%s152 + $0xa8] sm:$0xf]
                %197 = vst [vmem:[%s153 + $0x54] sm:$0xf] %v196
                %v198 = vld [vmem:[%s152 + $0xb0] sm:$0xf]
                %199 = vst [vmem:[%s153 + $0x58] sm:$0xf] %v198
                %v200 = vld [vmem:[%s152 + $0xb8] sm:$0xf]
                %201 = vst [vmem:[%s153 + $0x5c] sm:$0xf] %v200
                %v202 = vld [vmem:[%s152 + $0xc0] sm:$0xf]
                %203 = vst [vmem:[%s153 + $0x60] sm:$0xf] %v202
                %v204 = vld [vmem:[%s152 + $0xc8] sm:$0xf]
                %205 = vst [vmem:[%s153 + $0x64] sm:$0xf] %v204
                %v206 = vld [vmem:[%s152 + $0xd0] sm:$0xf]
                %207 = vst [vmem:[%s153 + $0x68] sm:$0xf] %v206
                %v208 = vld [vmem:[%s152 + $0xd8] sm:$0xf]
                %209 = vst [vmem:[%s153 + $0x6c] sm:$0xf] %v208
                %v210 = vld [vmem:[%s152 + $0xe0] sm:$0xf]
                %211 = vst [vmem:[%s153 + $0x70] sm:$0xf] %v210
                %v212 = vld [vmem:[%s152 + $0xe8] sm:$0xf]
                %213 = vst [vmem:[%s153 + $0x74] sm:$0xf] %v212
                %v214 = vld [vmem:[%s152 + $0xf0] sm:$0xf]
                %215 = vst [vmem:[%s153 + $0x78] sm:$0xf] %v214
                %v216 = vld [vmem:[%s152 + $0xf8] sm:$0xf]
                %217 = vst [vmem:[%s153 + $0x7c] sm:$0xf] %v216
                %v218 = vld [vmem:[%s152 + $0x100] sm:$0xf]
                %219 = vst [vmem:[%s153 + $0x80] sm:$0xf] %v218
                %v220 = vld [vmem:[%s152 + $0x108] sm:$0xf]
                %221 = vst [vmem:[%s153 + $0x84] sm:$0xf] %v220
                %v222 = vld [vmem:[%s152 + $0x110] sm:$0xf]
                %223 = vst [vmem:[%s153 + $0x88] sm:$0xf] %v222
                %v224 = vld [vmem:[%s152 + $0x118] sm:$0xf]
                %225 = vst [vmem:[%s153 + $0x8c] sm:$0xf] %v224
                %v226 = vld [vmem:[%s152 + $0x120] sm:$0xf]
                %227 = vst [vmem:[%s153 + $0x90] sm:$0xf] %v226
                %v228 = vld [vmem:[%s152 + $0x128] sm:$0xf]
                %229 = vst [vmem:[%s153 + $0x94] sm:$0xf] %v228
                %v230 = vld [vmem:[%s152 + $0x130] sm:$0xf]
                %231 = vst [vmem:[%s153 + $0x98] sm:$0xf] %v230
                %v232 = vld [vmem:[%s152 + $0x138] sm:$0xf]
                %233 = vst [vmem:[%s153 + $0x9c] sm:$0xf] %v232
                %v234 = vld [vmem:[%s152 + $0x140] sm:$0xf]
                %235 = vst [vmem:[%s153 + $0xa0] sm:$0xf] %v234
                %v236 = vld [vmem:[%s152 + $0x148] sm:$0xf]
                %237 = vst [vmem:[%s153 + $0xa4] sm:$0xf] %v236
                %v238 = vld [vmem:[%s152 + $0x150] sm:$0xf]
                %239 = vst [vmem:[%s153 + $0xa8] sm:$0xf] %v238
                %v240 = vld [vmem:[%s152 + $0x158] sm:$0xf]
                %241 = vst [vmem:[%s153 + $0xac] sm:$0xf] %v240
                %v242 = vld [vmem:[%s152 + $0x160] sm:$0xf]
                %243 = vst [vmem:[%s153 + $0xb0] sm:$0xf] %v242
                %v244 = vld [vmem:[%s152 + $0x168] sm:$0xf]
                %245 = vst [vmem:[%s153 + $0xb4] sm:$0xf] %v244
                %v246 = vld [vmem:[%s152 + $0x170] sm:$0xf]
                %247 = vst [vmem:[%s153 + $0xb8] sm:$0xf] %v246
                %v248 = vld [vmem:[%s152 + $0x178] sm:$0xf]
                %249 = vst [vmem:[%s153 + $0xbc] sm:$0xf] %v248
                %v250 = vld [vmem:[%s152 + $0x180] sm:$0xf]
                %251 = vst [vmem:[%s153 + $0xc0] sm:$0xf] %v250
                %v252 = vld [vmem:[%s152 + $0x188] sm:$0xf]
                %253 = vst [vmem:[%s153 + $0xc4] sm:$0xf] %v252
                %v254 = vld [vmem:[%s152 + $0x190] sm:$0xf]
                %255 = vst [vmem:[%s153 + $0xc8] sm:$0xf] %v254
                %v256 = vld [vmem:[%s152 + $0x198] sm:$0xf]
                %257 = vst [vmem:[%s153 + $0xcc] sm:$0xf] %v256
                %v258 = vld [vmem:[%s152 + $0x1a0] sm:$0xf]
                %259 = vst [vmem:[%s153 + $0xd0] sm:$0xf] %v258
                %v260 = vld [vmem:[%s152 + $0x1a8] sm:$0xf]
                %261 = vst [vmem:[%s153 + $0xd4] sm:$0xf] %v260
                %v262 = vld [vmem:[%s152 + $0x1b0] sm:$0xf]
                %263 = vst [vmem:[%s153 + $0xd8] sm:$0xf] %v262
                %v264 = vld [vmem:[%s152 + $0x1b8] sm:$0xf]
                %265 = vst [vmem:[%s153 + $0xdc] sm:$0xf] %v264
                %v266 = vld [vmem:[%s152 + $0x1c0] sm:$0xf]
                %267 = vst [vmem:[%s153 + $0xe0] sm:$0xf] %v266
                %v268 = vld [vmem:[%s152 + $0x1c8] sm:$0xf]
                %269 = vst [vmem:[%s153 + $0xe4] sm:$0xf] %v268
                %v270 = vld [vmem:[%s152 + $0x1d0] sm:$0xf]
                %271 = vst [vmem:[%s153 + $0xe8] sm:$0xf] %v270
                %v272 = vld [vmem:[%s152 + $0x1d8] sm:$0xf]
                %273 = vst [vmem:[%s153 + $0xec] sm:$0xf] %v272
                %v274 = vld [vmem:[%s152 + $0x1e0] sm:$0xf]
                %275 = vst [vmem:[%s153 + $0xf0] sm:$0xf] %v274
                %v276 = vld [vmem:[%s152 + $0x1e8] sm:$0xf]
                %277 = vst [vmem:[%s153 + $0xf4] sm:$0xf] %v276
                %v278 = vld [vmem:[%s152 + $0x1f0] sm:$0xf]
                %279 = vst [vmem:[%s153 + $0xf8] sm:$0xf] %v278
                %v280 = vld [vmem:[%s152 + $0x1f8] sm:$0xf]
                %281 = vst [vmem:[%s153 + $0xfc] sm:$0xf] %v280
              $region41: #{archetypal_head_forward.5} parent=35 // loop_footer
                %s151 = sadd.s32 1, %s147
              $region42: #{archetypal_head_forward.5} parent=35 // loop_footer_branch
                %146 = sbr.rel target = $region38
              $region43: #{archetypal_head_forward.5} parent=35 // loop_exit
                _
            $region36: #{archetypal_head_forward.5} parent=27 // pred_fallthru
              _
          $region28: #{archetypal_head_forward.5} parent=23 // pred_fallthru
            _
          %429 = vnop
        $region24: #{archetypal_head_forward.5} parent=19 // pred_fallthru
          _
        // Predicated region
        $region62: #{archetypal_head_forward.5} parent=19 // pred_check
          %p430 = pneg %p76
        $region63: #{archetypal_head_forward.5} parent=19 // pred_check_branch
          %432 = sbr.rel (%p430) target = $region65
        $region64: #{archetypal_head_forward.5} parent=19 // pred_region
          %p433 = scmp.lt.s32.totalorder %s9, 1
          %s434 = scalar_select %p433, %s9, 1
          %s435 = scalar_lea.vmem %s2, %s434
        $region65: #{archetypal_head_forward.5} parent=19 // pred_fallthru
          _
      $region20: #{archetypal_head_forward.5} parent=5 // pred_fallthru
        _
      %p436 = scmp.le.s32.totalorder 1, %s9
      %p437 = scmp.lt.s32.totalorder %s9, 3
      %p438 = pnand %p436, %p437
      %p439 = pneg %p438
      // Predicated region
      $region66: #{archetypal_head_forward.5} parent=5 // pred_check
        _
      $region67: #{archetypal_head_forward.5} parent=5 // pred_check_branch
        %441 = sbr.rel (%p438) target = $region69
      $region68: #{archetypal_head_forward.5} parent=5 // pred_region
        %s442 = ssub.s32 %s9, 1
        %s443 = sand.u32 %s43, 1
        %s444 = sand.u32 %s43, 1
        %s445 = smul.addr %s444, 256
        %s446 = scalar_lea.vmem [#allocation2], %s445
        // Predicated region
        $region70: #{archetypal_head_forward.5} parent=68 // pred_check
          %p447 = pneg %p56
        $region71: #{archetypal_head_forward.5} parent=68 // pred_check_branch
          %449 = sbr.rel (%p447) target = $region73
        $region72: #{archetypal_head_forward.5} parent=68 // pred_region
          _
        $region73: #{archetypal_head_forward.5} parent=68 // pred_fallthru
          _
        %p450 = pneg %p30
        %p451 = pneg %p27
        %s452 = sand.u32 %s43, 1
        %s453 = sand.u32 %s43, 1
        %s454 = smul.addr %s453, 256
        %s455 = scalar_lea.vmem [#allocation2], %s454
        %p456 = pneg %p56
        %p457 = pneg %p53
        %p458 = scmp.lt.s32.totalorder %s14, 1
        %s459 = scalar_select %p458, %s14, 1
        %s460 = scalar_lea.vmem %s2, %s459
        %p461 = pneg %p82
        %p462 = pneg %p79
        %p463 = pneg %p108
        %p464 = pneg %p105
        %s465 = sand.u32 %s95, 1
        %s466 = sand.u32 %s95, 1
        %s467 = smul.addr %s466, 8
        %s468 = scalar_lea.vmem [#allocation3], %s467
        %p469 = scmp.lt.s32.totalorder %s14, 1
        %s470 = scalar_select %p469, %s14, 1
        %s471 = scalar_lea.vmem %s2, %s470
        %v473 = vld [vmem:[%s0] sm:$0xff]
        %v474 = vld [vmem:[%s0 + $0x8] sm:$0xff]
        %v475 = vld [vmem:[%s0 + $0x10] sm:$0xff]
        %v476 = vld [vmem:[%s0 + $0x18] sm:$0xff]
        %v477 = vld [vmem:[%s446] sm:$0xf]
        %v478 = vld [vmem:[%s446 + $0x4] sm:$0xf]
        %v479 = vld [vmem:[%s446 + $0x8] sm:$0xf]
        %v480 = vld [vmem:[%s446 + $0xc] sm:$0xf]
        %v481 = vld [vmem:[%s446 + $0x10] sm:$0xf]
        %v482 = vld [vmem:[%s446 + $0x14] sm:$0xf]
        %v483 = vld [vmem:[%s446 + $0x18] sm:$0xf]
        %v484 = vld [vmem:[%s446 + $0x1c] sm:$0xf]
        %v485 = vld [vmem:[%s446 + $0x20] sm:$0xf]
        %v486 = vld [vmem:[%s446 + $0x24] sm:$0xf]
        %v487 = vld [vmem:[%s446 + $0x28] sm:$0xf]
        %v488 = vld [vmem:[%s446 + $0x2c] sm:$0xf]
        %v489 = vld [vmem:[%s446 + $0x30] sm:$0xf]
        %v490 = vld [vmem:[%s446 + $0x34] sm:$0xf]
        %v491 = vld [vmem:[%s446 + $0x38] sm:$0xf]
        %v492 = vld [vmem:[%s446 + $0x3c] sm:$0xf]
        %v493 = vld [vmem:[%s446 + $0x40] sm:$0xf]
        %v494 = vld [vmem:[%s446 + $0x44] sm:$0xf]
        %v495 = vld [vmem:[%s446 + $0x48] sm:$0xf]
        %v496 = vld [vmem:[%s446 + $0x4c] sm:$0xf]
        %v497 = vld [vmem:[%s446 + $0x50] sm:$0xf]
        %v498 = vld [vmem:[%s446 + $0x54] sm:$0xf]
        %v499 = vld [vmem:[%s446 + $0x58] sm:$0xf]
        %v500 = vld [vmem:[%s446 + $0x5c] sm:$0xf]
        %v501 = vld [vmem:[%s446 + $0x60] sm:$0xf]
        %v502 = vld [vmem:[%s446 + $0x64] sm:$0xf]
        %v503 = vld [vmem:[%s446 + $0x68] sm:$0xf]
        %v504 = vld [vmem:[%s446 + $0x6c] sm:$0xf]
        %v505 = vld [vmem:[%s446 + $0x70] sm:$0xf]
        %v506 = vld [vmem:[%s446 + $0x74] sm:$0xf]
        %v507 = vld [vmem:[%s446 + $0x78] sm:$0xf]
        %v508 = vld [vmem:[%s446 + $0x7c] sm:$0xf]
        %v509 = vld [vmem:[%s446 + $0x80] sm:$0xf]
        %v510 = vld [vmem:[%s446 + $0x84] sm:$0xf]
        %v511 = vld [vmem:[%s446 + $0x88] sm:$0xf]
        %v512 = vld [vmem:[%s446 + $0x8c] sm:$0xf]
        %v513 = vld [vmem:[%s446 + $0x90] sm:$0xf]
        %v514 = vld [vmem:[%s446 + $0x94] sm:$0xf]
        %v515 = vld [vmem:[%s446 + $0x98] sm:$0xf]
        %v516 = vld [vmem:[%s446 + $0x9c] sm:$0xf]
        %v517 = vld [vmem:[%s446 + $0xa0] sm:$0xf]
        %v518 = vld [vmem:[%s446 + $0xa4] sm:$0xf]
        %v519 = vld [vmem:[%s446 + $0xa8] sm:$0xf]
        %v520 = vld [vmem:[%s446 + $0xac] sm:$0xf]
        %v521 = vld [vmem:[%s446 + $0xb0] sm:$0xf]
        %v522 = vld [vmem:[%s446 + $0xb4] sm:$0xf]
        %v523 = vld [vmem:[%s446 + $0xb8] sm:$0xf]
        %v524 = vld [vmem:[%s446 + $0xbc] sm:$0xf]
        %v525 = vld [vmem:[%s446 + $0xc0] sm:$0xf]
        %v526 = vld [vmem:[%s446 + $0xc4] sm:$0xf]
        %v527 = vld [vmem:[%s446 + $0xc8] sm:$0xf]
        %v528 = vld [vmem:[%s446 + $0xcc] sm:$0xf]
        %v529 = vld [vmem:[%s446 + $0xd0] sm:$0xf]
        %v530 = vld [vmem:[%s446 + $0xd4] sm:$0xf]
        %v531 = vld [vmem:[%s446 + $0xd8] sm:$0xf]
        %v532 = vld [vmem:[%s446 + $0xdc] sm:$0xf]
        %v533 = vld [vmem:[%s446 + $0xe0] sm:$0xf]
        %v534 = vld [vmem:[%s446 + $0xe4] sm:$0xf]
        %v535 = vld [vmem:[%s446 + $0xe8] sm:$0xf]
        %v536 = vld [vmem:[%s446 + $0xec] sm:$0xf]
        %v537 = vld [vmem:[%s446 + $0xf0] sm:$0xf]
        %v538 = vld [vmem:[%s446 + $0xf4] sm:$0xf]
        %v539 = vld [vmem:[%s446 + $0xf8] sm:$0xf]
        %v540 = vld [vmem:[%s446 + $0xfc] sm:$0xf]
        %v541 = vld [vmem:[%s471] sm:$0x1]
        %v543 = vlaneseq
        %v544 = vshrl.u32 %v543, 7
        %v545 = vsub.s32 0, %v544
        %v546 = vrot.slane %v541, %v545
        %v552 = vunpack.c.l.b16 %v473
        %v553 = vunpack.c.h.b16 %v473
        %v554 = vunpack.c.l.b16 %v474
        %v555 = vunpack.c.h.b16 %v474
        %v556 = vunpack.c.l.b16 %v475
        %v557 = vunpack.c.h.b16 %v475
        %v558 = vunpack.c.l.b16 %v476
        %v559 = vunpack.c.h.b16 %v476
        %v560 = vpack.c.b16 %v556, %v552
        %v561 = vpack.c.b16 %v557, %v553
        %v562 = vpack.c.b16 %v558, %v554
        %v563 = vpack.c.b16 %v559, %v555
        %v632 = vunpack.c.l.b16 %v477
        %v633 = vunpack.c.l.b16 %v478
        %v634 = vunpack.c.l.b16 %v479
        %v635 = vunpack.c.l.b16 %v480
        %v636 = vunpack.c.l.b16 %v481
        %v637 = vunpack.c.l.b16 %v482
        %v638 = vunpack.c.l.b16 %v483
        %v639 = vunpack.c.l.b16 %v484
        %v640 = vunpack.c.l.b16 %v485
        %v641 = vunpack.c.l.b16 %v486
        %v642 = vunpack.c.l.b16 %v487
        %v643 = vunpack.c.l.b16 %v488
        %v644 = vunpack.c.l.b16 %v489
        %v645 = vunpack.c.l.b16 %v490
        %v646 = vunpack.c.l.b16 %v491
        %v647 = vunpack.c.l.b16 %v492
        %v648 = vunpack.c.l.b16 %v493
        %v649 = vunpack.c.l.b16 %v494
        %v650 = vunpack.c.l.b16 %v495
        %v651 = vunpack.c.l.b16 %v496
        %v652 = vunpack.c.l.b16 %v497
        %v653 = vunpack.c.l.b16 %v498
        %v654 = vunpack.c.l.b16 %v499
        %v655 = vunpack.c.l.b16 %v500
        %v656 = vunpack.c.l.b16 %v501
        %v657 = vunpack.c.l.b16 %v502
        %v658 = vunpack.c.l.b16 %v503
        %v659 = vunpack.c.l.b16 %v504
        %v660 = vunpack.c.l.b16 %v505
        %v661 = vunpack.c.l.b16 %v506
        %v662 = vunpack.c.l.b16 %v507
        %v663 = vunpack.c.l.b16 %v508
        %v664 = vunpack.c.l.b16 %v509
        %v665 = vunpack.c.l.b16 %v510
        %v666 = vunpack.c.l.b16 %v511
        %v667 = vunpack.c.l.b16 %v512
        %v668 = vunpack.c.l.b16 %v513
        %v669 = vunpack.c.l.b16 %v514
        %v670 = vunpack.c.l.b16 %v515
        %v671 = vunpack.c.l.b16 %v516
        %v672 = vunpack.c.l.b16 %v517
        %v673 = vunpack.c.l.b16 %v518
        %v674 = vunpack.c.l.b16 %v519
        %v675 = vunpack.c.l.b16 %v520
        %v676 = vunpack.c.l.b16 %v521
        %v677 = vunpack.c.l.b16 %v522
        %v678 = vunpack.c.l.b16 %v523
        %v679 = vunpack.c.l.b16 %v524
        %v680 = vunpack.c.l.b16 %v525
        %v681 = vunpack.c.l.b16 %v526
        %v682 = vunpack.c.l.b16 %v527
        %v683 = vunpack.c.l.b16 %v528
        %v684 = vunpack.c.l.b16 %v529
        %v685 = vunpack.c.l.b16 %v530
        %v686 = vunpack.c.l.b16 %v531
        %v687 = vunpack.c.l.b16 %v532
        %v688 = vunpack.c.l.b16 %v533
        %v689 = vunpack.c.l.b16 %v534
        %v690 = vunpack.c.l.b16 %v535
        %v691 = vunpack.c.l.b16 %v536
        %v692 = vunpack.c.l.b16 %v537
        %v693 = vunpack.c.l.b16 %v538
        %v694 = vunpack.c.l.b16 %v539
        %v695 = vunpack.c.l.b16 %v540
        %v696 = vpack.c.b16 %v633, %v632
        %v697 = vpack.c.b16 %v635, %v634
        %v698 = vpack.c.b16 %v637, %v636
        %v699 = vpack.c.b16 %v639, %v638
        %v700 = vpack.c.b16 %v641, %v640
        %v701 = vpack.c.b16 %v643, %v642
        %v702 = vpack.c.b16 %v645, %v644
        %v703 = vpack.c.b16 %v647, %v646
        %v704 = vpack.c.b16 %v649, %v648
        %v705 = vpack.c.b16 %v651, %v650
        %v706 = vpack.c.b16 %v653, %v652
        %v707 = vpack.c.b16 %v655, %v654
        %v708 = vpack.c.b16 %v657, %v656
        %v709 = vpack.c.b16 %v659, %v658
        %v710 = vpack.c.b16 %v661, %v660
        %v711 = vpack.c.b16 %v663, %v662
        %v712 = vpack.c.b16 %v665, %v664
        %v713 = vpack.c.b16 %v667, %v666
        %v714 = vpack.c.b16 %v669, %v668
        %v715 = vpack.c.b16 %v671, %v670
        %v716 = vpack.c.b16 %v673, %v672
        %v717 = vpack.c.b16 %v675, %v674
        %v718 = vpack.c.b16 %v677, %v676
        %v719 = vpack.c.b16 %v679, %v678
        %v720 = vpack.c.b16 %v681, %v680
        %v721 = vpack.c.b16 %v683, %v682
        %v722 = vpack.c.b16 %v685, %v684
        %v723 = vpack.c.b16 %v687, %v686
        %v724 = vpack.c.b16 %v689, %v688
        %v725 = vpack.c.b16 %v691, %v690
        %v726 = vpack.c.b16 %v693, %v692
        %v727 = vpack.c.b16 %v695, %v694
        %760 = vmatprep.subr.bf16.mxu0 0
        %761 = vmatpush1.bf16.msra.mxu0 %v696
        %762 = vmatprep.subr.bf16.mxu0 0
        %763 = vmatpush1.bf16.msra.mxu0 %v697
        %764 = vmatprep.subr.bf16.mxu0 0
        %765 = vmatpush1.bf16.msra.mxu0 %v698
        %766 = vmatprep.subr.bf16.mxu0 0
        %767 = vmatpush1.bf16.msra.mxu0 %v699
        %768 = vmatprep.subr.bf16.mxu0 0
        %769 = vmatpush1.bf16.msra.mxu0 %v700
        %770 = vmatprep.subr.bf16.mxu0 0
        %771 = vmatpush1.bf16.msra.mxu0 %v701
        %772 = vmatprep.subr.bf16.mxu0 0
        %773 = vmatpush1.bf16.msra.mxu0 %v702
        %774 = vmatprep.subr.bf16.mxu0 0
        %775 = vmatpush1.bf16.msra.mxu0 %v703
        %776 = vmatprep.subr.bf16.mxu0 0
        %777 = vmatpush1.bf16.msra.mxu0 %v704
        %778 = vmatprep.subr.bf16.mxu0 0
        %779 = vmatpush1.bf16.msra.mxu0 %v705
        %780 = vmatprep.subr.bf16.mxu0 0
        %781 = vmatpush1.bf16.msra.mxu0 %v706
        %782 = vmatprep.subr.bf16.mxu0 0
        %783 = vmatpush1.bf16.msra.mxu0 %v707
        %784 = vmatprep.subr.bf16.mxu0 0
        %785 = vmatpush1.bf16.msra.mxu0 %v708
        %786 = vmatprep.subr.bf16.mxu0 0
        %787 = vmatpush1.bf16.msra.mxu0 %v709
        %788 = vmatprep.subr.bf16.mxu0 0
        %789 = vmatpush1.bf16.msra.mxu0 %v710
        %790 = vmatprep.subr.bf16.mxu0 0
        %791 = vmatpush1.bf16.msra.mxu0 %v711
        %792 = vmatprep.mubr.bf16.mxu0 %v561
        %793 = vmatmul.mubr.bf16.gmra.mrb[0].mxu0 %v560
        %v794 = vpop.f32.mrb[0].mxu0
        %v795 = vadd.f32 %v546, %v794
        %v796 = vpop.f32.mrb[0].mxu0
        %v797 = vpop.f32.mrb[0].mxu0
        %v798 = vadd.f32 %v546, %v797
        %v799 = vpop.f32.mrb[0].mxu0
        %800 = vdwg.mxu0
        %801 = vmatprep.subr.bf16.mxu0 0
        %802 = vmatpush1.bf16.msra.mxu0 %v712
        %803 = vmatprep.subr.bf16.mxu0 0
        %804 = vmatpush1.bf16.msra.mxu0 %v713
        %805 = vmatprep.subr.bf16.mxu0 0
        %806 = vmatpush1.bf16.msra.mxu0 %v714
        %807 = vmatprep.subr.bf16.mxu0 0
        %808 = vmatpush1.bf16.msra.mxu0 %v715
        %809 = vmatprep.subr.bf16.mxu0 0
        %810 = vmatpush1.bf16.msra.mxu0 %v716
        %811 = vmatprep.subr.bf16.mxu0 0
        %812 = vmatpush1.bf16.msra.mxu0 %v717
        %813 = vmatprep.subr.bf16.mxu0 0
        %814 = vmatpush1.bf16.msra.mxu0 %v718
        %815 = vmatprep.subr.bf16.mxu0 0
        %816 = vmatpush1.bf16.msra.mxu0 %v719
        %817 = vmatprep.subr.bf16.mxu0 0
        %818 = vmatpush1.bf16.msra.mxu0 %v720
        %819 = vmatprep.subr.bf16.mxu0 0
        %820 = vmatpush1.bf16.msra.mxu0 %v721
        %821 = vmatprep.subr.bf16.mxu0 0
        %822 = vmatpush1.bf16.msra.mxu0 %v722
        %823 = vmatprep.subr.bf16.mxu0 0
        %824 = vmatpush1.bf16.msra.mxu0 %v723
        %825 = vmatprep.subr.bf16.mxu0 0
        %826 = vmatpush1.bf16.msra.mxu0 %v724
        %827 = vmatprep.subr.bf16.mxu0 0
        %828 = vmatpush1.bf16.msra.mxu0 %v725
        %829 = vmatprep.subr.bf16.mxu0 0
        %830 = vmatpush1.bf16.msra.mxu0 %v726
        %831 = vmatprep.subr.bf16.mxu0 0
        %832 = vmatpush1.bf16.msra.mxu0 %v727
        %833 = vmatprep.mubr.bf16.mxu0 %v563
        %834 = vmatmul.mubr.bf16.gmra.mrb[0].mxu0 %v562
        %v835 = vpop.f32.mrb[0].mxu0
        %v836 = vadd.f32 %v795, %v835
        %v837 = vpop.f32.mrb[0].mxu0
        %v838 = vpop.f32.mrb[0].mxu0
        %v839 = vadd.f32 %v798, %v838
        %v840 = vpop.f32.mrb[0].mxu0
        %841 = vdwg.mxu0
        %v842 = vmax.f32 %v836, 0.0
        %v843 = vmax.f32 %v839, 0.0
        %v844 = vpack.c.bf16 %v843, %v842
        %v846 = vunpack.c.l.b16 %v844
        %v847 = vunpack.c.h.b16 %v844
        %v848 = vpack.c.b16 %v846, %v846
        %v849 = vpack.c.b16 %v847, %v847
        %852 = vst [vmem:[%s468] sm:$0xf] %v848
        %853 = vst [vmem:[%s468 + $0x4] sm:$0xf] %v849
        %s854 = sand.u32 %s95, 1
        %s855 = sand.u32 %s95, 1
        %s856 = smul.addr %s855, 8
        %s857 = scalar_lea.vmem [#allocation3], %s856
        // Predicated region
        $region74: #{archetypal_head_forward.5} parent=68 // pred_check
          %p858 = pneg %p105
        $region75: #{archetypal_head_forward.5} parent=68 // pred_check_branch
          %860 = sbr.rel (%p858) target = $region77
        $region76: #{archetypal_head_forward.5} parent=68 // pred_region
          %s861 = smul.addr %s14, 4
          %s862 = scalar_lea.vmem %s3, %s861
          // Predicated region
          $region78: #{archetypal_head_forward.5} parent=76 // pred_check
            _
          $region79: #{archetypal_head_forward.5} parent=76 // pred_check_branch
            %864 = sbr.rel (0) target = $region81
          $region80: #{archetypal_head_forward.5} parent=76 // pred_region
            // Predicated region
            $region82: #{archetypal_head_forward.5} parent=80 // pred_check
              _
            $region83: #{archetypal_head_forward.5} parent=80 // pred_check_branch
              %866 = sbr.rel target = $region85
            $region84: #{archetypal_head_forward.5} parent=80 // pred_region
              // Predicated region
              $region97: #{archetypal_head_forward.5} parent=84 // pred_check
                _
              $region98: #{archetypal_head_forward.5} parent=84 // pred_check_branch
                %883 = sbr.rel (0) target = $region100
              $region99: #{archetypal_head_forward.5} parent=84 // pred_region
                loop: start=0, step=1, limit=1
                $region101: #{archetypal_head_forward.5} parent=99 // loop_pre_header
                  _
                $region102: #{archetypal_head_forward.5} parent=99 // loop_header
                  %s885 = sphi 0, %s889
                  %p886 = scmp.ge.s32.totalorder %s885, 1
                  %s890 = sphi %s857, %s857
                  %s891 = sphi %s862, %s862
                $region103: #{archetypal_head_forward.5} parent=99 // loop_header_branch
                  %888 = sbr.rel (%p886) target = $region107
                $region104: #{archetypal_head_forward.5} parent=99 // loop_body
                  _
                $region105: #{archetypal_head_forward.5} parent=99 // loop_footer
                  %s889 = sadd.s32 1, %s885
                $region106: #{archetypal_head_forward.5} parent=99 // loop_footer_branch
                  %884 = sbr.rel target = $region102
                $region107: #{archetypal_head_forward.5} parent=99 // loop_exit
                  _
                loop: start=0, step=1, limit=1
                $region108: #{archetypal_head_forward.5} parent=99 // loop_pre_header
                  _
                $region109: #{archetypal_head_forward.5} parent=99 // loop_header
                  %s894 = sphi 0, %s898
                  %p895 = scmp.ge.s32.totalorder %s894, 1
                  %s899 = sphi %s857, %s857
                  %s900 = sphi %s862, %s862
                $region110: #{archetypal_head_forward.5} parent=99 // loop_header_branch
                  %897 = sbr.rel (%p895) target = $region114
                $region111: #{archetypal_head_forward.5} parent=99 // loop_body
                  %v901 = vld [vmem:[%s899] sm:$0xf]
                  %902 = vst [vmem:[%s900] sm:$0xf] %v901
                  %v903 = vld [vmem:[%s899 + $0x4] sm:$0xf]
                  %904 = vst [vmem:[%s900 + $0x8] sm:$0xf] %v903
                $region112: #{archetypal_head_forward.5} parent=99 // loop_footer
                  %s898 = sadd.s32 1, %s894
                $region113: #{archetypal_head_forward.5} parent=99 // loop_footer_branch
                  %893 = sbr.rel target = $region109
                $region114: #{archetypal_head_forward.5} parent=99 // loop_exit
                  _
              $region100: #{archetypal_head_forward.5} parent=84 // pred_fallthru
                _
            $region85: #{archetypal_head_forward.5} parent=80 // pred_fallthru
              _
            // Predicated region
            $region86: #{archetypal_head_forward.5} parent=80 // pred_check
              _
            $region87: #{archetypal_head_forward.5} parent=80 // pred_check_branch
              %868 = sbr.rel (0) target = $region89
            $region88: #{archetypal_head_forward.5} parent=80 // pred_region
              loop: start=0, step=1, limit=1
              $region90: #{archetypal_head_forward.5} parent=88 // loop_pre_header
                _
              $region91: #{archetypal_head_forward.5} parent=88 // loop_header
                %s871 = sphi 0, %s875
                %p872 = scmp.ge.s32.totalorder %s871, 1
                %s876 = sphi %s857, %s857
                %s877 = sphi %s862, %s862
              $region92: #{archetypal_head_forward.5} parent=88 // loop_header_branch
                %874 = sbr.rel (%p872) target = $region96
              $region93: #{archetypal_head_forward.5} parent=88 // loop_body
                %v878 = vld [vmem:[%s876] sm:$0xf]
                %879 = vst [vmem:[%s877] sm:$0xf] %v878
                %v880 = vld [vmem:[%s876 + $0x4] sm:$0xf]
                %881 = vst [vmem:[%s877 + $0x8] sm:$0xf] %v880
              $region94: #{archetypal_head_forward.5} parent=88 // loop_footer
                %s875 = sadd.s32 1, %s871
              $region95: #{archetypal_head_forward.5} parent=88 // loop_footer_branch
                %870 = sbr.rel target = $region91
              $region96: #{archetypal_head_forward.5} parent=88 // loop_exit
                _
            $region89: #{archetypal_head_forward.5} parent=80 // pred_fallthru
              _
          $region81: #{archetypal_head_forward.5} parent=76 // pred_fallthru
            _
          %905 = vnop
        $region77: #{archetypal_head_forward.5} parent=68 // pred_fallthru
          _
      $region69: #{archetypal_head_forward.5} parent=5 // pred_fallthru
        _
      %p906 = scmp.le.s32.totalorder 2, %s9
      // Predicated region
      $region115: #{archetypal_head_forward.5} parent=5 // pred_check
        %p907 = pneg %p906
      $region116: #{archetypal_head_forward.5} parent=5 // pred_check_branch
        %909 = sbr.rel (%p907) target = $region118
      $region117: #{archetypal_head_forward.5} parent=5 // pred_region
        %s910 = ssub.s32 %s9, 2
        // Predicated region
        $region119: #{archetypal_head_forward.5} parent=117 // pred_check
          %p911 = pneg %p111
        $region120: #{archetypal_head_forward.5} parent=117 // pred_check_branch
          %913 = sbr.rel (%p911) target = $region122
        $region121: #{archetypal_head_forward.5} parent=117 // pred_region
          %s914 = sand.u32 %s96, 1
          %s915 = sand.u32 %s96, 1
          %s916 = smul.addr %s915, 8
          %s917 = scalar_lea.vmem [#allocation3], %s916
        $region122: #{archetypal_head_forward.5} parent=117 // pred_fallthru
          _
      $region118: #{archetypal_head_forward.5} parent=5 // pred_fallthru
        _
    $region6: #{archetypal_head_forward.5} parent=1 // loop_footer
      %s13 = sadd.s32 1, %s9
    $region7: #{archetypal_head_forward.5} parent=1 // loop_footer_branch
      %8 = sbr.rel target = $region3
    $region8: #{archetypal_head_forward.5} parent=1 // loop_exit
      _

// kernel: archetypal_head_forward.4
$region0: #{archetypal_head_forward.4}
  #allocation0 [shape = 'u32[]', space=smem, size = 0x4, offset = 0x4, fixed_abs, tag = 'smem constant byte address 0x4 - core index']
  #allocation1 [shape = 'u32[144,128]{1,0:T(1,128)}', space=vmem, size = 0x12000, scoped, tag = 'internal scratch']
  %s0 = inlined_call_operand.vmem [shape: f32[16,512], index: 0, kind: input, shape index: {}]
  %s1 = inlined_call_operand.vmem [shape: f32[1,512], index: 1, kind: input, shape index: {}]
  %s2 = inlined_call_operand.hbm [shape: bf16[512,512], index: 2, kind: input, shape index: {}]
  %s3 = inlined_call_operand.vmem [shape: f32[1,512], index: 3, kind: input, shape index: {}]
  %s4 = inlined_call_operand.vmem [shape: bf16[512,16], index: 4, kind: input, shape index: {}]
  %s5 = inlined_call_operand.vmem [shape: f32[1,16], index: 5, kind: input, shape index: {}]
  %s6 = inlined_call_operand.vmem [shape: bf16[16,512], index: 6, kind: input, shape index: {}]
  %s7 = inlined_call_operand.vmem [shape: f32[1,512], index: 7, kind: input, shape index: {}]
  %s8 = inlined_call_operand.hbm [shape: bf16[512,512], index: 8, kind: input, shape index: {}]
  %s9 = inlined_call_operand.vmem [shape: f32[1,512], index: 9, kind: input, shape index: {}]
  %s10 = inlined_call_operand.vmem [shape: f32[16,16], index: 10, kind: output, shape index: {0}]
  %s11 = inlined_call_operand.vmem [shape: bf16[16,512], index: 11, kind: output, shape index: {1}]
  %12 = xla_tuple %s10, %s11
  %s13 = sld [smem:[#allocation0]]
  $region66: #{archetypal_head_forward.4} parent=0
    _
  %s15 = ssub.s32 1, %s13
  %s16 = scalar_select 0, %s15, %s13
  $region1: #{archetypal_head_forward.4} parent=0
    #allocation2 [shape = 'u8[524288]{0}', space=vmem, size = 0x80000, scoped, tag = 'input window, operand 2, single buffered']
    #allocation3 [shape = 's32[1]{0}', space=sflag, size = 0x4, scoped, tag = 'scoped memory for archetypal_head_forward.4']
    #allocation4 [shape = 'u8[524288]{0}', space=vmem, size = 0x80000, scoped, tag = 'input window, operand 8, single buffered']
    #allocation5 [shape = 's32[1]{0}', space=sflag, size = 0x4, scoped, tag = 'scoped memory for archetypal_head_forward.4']
    %17 = vsyncpa [#allocation3], 0
    %18 = vsyncpa [#allocation5], 0
    // Predicated region
    $region2: #{archetypal_head_forward.4} parent=1 // pred_check
      _
    $region3: #{archetypal_head_forward.4} parent=1 // pred_check_branch
      %20 = sbr.rel (0) target = $region5
    $region4: #{archetypal_head_forward.4} parent=1 // pred_region
      _
    $region5: #{archetypal_head_forward.4} parent=1 // pred_fallthru
      _
    // Predicated region
    $region6: #{archetypal_head_forward.4} parent=1 // pred_check
      _
    $region7: #{archetypal_head_forward.4} parent=1 // pred_check_branch
      %22 = sbr.rel (0) target = $region9
    $region8: #{archetypal_head_forward.4} parent=1 // pred_region
      _
    $region9: #{archetypal_head_forward.4} parent=1 // pred_fallthru
      _
    // Predicated region
    $region10: #{archetypal_head_forward.4} parent=1 // pred_check
      _
    $region11: #{archetypal_head_forward.4} parent=1 // pred_check_branch
      %24 = sbr.rel (0) target = $region13
    $region12: #{archetypal_head_forward.4} parent=1 // pred_region
      %s26 = ssub.s32 16384, 16384
      %27 = vsyncadd [#allocation3], %s26
      %s28 = sshll.u32 [#allocation2], 4
      %s29 = int_to_ptr.vmem [resolvable:$true] %s28
      %34 = dma.hbm_to_vmem [thread:$0]  %s2, 16384, %s29, [#allocation3], 256, 256, 16
    $region13: #{archetypal_head_forward.4} parent=1 // pred_fallthru
      _
    // Predicated region
    $region14: #{archetypal_head_forward.4} parent=1 // pred_check
      _
    $region15: #{archetypal_head_forward.4} parent=1 // pred_check_branch
      %36 = sbr.rel (0) target = $region17
    $region16: #{archetypal_head_forward.4} parent=1 // pred_region
      _
    $region17: #{archetypal_head_forward.4} parent=1 // pred_fallthru
      _
    // Predicated region
    $region18: #{archetypal_head_forward.4} parent=1 // pred_check
      _
    $region19: #{archetypal_head_forward.4} parent=1 // pred_check_branch
      %38 = sbr.rel (0) target = $region21
    $region20: #{archetypal_head_forward.4} parent=1 // pred_region
      _
    $region21: #{archetypal_head_forward.4} parent=1 // pred_fallthru
      _
    // Predicated region
    $region22: #{archetypal_head_forward.4} parent=1 // pred_check
      _
    $region23: #{archetypal_head_forward.4} parent=1 // pred_check_branch
      %40 = sbr.rel (0) target = $region25
    $region24: #{archetypal_head_forward.4} parent=1 // pred_region
      _
    $region25: #{archetypal_head_forward.4} parent=1 // pred_fallthru
      _
    // Predicated region
    $region26: #{archetypal_head_forward.4} parent=1 // pred_check
      _
    $region27: #{archetypal_head_forward.4} parent=1 // pred_check_branch
      %42 = sbr.rel (0) target = $region29
    $region28: #{archetypal_head_forward.4} parent=1 // pred_region
      _
    $region29: #{archetypal_head_forward.4} parent=1 // pred_fallthru
      _
    // Predicated region
    $region30: #{archetypal_head_forward.4} parent=1 // pred_check
      _
    $region31: #{archetypal_head_forward.4} parent=1 // pred_check_branch
      %44 = sbr.rel (0) target = $region33
    $region32: #{archetypal_head_forward.4} parent=1 // pred_region
      _
    $region33: #{archetypal_head_forward.4} parent=1 // pred_fallthru
      _
    // Predicated region
    $region34: #{archetypal_head_forward.4} parent=1 // pred_check
      _
    $region35: #{archetypal_head_forward.4} parent=1 // pred_check_branch
      %46 = sbr.rel (0) target = $region37
    $region36: #{archetypal_head_forward.4} parent=1 // pred_region
      %s48 = ssub.s32 16384, 16384
      %49 = vsyncadd [#allocation5], %s48
      %s50 = sshll.u32 [#allocation4], 4
      %s51 = int_to_ptr.vmem [resolvable:$true] %s50
      %56 = dma.hbm_to_vmem [thread:$0]  %s8, 16384, %s51, [#allocation5], 256, 256, 16
    $region37: #{archetypal_head_forward.4} parent=1 // pred_fallthru
      _
    // Predicated region
    $region38: #{archetypal_head_forward.4} parent=1 // pred_check
      _
    $region39: #{archetypal_head_forward.4} parent=1 // pred_check_branch
      %58 = sbr.rel (0) target = $region41
    $region40: #{archetypal_head_forward.4} parent=1 // pred_region
      _
    $region41: #{archetypal_head_forward.4} parent=1 // pred_fallthru
      _
    // Predicated region
    $region42: #{archetypal_head_forward.4} parent=1 // pred_check
      _
    $region43: #{archetypal_head_forward.4} parent=1 // pred_check_branch
      %60 = sbr.rel (0) target = $region45
    $region44: #{archetypal_head_forward.4} parent=1 // pred_region
      %61 = dma.done [#allocation3], 16384
    $region45: #{archetypal_head_forward.4} parent=1 // pred_fallthru
      _
    // Predicated region
    $region46: #{archetypal_head_forward.4} parent=1 // pred_check
      _
    $region47: #{archetypal_head_forward.4} parent=1 // pred_check_branch
      %63 = sbr.rel (0) target = $region49
    $region48: #{archetypal_head_forward.4} parent=1 // pred_region
      %64 = dma.done [#allocation5], 16384
    $region49: #{archetypal_head_forward.4} parent=1 // pred_fallthru
      _
    %v66 = vld [vmem:[%s0] sm:$0xff]
    %v67 = vld [vmem:[%s0 + $0x8] sm:$0xff]
    %v68 = vld [vmem:[%s0 + $0x10] sm:$0xff]
    %v69 = vld [vmem:[%s0 + $0x18] sm:$0xff]
    %v70 = vld [vmem:[%s0 + $0x20] sm:$0xff]
    %v71 = vld [vmem:[%s0 + $0x28] sm:$0xff]
    %v72 = vld [vmem:[%s0 + $0x30] sm:$0xff]
    %v73 = vld [vmem:[%s0 + $0x38] sm:$0xff]
    %v74 = vld [vmem:[%s1] sm:$0xf]
    %v76 = vlaneseq
    %v77 = vshrl.u32 %v76, 7
    %v78 = vsub.s32 0, %v77
    %v79 = vrot.slane %v74, %v78
    %v80 = vlaneseq
    %v81 = vshrl.u32 %v80, 7
    %v82 = vsub.s32 1, %v81
    %v83 = vrot.slane %v74, %v82
    %v84 = vlaneseq
    %v85 = vshrl.u32 %v84, 7
    %v86 = vsub.s32 2, %v85
    %v87 = vrot.slane %v74, %v86
    %v88 = vlaneseq
    %v89 = vshrl.u32 %v88, 7
    %v90 = vsub.s32 3, %v89
    %v91 = vrot.slane %v74, %v90
    %v96 = vadd.f32 %v66, %v79
    %v97 = vadd.f32 %v67, %v83
    %v98 = vadd.f32 %v68, %v87
    %v99 = vadd.f32 %v69, %v91
    %v100 = vadd.f32 %v70, %v79
    %v101 = vadd.f32 %v71, %v83
    %v102 = vadd.f32 %v72, %v87
    %v103 = vadd.f32 %v73, %v91
    %v104 = vmax.f32 %v96, 0.0
    %v105 = vmax.f32 %v97, 0.0
    %v106 = vmax.f32 %v98, 0.0
    %v107 = vmax.f32 %v99, 0.0
    %v108 = vmax.f32 %v100, 0.0
    %v109 = vmax.f32 %v101, 0.0
    %v110 = vmax.f32 %v102, 0.0
    %v111 = vmax.f32 %v103, 0.0
    %v112 = vpack.c.bf16 %v108, %v104
    %v113 = vpack.c.bf16 %v109, %v105
    %v114 = vpack.c.bf16 %v110, %v106
    %v115 = vpack.c.bf16 %v111, %v107
    %v116 = vld [vmem:[#allocation2] sm:$0xff]
    %v117 = vld [vmem:[#allocation2 + $0x8] sm:$0xff]
    %v118 = vld [vmem:[#allocation2 + $0x10] sm:$0xff]
    %v119 = vld [vmem:[#allocation2 + $0x18] sm:$0xff]
    %v120 = vld [vmem:[#allocation2 + $0x20] sm:$0xff]
    %v121 = vld [vmem:[#allocation2 + $0x28] sm:$0xff]
    %v122 = vld [vmem:[#allocation2 + $0x30] sm:$0xff]
    %v123 = vld [vmem:[#allocation2 + $0x38] sm:$0xff]
    %v124 = vld [vmem:[#allocation2 + $0x40] sm:$0xff]
    %v125 = vld [vmem:[#allocation2 + $0x48] sm:$0xff]
    %v126 = vld [vmem:[#allocation2 + $0x50] sm:$0xff]
    %v127 = vld [vmem:[#allocation2 + $0x58] sm:$0xff]
    %v128 = vld [vmem:[#allocation2 + $0x60] sm:$0xff]
    %v129 = vld [vmem:[#allocation2 + $0x68] sm:$0xff]
    %v130 = vld [vmem:[#allocation2 + $0x70] sm:$0xff]
    %v131 = vld [vmem:[#allocation2 + $0x78] sm:$0xff]
    %v132 = vld [vmem:[#allocation2 + $0x80] sm:$0xff]
    %v133 = vld [vmem:[#allocation2 + $0x88] sm:$0xff]
    %v134 = vld [vmem:[#allocation2 + $0x90] sm:$0xff]
    %v135 = vld [vmem:[#allocation2 + $0x98] sm:$0xff]
    %v136 = vld [vmem:[#allocation2 + $0xa0] sm:$0xff]
    %v137 = vld [vmem:[#allocation2 + $0xa8] sm:$0xff]
    %v138 = vld [vmem:[#allocation2 + $0xb0] sm:$0xff]
    %v139 = vld [vmem:[#allocation2 + $0xb8] sm:$0xff]
    %v140 = vld [vmem:[#allocation2 + $0xc0] sm:$0xff]
    %v141 = vld [vmem:[#allocation2 + $0xc8] sm:$0xff]
    %v142 = vld [vmem:[#allocation2 + $0xd0] sm:$0xff]
    %v143 = vld [vmem:[#allocation2 + $0xd8] sm:$0xff]
    %v144 = vld [vmem:[#allocation2 + $0xe0] sm:$0xff]
    %v145 = vld [vmem:[#allocation2 + $0xe8] sm:$0xff]
    %v146 = vld [vmem:[#allocation2 + $0xf0] sm:$0xff]
    %v147 = vld [vmem:[#allocation2 + $0xf8] sm:$0xff]
    %v148 = vld [vmem:[#allocation2 + $0x100] sm:$0xff]
    %v149 = vld [vmem:[#allocation2 + $0x108] sm:$0xff]
    %v150 = vld [vmem:[#allocation2 + $0x110] sm:$0xff]
    %v151 = vld [vmem:[#allocation2 + $0x118] sm:$0xff]
    %v152 = vld [vmem:[#allocation2 + $0x120] sm:$0xff]
    %v153 = vld [vmem:[#allocation2 + $0x128] sm:$0xff]
    %v154 = vld [vmem:[#allocation2 + $0x130] sm:$0xff]
    %v155 = vld [vmem:[#allocation2 + $0x138] sm:$0xff]
    %v156 = vld [vmem:[#allocation2 + $0x140] sm:$0xff]
    %v157 = vld [vmem:[#allocation2 + $0x148] sm:$0xff]
    %v158 = vld [vmem:[#allocation2 + $0x150] sm:$0xff]
    %v159 = vld [vmem:[#allocation2 + $0x158] sm:$0xff]
    %v160 = vld [vmem:[#allocation2 + $0x160] sm:$0xff]
    %v161 = vld [vmem:[#allocation2 + $0x168] sm:$0xff]
    %v162 = vld [vmem:[#allocation2 + $0x170] sm:$0xff]
    %v163 = vld [vmem:[#allocation2 + $0x178] sm:$0xff]
    %v164 = vld [vmem:[#allocation2 + $0x180] sm:$0xff]
    %v165 = vld [vmem:[#allocation2 + $0x188] sm:$0xff]
    %v166 = vld [vmem:[#allocation2 + $0x190] sm:$0xff]
    %v167 = vld [vmem:[#allocation2 + $0x198] sm:$0xff]
    %v168 = vld [vmem:[#allocation2 + $0x1a0] sm:$0xff]
    %v169 = vld [vmem:[#allocation2 + $0x1a8] sm:$0xff]
    %v170 = vld [vmem:[#allocation2 + $0x1b0] sm:$0xff]
    %v171 = vld [vmem:[#allocation2 + $0x1b8] sm:$0xff]
    %v172 = vld [vmem:[#allocation2 + $0x1c0] sm:$0xff]
    %v173 = vld [vmem:[#allocation2 + $0x1c8] sm:$0xff]
    %v174 = vld [vmem:[#allocation2 + $0x1d0] sm:$0xff]
    %v175 = vld [vmem:[#allocation2 + $0x1d8] sm:$0xff]
    %v176 = vld [vmem:[#allocation2 + $0x1e0] sm:$0xff]
    %v177 = vld [vmem:[#allocation2 + $0x1e8] sm:$0xff]
    %v178 = vld [vmem:[#allocation2 + $0x1f0] sm:$0xff]
    %v179 = vld [vmem:[#allocation2 + $0x1f8] sm:$0xff]
    %v180 = vld [vmem:[#allocation2 + $0x200] sm:$0xff]
    %v181 = vld [vmem:[#allocation2 + $0x208] sm:$0xff]
    %v182 = vld [vmem:[#allocation2 + $0x210] sm:$0xff]
    %v183 = vld [vmem:[#allocation2 + $0x218] sm:$0xff]
    %v184 = vld [vmem:[#allocation2 + $0x220] sm:$0xff]
    %v185 = vld [vmem:[#allocation2 + $0x228] sm:$0xff]
    %v186 = vld [vmem:[#allocation2 + $0x230] sm:$0xff]
    %v187 = vld [vmem:[#allocation2 + $0x238] sm:$0xff]
    %v188 = vld [vmem:[#allocation2 + $0x240] sm:$0xff]
    %v189 = vld [vmem:[#allocation2 + $0x248] sm:$0xff]
    %v190 = vld [vmem:[#allocation2 + $0x250] sm:$0xff]
    %v191 = vld [vmem:[#allocation2 + $0x258] sm:$0xff]
    %v192 = vld [vmem:[#allocation2 + $0x260] sm:$0xff]
    %v193 = vld [vmem:[#allocation2 + $0x268] sm:$0xff]
    %v194 = vld [vmem:[#allocation2 + $0x270] sm:$0xff]
    %v195 = vld [vmem:[#allocation2 + $0x278] sm:$0xff]
    %v196 = vld [vmem:[#allocation2 + $0x280] sm:$0xff]
    %v197 = vld [vmem:[#allocation2 + $0x288] sm:$0xff]
    %v198 = vld [vmem:[#allocation2 + $0x290] sm:$0xff]
    %v199 = vld [vmem:[#allocation2 + $0x298] sm:$0xff]
    %v200 = vld [vmem:[#allocation2 + $0x2a0] sm:$0xff]
    %v201 = vld [vmem:[#allocation2 + $0x2a8] sm:$0xff]
    %v202 = vld [vmem:[#allocation2 + $0x2b0] sm:$0xff]
    %v203 = vld [vmem:[#allocation2 + $0x2b8] sm:$0xff]
    %v204 = vld [vmem:[#allocation2 + $0x2c0] sm:$0xff]
    %v205 = vld [vmem:[#allocation2 + $0x2c8] sm:$0xff]
    %v206 = vld [vmem:[#allocation2 + $0x2d0] sm:$0xff]
    %v207 = vld [vmem:[#allocation2 + $0x2d8] sm:$0xff]
    %v208 = vld [vmem:[#allocation2 + $0x2e0] sm:$0xff]
    %v209 = vld [vmem:[#allocation2 + $0x2e8] sm:$0xff]
    %v210 = vld [vmem:[#allocation2 + $0x2f0] sm:$0xff]
    %v211 = vld [vmem:[#allocation2 + $0x2f8] sm:$0xff]
    %v212 = vld [vmem:[#allocation2 + $0x300] sm:$0xff]
    %v213 = vld [vmem:[#allocation2 + $0x308] sm:$0xff]
    %v214 = vld [vmem:[#allocation2 + $0x310] sm:$0xff]
    %v215 = vld [vmem:[#allocation2 + $0x318] sm:$0xff]
    %v216 = vld [vmem:[#allocation2 + $0x320] sm:$0xff]
    %v217 = vld [vmem:[#allocation2 + $0x328] sm:$0xff]
    %v218 = vld [vmem:[#allocation2 + $0x330] sm:$0xff]
    %v219 = vld [vmem:[#allocation2 + $0x338] sm:$0xff]
    %v220 = vld [vmem:[#allocation2 + $0x340] sm:$0xff]
    %v221 = vld [vmem:[#allocation2 + $0x348] sm:$0xff]
    %v222 = vld [vmem:[#allocation2 + $0x350] sm:$0xff]
    %v223 = vld [vmem:[#allocation2 + $0x358] sm:$0xff]
    %v224 = vld [vmem:[#allocation2 + $0x360] sm:$0xff]
    %v225 = vld [vmem:[#allocation2 + $0x368] sm:$0xff]
    %v226 = vld [vmem:[#allocation2 + $0x370] sm:$0xff]
    %v227 = vld [vmem:[#allocation2 + $0x378] sm:$0xff]
    %v228 = vld [vmem:[#allocation2 + $0x380] sm:$0xff]
    %v229 = vld [vmem:[#allocation2 + $0x388] sm:$0xff]
    %v230 = vld [vmem:[#allocation2 + $0x390] sm:$0xff]
    %v231 = vld [vmem:[#allocation2 + $0x398] sm:$0xff]
    %v232 = vld [vmem:[#allocation2 + $0x3a0] sm:$0xff]
    %v233 = vld [vmem:[#allocation2 + $0x3a8] sm:$0xff]
    %v234 = vld [vmem:[#allocation2 + $0x3b0] sm:$0xff]
    %v235 = vld [vmem:[#allocation2 + $0x3b8] sm:$0xff]
    %v236 = vld [vmem:[#allocation2 + $0x3c0] sm:$0xff]
    %v237 = vld [vmem:[#allocation2 + $0x3c8] sm:$0xff]
    %v238 = vld [vmem:[#allocation2 + $0x3d0] sm:$0xff]
    %v239 = vld [vmem:[#allocation2 + $0x3d8] sm:$0xff]
    %v240 = vld [vmem:[#allocation2 + $0x3e0] sm:$0xff]
    %v241 = vld [vmem:[#allocation2 + $0x3e8] sm:$0xff]
    %v242 = vld [vmem:[#allocation2 + $0x3f0] sm:$0xff]
    %v243 = vld [vmem:[#allocation2 + $0x3f8] sm:$0xff]
    %v244 = vld [vmem:[%s3] sm:$0xf]
    %v246 = vlaneseq
    %v247 = vshrl.u32 %v246, 7
    %v248 = vsub.s32 0, %v247
    %v249 = vrot.slane %v244, %v248
    %v250 = vlaneseq
    %v251 = vshrl.u32 %v250, 7
    %v252 = vsub.s32 1, %v251
    %v253 = vrot.slane %v244, %v252
    %v254 = vlaneseq
    %v255 = vshrl.u32 %v254, 7
    %v256 = vsub.s32 2, %v255
    %v257 = vrot.slane %v244, %v256
    %v258 = vlaneseq
    %v259 = vshrl.u32 %v258, 7
    %v260 = vsub.s32 3, %v259
    %v261 = vrot.slane %v244, %v260
    %v394 = vunpack.c.l.b16 %v116
    %v395 = vunpack.c.h.b16 %v116
    %v396 = vunpack.c.l.b16 %v117
    %v397 = vunpack.c.h.b16 %v117
    %v398 = vunpack.c.l.b16 %v118
    %v399 = vunpack.c.h.b16 %v118
    %v400 = vunpack.c.l.b16 %v119
    %v401 = vunpack.c.h.b16 %v119
    %v402 = vunpack.c.l.b16 %v120
    %v403 = vunpack.c.h.b16 %v120
    %v404 = vunpack.c.l.b16 %v121
    %v405 = vunpack.c.h.b16 %v121
    %v406 = vunpack.c.l.b16 %v122
    %v407 = vunpack.c.h.b16 %v122
    %v408 = vunpack.c.l.b16 %v123
    %v409 = vunpack.c.h.b16 %v123
    %v410 = vunpack.c.l.b16 %v124
    %v411 = vunpack.c.h.b16 %v124
    %v412 = vunpack.c.l.b16 %v125
    %v413 = vunpack.c.h.b16 %v125
    %v414 = vunpack.c.l.b16 %v126
    %v415 = vunpack.c.h.b16 %v126
    %v416 = vunpack.c.l.b16 %v127
    %v417 = vunpack.c.h.b16 %v127
    %v418 = vunpack.c.l.b16 %v128
    %v419 = vunpack.c.h.b16 %v128
    %v420 = vunpack.c.l.b16 %v129
    %v421 = vunpack.c.h.b16 %v129
    %v422 = vunpack.c.l.b16 %v130
    %v423 = vunpack.c.h.b16 %v130
    %v424 = vunpack.c.l.b16 %v131
    %v425 = vunpack.c.h.b16 %v131
    %v426 = vunpack.c.l.b16 %v132
    %v427 = vunpack.c.h.b16 %v132
    %v428 = vunpack.c.l.b16 %v133
    %v429 = vunpack.c.h.b16 %v133
    %v430 = vunpack.c.l.b16 %v134
    %v431 = vunpack.c.h.b16 %v134
    %v432 = vunpack.c.l.b16 %v135
    %v433 = vunpack.c.h.b16 %v135
    %v434 = vunpack.c.l.b16 %v136
    %v435 = vunpack.c.h.b16 %v136
    %v436 = vunpack.c.l.b16 %v137
    %v437 = vunpack.c.h.b16 %v137
    %v438 = vunpack.c.l.b16 %v138
    %v439 = vunpack.c.h.b16 %v138
    %v440 = vunpack.c.l.b16 %v139
    %v441 = vunpack.c.h.b16 %v139
    %v442 = vunpack.c.l.b16 %v140
    %v443 = vunpack.c.h.b16 %v140
    %v444 = vunpack.c.l.b16 %v141
    %v445 = vunpack.c.h.b16 %v141
    %v446 = vunpack.c.l.b16 %v142
    %v447 = vunpack.c.h.b16 %v142
    %v448 = vunpack.c.l.b16 %v143
    %v449 = vunpack.c.h.b16 %v143
    %v450 = vunpack.c.l.b16 %v144
    %v451 = vunpack.c.h.b16 %v144
    %v452 = vunpack.c.l.b16 %v145
    %v453 = vunpack.c.h.b16 %v145
    %v454 = vunpack.c.l.b16 %v146
    %v455 = vunpack.c.h.b16 %v146
    %v456 = vunpack.c.l.b16 %v147
    %v457 = vunpack.c.h.b16 %v147
    %v458 = vunpack.c.l.b16 %v148
    %v459 = vunpack.c.h.b16 %v148
    %v460 = vunpack.c.l.b16 %v149
    %v461 = vunpack.c.h.b16 %v149
    %v462 = vunpack.c.l.b16 %v150
    %v463 = vunpack.c.h.b16 %v150
    %v464 = vunpack.c.l.b16 %v151
    %v465 = vunpack.c.h.b16 %v151
    %v466 = vunpack.c.l.b16 %v152
    %v467 = vunpack.c.h.b16 %v152
    %v468 = vunpack.c.l.b16 %v153
    %v469 = vunpack.c.h.b16 %v153
    %v470 = vunpack.c.l.b16 %v154
    %v471 = vunpack.c.h.b16 %v154
    %v472 = vunpack.c.l.b16 %v155
    %v473 = vunpack.c.h.b16 %v155
    %v474 = vunpack.c.l.b16 %v156
    %v475 = vunpack.c.h.b16 %v156
    %v476 = vunpack.c.l.b16 %v157
    %v477 = vunpack.c.h.b16 %v157
    %v478 = vunpack.c.l.b16 %v158
    %v479 = vunpack.c.h.b16 %v158
    %v480 = vunpack.c.l.b16 %v159
    %v481 = vunpack.c.h.b16 %v159
    %v482 = vunpack.c.l.b16 %v160
    %v483 = vunpack.c.h.b16 %v160
    %v484 = vunpack.c.l.b16 %v161
    %v485 = vunpack.c.h.b16 %v161
    %v486 = vunpack.c.l.b16 %v162
    %v487 = vunpack.c.h.b16 %v162
    %v488 = vunpack.c.l.b16 %v163
    %v489 = vunpack.c.h.b16 %v163
    %v490 = vunpack.c.l.b16 %v164
    %v491 = vunpack.c.h.b16 %v164
    %v492 = vunpack.c.l.b16 %v165
    %v493 = vunpack.c.h.b16 %v165
    %v494 = vunpack.c.l.b16 %v166
    %v495 = vunpack.c.h.b16 %v166
    %v496 = vunpack.c.l.b16 %v167
    %v497 = vunpack.c.h.b16 %v167
    %v498 = vunpack.c.l.b16 %v168
    %v499 = vunpack.c.h.b16 %v168
    %v500 = vunpack.c.l.b16 %v169
    %v501 = vunpack.c.h.b16 %v169
    %v502 = vunpack.c.l.b16 %v170
    %v503 = vunpack.c.h.b16 %v170
    %v504 = vunpack.c.l.b16 %v171
    %v505 = vunpack.c.h.b16 %v171
    %v506 = vunpack.c.l.b16 %v172
    %v507 = vunpack.c.h.b16 %v172
    %v508 = vunpack.c.l.b16 %v173
    %v509 = vunpack.c.h.b16 %v173
    %v510 = vunpack.c.l.b16 %v174
    %v511 = vunpack.c.h.b16 %v174
    %v512 = vunpack.c.l.b16 %v175
    %v513 = vunpack.c.h.b16 %v175
    %v514 = vunpack.c.l.b16 %v176
    %v515 = vunpack.c.h.b16 %v176
    %v516 = vunpack.c.l.b16 %v177
    %v517 = vunpack.c.h.b16 %v177
    %v518 = vunpack.c.l.b16 %v178
    %v519 = vunpack.c.h.b16 %v178
    %v520 = vunpack.c.l.b16 %v179
    %v521 = vunpack.c.h.b16 %v179
    %v522 = vunpack.c.l.b16 %v180
    %v523 = vunpack.c.h.b16 %v180
    %v524 = vunpack.c.l.b16 %v181
    %v525 = vunpack.c.h.b16 %v181
    %v526 = vunpack.c.l.b16 %v182
    %v527 = vunpack.c.h.b16 %v182
    %v528 = vunpack.c.l.b16 %v183
    %v529 = vunpack.c.h.b16 %v183
    %v530 = vunpack.c.l.b16 %v184
    %v531 = vunpack.c.h.b16 %v184
    %v532 = vunpack.c.l.b16 %v185
    %v533 = vunpack.c.h.b16 %v185
    %v534 = vunpack.c.l.b16 %v186
    %v535 = vunpack.c.h.b16 %v186
    %v536 = vunpack.c.l.b16 %v187
    %v537 = vunpack.c.h.b16 %v187
    %v538 = vunpack.c.l.b16 %v188
    %v539 = vunpack.c.h.b16 %v188
    %v540 = vunpack.c.l.b16 %v189
    %v541 = vunpack.c.h.b16 %v189
    %v542 = vunpack.c.l.b16 %v190
    %v543 = vunpack.c.h.b16 %v190
    %v544 = vunpack.c.l.b16 %v191
    %v545 = vunpack.c.h.b16 %v191
    %v546 = vunpack.c.l.b16 %v192
    %v547 = vunpack.c.h.b16 %v192
    %v548 = vunpack.c.l.b16 %v193
    %v549 = vunpack.c.h.b16 %v193
    %v550 = vunpack.c.l.b16 %v194
    %v551 = vunpack.c.h.b16 %v194
    %v552 = vunpack.c.l.b16 %v195
    %v553 = vunpack.c.h.b16 %v195
    %v554 = vunpack.c.l.b16 %v196
    %v555 = vunpack.c.h.b16 %v196
    %v556 = vunpack.c.l.b16 %v197
    %v557 = vunpack.c.h.b16 %v197
    %v558 = vunpack.c.l.b16 %v198
    %v559 = vunpack.c.h.b16 %v198
    %v560 = vunpack.c.l.b16 %v199
    %v561 = vunpack.c.h.b16 %v199
    %v562 = vunpack.c.l.b16 %v200
    %v563 = vunpack.c.h.b16 %v200
    %v564 = vunpack.c.l.b16 %v201
    %v565 = vunpack.c.h.b16 %v201
    %v566 = vunpack.c.l.b16 %v202
    %v567 = vunpack.c.h.b16 %v202
    %v568 = vunpack.c.l.b16 %v203
    %v569 = vunpack.c.h.b16 %v203
    %v570 = vunpack.c.l.b16 %v204
    %v571 = vunpack.c.h.b16 %v204
    %v572 = vunpack.c.l.b16 %v205
    %v573 = vunpack.c.h.b16 %v205
    %v574 = vunpack.c.l.b16 %v206
    %v575 = vunpack.c.h.b16 %v206
    %v576 = vunpack.c.l.b16 %v207
    %v577 = vunpack.c.h.b16 %v207
    %v578 = vunpack.c.l.b16 %v208
    %v579 = vunpack.c.h.b16 %v208
    %v580 = vunpack.c.l.b16 %v209
    %v581 = vunpack.c.h.b16 %v209
    %v582 = vunpack.c.l.b16 %v210
    %v583 = vunpack.c.h.b16 %v210
    %v584 = vunpack.c.l.b16 %v211
    %v585 = vunpack.c.h.b16 %v211
    %v586 = vunpack.c.l.b16 %v212
    %v587 = vunpack.c.h.b16 %v212
    %v588 = vunpack.c.l.b16 %v213
    %v589 = vunpack.c.h.b16 %v213
    %v590 = vunpack.c.l.b16 %v214
    %v591 = vunpack.c.h.b16 %v214
    %v592 = vunpack.c.l.b16 %v215
    %v593 = vunpack.c.h.b16 %v215
    %v594 = vunpack.c.l.b16 %v216
    %v595 = vunpack.c.h.b16 %v216
    %v596 = vunpack.c.l.b16 %v217
    %v597 = vunpack.c.h.b16 %v217
    %v598 = vunpack.c.l.b16 %v218
    %v599 = vunpack.c.h.b16 %v218
    %v600 = vunpack.c.l.b16 %v219
    %v601 = vunpack.c.h.b16 %v219
    %v602 = vunpack.c.l.b16 %v220
    %v603 = vunpack.c.h.b16 %v220
    %v604 = vunpack.c.l.b16 %v221
    %v605 = vunpack.c.h.b16 %v221
    %v606 = vunpack.c.l.b16 %v222
    %v607 = vunpack.c.h.b16 %v222
    %v608 = vunpack.c.l.b16 %v223
    %v609 = vunpack.c.h.b16 %v223
    %v610 = vunpack.c.l.b16 %v224
    %v611 = vunpack.c.h.b16 %v224
    %v612 = vunpack.c.l.b16 %v225
    %v613 = vunpack.c.h.b16 %v225
    %v614 = vunpack.c.l.b16 %v226
    %v615 = vunpack.c.h.b16 %v226
    %v616 = vunpack.c.l.b16 %v227
    %v617 = vunpack.c.h.b16 %v227
    %v618 = vunpack.c.l.b16 %v228
    %v619 = vunpack.c.h.b16 %v228
    %v620 = vunpack.c.l.b16 %v229
    %v621 = vunpack.c.h.b16 %v229
    %v622 = vunpack.c.l.b16 %v230
    %v623 = vunpack.c.h.b16 %v230
    %v624 = vunpack.c.l.b16 %v231
    %v625 = vunpack.c.h.b16 %v231
    %v626 = vunpack.c.l.b16 %v232
    %v627 = vunpack.c.h.b16 %v232
    %v628 = vunpack.c.l.b16 %v233
    %v629 = vunpack.c.h.b16 %v233
    %v630 = vunpack.c.l.b16 %v234
    %v631 = vunpack.c.h.b16 %v234
    %v632 = vunpack.c.l.b16 %v235
    %v633 = vunpack.c.h.b16 %v235
    %v634 = vunpack.c.l.b16 %v236
    %v635 = vunpack.c.h.b16 %v236
    %v636 = vunpack.c.l.b16 %v237
    %v637 = vunpack.c.h.b16 %v237
    %v638 = vunpack.c.l.b16 %v238
    %v639 = vunpack.c.h.b16 %v238
    %v640 = vunpack.c.l.b16 %v239
    %v641 = vunpack.c.h.b16 %v239
    %v642 = vunpack.c.l.b16 %v240
    %v643 = vunpack.c.h.b16 %v240
    %v644 = vunpack.c.l.b16 %v241
    %v645 = vunpack.c.h.b16 %v241
    %v646 = vunpack.c.l.b16 %v242
    %v647 = vunpack.c.h.b16 %v242
    %v648 = vunpack.c.l.b16 %v243
    %v649 = vunpack.c.h.b16 %v243
    %v650 = vpack.c.b16 %v398, %v394
    %v651 = vpack.c.b16 %v399, %v395
    %v652 = vpack.c.b16 %v400, %v396
    %v653 = vpack.c.b16 %v401, %v397
    %v654 = vpack.c.b16 %v406, %v402
    %v655 = vpack.c.b16 %v407, %v403
    %v656 = vpack.c.b16 %v408, %v404
    %v657 = vpack.c.b16 %v409, %v405
    %v658 = vpack.c.b16 %v414, %v410
    %v659 = vpack.c.b16 %v415, %v411
    %v660 = vpack.c.b16 %v416, %v412
    %v661 = vpack.c.b16 %v417, %v413
    %v662 = vpack.c.b16 %v422, %v418
    %v663 = vpack.c.b16 %v423, %v419
    %v664 = vpack.c.b16 %v424, %v420
    %v665 = vpack.c.b16 %v425, %v421
    %v666 = vpack.c.b16 %v430, %v426
    %v667 = vpack.c.b16 %v431, %v427
    %v668 = vpack.c.b16 %v432, %v428
    %v669 = vpack.c.b16 %v433, %v429
    %v670 = vpack.c.b16 %v438, %v434
    %v671 = vpack.c.b16 %v439, %v435
    %v672 = vpack.c.b16 %v440, %v436
    %v673 = vpack.c.b16 %v441, %v437
    %v674 = vpack.c.b16 %v446, %v442
    %v675 = vpack.c.b16 %v447, %v443
    %v676 = vpack.c.b16 %v448, %v444
    %v677 = vpack.c.b16 %v449, %v445
    %v678 = vpack.c.b16 %v454, %v450
    %v679 = vpack.c.b16 %v455, %v451
    %v680 = vpack.c.b16 %v456, %v452
    %v681 = vpack.c.b16 %v457, %v453
    %v682 = vpack.c.b16 %v462, %v458
    %v683 = vpack.c.b16 %v463, %v459
    %v684 = vpack.c.b16 %v464, %v460
    %v685 = vpack.c.b16 %v465, %v461
    %v686 = vpack.c.b16 %v470, %v466
    %v687 = vpack.c.b16 %v471, %v467
    %v688 = vpack.c.b16 %v472, %v468
    %v689 = vpack.c.b16 %v473, %v469
    %v690 = vpack.c.b16 %v478, %v474
    %v691 = vpack.c.b16 %v479, %v475
    %v692 = vpack.c.b16 %v480, %v476
    %v693 = vpack.c.b16 %v481, %v477
    %v694 = vpack.c.b16 %v486, %v482
    %v695 = vpack.c.b16 %v487, %v483
    %v696 = vpack.c.b16 %v488, %v484
    %v697 = vpack.c.b16 %v489, %v485
    %v698 = vpack.c.b16 %v494, %v490
    %v699 = vpack.c.b16 %v495, %v491
    %v700 = vpack.c.b16 %v496, %v492
    %v701 = vpack.c.b16 %v497, %v493
    %v702 = vpack.c.b16 %v502, %v498
    %v703 = vpack.c.b16 %v503, %v499
    %v704 = vpack.c.b16 %v504, %v500
    %v705 = vpack.c.b16 %v505, %v501
    %v706 = vpack.c.b16 %v510, %v506
    %v707 = vpack.c.b16 %v511, %v507
    %v708 = vpack.c.b16 %v512, %v508
    %v709 = vpack.c.b16 %v513, %v509
    %v710 = vpack.c.b16 %v518, %v514
    %v711 = vpack.c.b16 %v519, %v515
    %v712 = vpack.c.b16 %v520, %v516
    %v713 = vpack.c.b16 %v521, %v517
    %v714 = vpack.c.b16 %v526, %v522
    %v715 = vpack.c.b16 %v527, %v523
    %v716 = vpack.c.b16 %v528, %v524
    %v717 = vpack.c.b16 %v529, %v525
    %v718 = vpack.c.b16 %v534, %v530
    %v719 = vpack.c.b16 %v535, %v531
    %v720 = vpack.c.b16 %v536, %v532
    %v721 = vpack.c.b16 %v537, %v533
    %v722 = vpack.c.b16 %v542, %v538
    %v723 = vpack.c.b16 %v543, %v539
    %v724 = vpack.c.b16 %v544, %v540
    %v725 = vpack.c.b16 %v545, %v541
    %v726 = vpack.c.b16 %v550, %v546
    %v727 = vpack.c.b16 %v551, %v547
    %v728 = vpack.c.b16 %v552, %v548
    %v729 = vpack.c.b16 %v553, %v549
    %v730 = vpack.c.b16 %v558, %v554
    %v731 = vpack.c.b16 %v559, %v555
    %v732 = vpack.c.b16 %v560, %v556
    %v733 = vpack.c.b16 %v561, %v557
    %v734 = vpack.c.b16 %v566, %v562
    %v735 = vpack.c.b16 %v567, %v563
    %v736 = vpack.c.b16 %v568, %v564
    %v737 = vpack.c.b16 %v569, %v565
    %v738 = vpack.c.b16 %v574, %v570
    %v739 = vpack.c.b16 %v575, %v571
    %v740 = vpack.c.b16 %v576, %v572
    %v741 = vpack.c.b16 %v577, %v573
    %v742 = vpack.c.b16 %v582, %v578
    %v743 = vpack.c.b16 %v583, %v579
    %v744 = vpack.c.b16 %v584, %v580
    %v745 = vpack.c.b16 %v585, %v581
    %v746 = vpack.c.b16 %v590, %v586
    %v747 = vpack.c.b16 %v591, %v587
    %v748 = vpack.c.b16 %v592, %v588
    %v749 = vpack.c.b16 %v593, %v589
    %v750 = vpack.c.b16 %v598, %v594
    %v751 = vpack.c.b16 %v599, %v595
    %v752 = vpack.c.b16 %v600, %v596
    %v753 = vpack.c.b16 %v601, %v597
    %v754 = vpack.c.b16 %v606, %v602
    %v755 = vpack.c.b16 %v607, %v603
    %v756 = vpack.c.b16 %v608, %v604
    %v757 = vpack.c.b16 %v609, %v605
    %v758 = vpack.c.b16 %v614, %v610
    %v759 = vpack.c.b16 %v615, %v611
    %v760 = vpack.c.b16 %v616, %v612
    %v761 = vpack.c.b16 %v617, %v613
    %v762 = vpack.c.b16 %v622, %v618
    %v763 = vpack.c.b16 %v623, %v619
    %v764 = vpack.c.b16 %v624, %v620
    %v765 = vpack.c.b16 %v625, %v621
    %v766 = vpack.c.b16 %v630, %v626
    %v767 = vpack.c.b16 %v631, %v627
    %v768 = vpack.c.b16 %v632, %v628
    %v769 = vpack.c.b16 %v633, %v629
    %v770 = vpack.c.b16 %v638, %v634
    %v771 = vpack.c.b16 %v639, %v635
    %v772 = vpack.c.b16 %v640, %v636
    %v773 = vpack.c.b16 %v641, %v637
    %v774 = vpack.c.b16 %v646, %v642
    %v775 = vpack.c.b16 %v647, %v643
    %v776 = vpack.c.b16 %v648, %v644
    %v777 = vpack.c.b16 %v649, %v645
    %906 = vmatprep.subr.bf16.mxu0 %v651
    %907 = vmatpush1.bf16.msra.mxu0 %v650
    %908 = vmatprep.subr.bf16.mxu0 %v655
    %909 = vmatpush1.bf16.msra.mxu0 %v654
    %910 = vmatprep.subr.bf16.mxu0 %v659
    %911 = vmatpush1.bf16.msra.mxu0 %v658
    %912 = vmatprep.subr.bf16.mxu0 %v663
    %913 = vmatpush1.bf16.msra.mxu0 %v662
    %914 = vmatprep.subr.bf16.mxu0 %v667
    %915 = vmatpush1.bf16.msra.mxu0 %v666
    %916 = vmatprep.subr.bf16.mxu0 %v671
    %917 = vmatpush1.bf16.msra.mxu0 %v670
    %918 = vmatprep.subr.bf16.mxu0 %v675
    %919 = vmatpush1.bf16.msra.mxu0 %v674
    %920 = vmatprep.subr.bf16.mxu0 %v679
    %921 = vmatpush1.bf16.msra.mxu0 %v678
    %922 = vmatprep.subr.bf16.mxu0 %v683
    %923 = vmatpush1.bf16.msra.mxu0 %v682
    %924 = vmatprep.subr.bf16.mxu0 %v687
    %925 = vmatpush1.bf16.msra.mxu0 %v686
    %926 = vmatprep.subr.bf16.mxu0 %v691
    %927 = vmatpush1.bf16.msra.mxu0 %v690
    %928 = vmatprep.subr.bf16.mxu0 %v695
    %929 = vmatpush1.bf16.msra.mxu0 %v694
    %930 = vmatprep.subr.bf16.mxu0 %v699
    %931 = vmatpush1.bf16.msra.mxu0 %v698
    %932 = vmatprep.subr.bf16.mxu0 %v703
    %933 = vmatpush1.bf16.msra.mxu0 %v702
    %934 = vmatprep.subr.bf16.mxu0 %v707
    %935 = vmatpush1.bf16.msra.mxu0 %v706
    %936 = vmatprep.subr.bf16.mxu0 %v711
    %937 = vmatpush1.bf16.msra.mxu0 %v710
    %938 = vmatprep.mubr.bf16.mxu0 %v113
    %939 = vmatmul.mubr.bf16.gmra.mrb[0].mxu0 %v112
    %v940 = vpop.f32.mrb[0].mxu0
    %v941 = vadd.f32 %v249, %v940
    %v942 = vpop.f32.mrb[0].mxu0
    %v943 = vadd.f32 %v253, %v942
    %v944 = vpop.f32.mrb[0].mxu0
    %v945 = vadd.f32 %v249, %v944
    %v946 = vpop.f32.mrb[0].mxu0
    %v947 = vadd.f32 %v253, %v946
    %948 = vdwg.mxu0
    %949 = vmatprep.subr.bf16.mxu0 %v715
    %950 = vmatpush1.bf16.msra.mxu0 %v714
    %951 = vmatprep.subr.bf16.mxu0 %v719
    %952 = vmatpush1.bf16.msra.mxu0 %v718
    %953 = vmatprep.subr.bf16.mxu0 %v723
    %954 = vmatpush1.bf16.msra.mxu0 %v722
    %955 = vmatprep.subr.bf16.mxu0 %v727
    %956 = vmatpush1.bf16.msra.mxu0 %v726
    %957 = vmatprep.subr.bf16.mxu0 %v731
    %958 = vmatpush1.bf16.msra.mxu0 %v730
    %959 = vmatprep.subr.bf16.mxu0 %v735
    %960 = vmatpush1.bf16.msra.mxu0 %v734
    %961 = vmatprep.subr.bf16.mxu0 %v739
    %962 = vmatpush1.bf16.msra.mxu0 %v738
    %963 = vmatprep.subr.bf16.mxu0 %v743
    %964 = vmatpush1.bf16.msra.mxu0 %v742
    %965 = vmatprep.subr.bf16.mxu0 %v747
    %966 = vmatpush1.bf16.msra.mxu0 %v746
    %967 = vmatprep.subr.bf16.mxu0 %v751
    %968 = vmatpush1.bf16.msra.mxu0 %v750
    %969 = vmatprep.subr.bf16.mxu0 %v755
    %970 = vmatpush1.bf16.msra.mxu0 %v754
    %971 = vmatprep.subr.bf16.mxu0 %v759
    %972 = vmatpush1.bf16.msra.mxu0 %v758
    %973 = vmatprep.subr.bf16.mxu0 %v763
    %974 = vmatpush1.bf16.msra.mxu0 %v762
    %975 = vmatprep.subr.bf16.mxu0 %v767
    %976 = vmatpush1.bf16.msra.mxu0 %v766
    %977 = vmatprep.subr.bf16.mxu0 %v771
    %978 = vmatpush1.bf16.msra.mxu0 %v770
    %979 = vmatprep.subr.bf16.mxu0 %v775
    %980 = vmatpush1.bf16.msra.mxu0 %v774
    %981 = vmatprep.mubr.bf16.mxu0 %v115
    %982 = vmatmul.mubr.bf16.gmra.mrb[0].mxu0 %v114
    %v983 = vpop.f32.mrb[0].mxu0
    %v984 = vadd.f32 %v941, %v983
    %v985 = vpop.f32.mrb[0].mxu0
    %v986 = vadd.f32 %v943, %v985
    %v987 = vpop.f32.mrb[0].mxu0
    %v988 = vadd.f32 %v945, %v987
    %v989 = vpop.f32.mrb[0].mxu0
    %v990 = vadd.f32 %v947, %v989
    %991 = vdwg.mxu0
    %992 = vmatprep.subr.bf16.mxu0 %v653
    %993 = vmatpush1.bf16.msra.mxu0 %v652
    %994 = vmatprep.subr.bf16.mxu0 %v657
    %995 = vmatpush1.bf16.msra.mxu0 %v656
    %996 = vmatprep.subr.bf16.mxu0 %v661
    %997 = vmatpush1.bf16.msra.mxu0 %v660
    %998 = vmatprep.subr.bf16.mxu0 %v665
    %999 = vmatpush1.bf16.msra.mxu0 %v664
    %1000 = vmatprep.subr.bf16.mxu0 %v669
    %1001 = vmatpush1.bf16.msra.mxu0 %v668
    %1002 = vmatprep.subr.bf16.mxu0 %v673
    %1003 = vmatpush1.bf16.msra.mxu0 %v672
    %1004 = vmatprep.subr.bf16.mxu0 %v677
    %1005 = vmatpush1.bf16.msra.mxu0 %v676
    %1006 = vmatprep.subr.bf16.mxu0 %v681
    %1007 = vmatpush1.bf16.msra.mxu0 %v680
    %1008 = vmatprep.subr.bf16.mxu0 %v685
    %1009 = vmatpush1.bf16.msra.mxu0 %v684
    %1010 = vmatprep.subr.bf16.mxu0 %v689
    %1011 = vmatpush1.bf16.msra.mxu0 %v688
    %1012 = vmatprep.subr.bf16.mxu0 %v693
    %1013 = vmatpush1.bf16.msra.mxu0 %v692
    %1014 = vmatprep.subr.bf16.mxu0 %v697
    %1015 = vmatpush1.bf16.msra.mxu0 %v696
    %1016 = vmatprep.subr.bf16.mxu0 %v701
    %1017 = vmatpush1.bf16.msra.mxu0 %v700
    %1018 = vmatprep.subr.bf16.mxu0 %v705
    %1019 = vmatpush1.bf16.msra.mxu0 %v704
    %1020 = vmatprep.subr.bf16.mxu0 %v709
    %1021 = vmatpush1.bf16.msra.mxu0 %v708
    %1022 = vmatprep.subr.bf16.mxu0 %v713
    %1023 = vmatpush1.bf16.msra.mxu0 %v712
    %1024 = vmatprep.mubr.bf16.mxu0 %v113
    %1025 = vmatmul.mubr.bf16.gmra.mrb[0].mxu0 %v112
    %v1026 = vpop.f32.mrb[0].mxu0
    %v1027 = vadd.f32 %v257, %v1026
    %v1028 = vpop.f32.mrb[0].mxu0
    %v1029 = vadd.f32 %v261, %v1028
    %v1030 = vpop.f32.mrb[0].mxu0
    %v1031 = vadd.f32 %v257, %v1030
    %v1032 = vpop.f32.mrb[0].mxu0
    %v1033 = vadd.f32 %v261, %v1032
    %1034 = vdwg.mxu0
    %1035 = vmatprep.subr.bf16.mxu0 %v717
    %1036 = vmatpush1.bf16.msra.mxu0 %v716
    %1037 = vmatprep.subr.bf16.mxu0 %v721
    %1038 = vmatpush1.bf16.msra.mxu0 %v720
    %1039 = vmatprep.subr.bf16.mxu0 %v725
    %1040 = vmatpush1.bf16.msra.mxu0 %v724
    %1041 = vmatprep.subr.bf16.mxu0 %v729
    %1042 = vmatpush1.bf16.msra.mxu0 %v728
    %1043 = vmatprep.subr.bf16.mxu0 %v733
    %1044 = vmatpush1.bf16.msra.mxu0 %v732
    %1045 = vmatprep.subr.bf16.mxu0 %v737
    %1046 = vmatpush1.bf16.msra.mxu0 %v736
    %1047 = vmatprep.subr.bf16.mxu0 %v741
    %1048 = vmatpush1.bf16.msra.mxu0 %v740
    %1049 = vmatprep.subr.bf16.mxu0 %v745
    %1050 = vmatpush1.bf16.msra.mxu0 %v744
    %1051 = vmatprep.subr.bf16.mxu0 %v749
    %1052 = vmatpush1.bf16.msra.mxu0 %v748
    %1053 = vmatprep.subr.bf16.mxu0 %v753
    %1054 = vmatpush1.bf16.msra.mxu0 %v752
    %1055 = vmatprep.subr.bf16.mxu0 %v757
    %1056 = vmatpush1.bf16.msra.mxu0 %v756
    %1057 = vmatprep.subr.bf16.mxu0 %v761
    %1058 = vmatpush1.bf16.msra.mxu0 %v760
    %1059 = vmatprep.subr.bf16.mxu0 %v765
    %1060 = vmatpush1.bf16.msra.mxu0 %v764
    %1061 = vmatprep.subr.bf16.mxu0 %v769
    %1062 = vmatpush1.bf16.msra.mxu0 %v768
    %1063 = vmatprep.subr.bf16.mxu0 %v773
    %1064 = vmatpush1.bf16.msra.mxu0 %v772
    %1065 = vmatprep.subr.bf16.mxu0 %v777
    %1066 = vmatpush1.bf16.msra.mxu0 %v776
    %1067 = vmatprep.mubr.bf16.mxu0 %v115
    %1068 = vmatmul.mubr.bf16.gmra.mrb[0].mxu0 %v114
    %v1069 = vpop.f32.mrb[0].mxu0
    %v1070 = vadd.f32 %v1027, %v1069
    %v1071 = vpop.f32.mrb[0].mxu0
    %v1072 = vadd.f32 %v1029, %v1071
    %v1073 = vpop.f32.mrb[0].mxu0
    %v1074 = vadd.f32 %v1031, %v1073
    %v1075 = vpop.f32.mrb[0].mxu0
    %v1076 = vadd.f32 %v1033, %v1075
    %1077 = vdwg.mxu0
    %v1078 = vmax.f32 %v984, 0.0
    %v1079 = vmax.f32 %v986, 0.0
    %v1080 = vmax.f32 %v1070, 0.0
    %v1081 = vmax.f32 %v1072, 0.0
    %v1082 = vmax.f32 %v988, 0.0
    %v1083 = vmax.f32 %v990, 0.0
    %v1084 = vmax.f32 %v1074, 0.0
    %v1085 = vmax.f32 %v1076, 0.0
    %v1086 = vpack.c.bf16 %v1082, %v1078
    %v1087 = vpack.c.bf16 %v1083, %v1079
    %v1088 = vpack.c.bf16 %v1084, %v1080
    %v1089 = vpack.c.bf16 %v1085, %v1081
    %v1090 = vld [vmem:[%s4] sm:$0xf]
    %v1091 = vld [vmem:[%s4 + $0x4] sm:$0xf]
    %v1092 = vld [vmem:[%s4 + $0x8] sm:$0xf]
    %v1093 = vld [vmem:[%s4 + $0xc] sm:$0xf]
    %v1094 = vld [vmem:[%s4 + $0x10] sm:$0xf]
    %v1095 = vld [vmem:[%s4 + $0x14] sm:$0xf]
    %v1096 = vld [vmem:[%s4 + $0x18] sm:$0xf]
    %v1097 = vld [vmem:[%s4 + $0x1c] sm:$0xf]
    %v1098 = vld [vmem:[%s4 + $0x20] sm:$0xf]
    %v1099 = vld [vmem:[%s4 + $0x24] sm:$0xf]
    %v1100 = vld [vmem:[%s4 + $0x28] sm:$0xf]
    %v1101 = vld [vmem:[%s4 + $0x2c] sm:$0xf]
    %v1102 = vld [vmem:[%s4 + $0x30] sm:$0xf]
    %v1103 = vld [vmem:[%s4 + $0x34] sm:$0xf]
    %v1104 = vld [vmem:[%s4 + $0x38] sm:$0xf]
    %v1105 = vld [vmem:[%s4 + $0x3c] sm:$0xf]
    %v1106 = vld [vmem:[%s4 + $0x40] sm:$0xf]
    %v1107 = vld [vmem:[%s4 + $0x44] sm:$0xf]
    %v1108 = vld [vmem:[%s4 + $0x48] sm:$0xf]
    %v1109 = vld [vmem:[%s4 + $0x4c] sm:$0xf]
    %v1110 = vld [vmem:[%s4 + $0x50] sm:$0xf]
    %v1111 = vld [vmem:[%s4 + $0x54] sm:$0xf]
    %v1112 = vld [vmem:[%s4 + $0x58] sm:$0xf]
    %v1113 = vld [vmem:[%s4 + $0x5c] sm:$0xf]
    %v1114 = vld [vmem:[%s4 + $0x60] sm:$0xf]
    %v1115 = vld [vmem:[%s4 + $0x64] sm:$0xf]
    %v1116 = vld [vmem:[%s4 + $0x68] sm:$0xf]
    %v1117 = vld [vmem:[%s4 + $0x6c] sm:$0xf]
    %v1118 = vld [vmem:[%s4 + $0x70] sm:$0xf]
    %v1119 = vld [vmem:[%s4 + $0x74] sm:$0xf]
    %v1120 = vld [vmem:[%s4 + $0x78] sm:$0xf]
    %v1121 = vld [vmem:[%s4 + $0x7c] sm:$0xf]
    %v1122 = vld [vmem:[%s4 + $0x80] sm:$0xf]
    %v1123 = vld [vmem:[%s4 + $0x84] sm:$0xf]
    %v1124 = vld [vmem:[%s4 + $0x88] sm:$0xf]
    %v1125 = vld [vmem:[%s4 + $0x8c] sm:$0xf]
    %v1126 = vld [vmem:[%s4 + $0x90] sm:$0xf]
    %v1127 = vld [vmem:[%s4 + $0x94] sm:$0xf]
    %v1128 = vld [vmem:[%s4 + $0x98] sm:$0xf]
    %v1129 = vld [vmem:[%s4 + $0x9c] sm:$0xf]
    %v1130 = vld [vmem:[%s4 + $0xa0] sm:$0xf]
    %v1131 = vld [vmem:[%s4 + $0xa4] sm:$0xf]
    %v1132 = vld [vmem:[%s4 + $0xa8] sm:$0xf]
    %v1133 = vld [vmem:[%s4 + $0xac] sm:$0xf]
    %v1134 = vld [vmem:[%s4 + $0xb0] sm:$0xf]
    %v1135 = vld [vmem:[%s4 + $0xb4] sm:$0xf]
    %v1136 = vld [vmem:[%s4 + $0xb8] sm:$0xf]
    %v1137 = vld [vmem:[%s4 + $0xbc] sm:$0xf]
    %v1138 = vld [vmem:[%s4 + $0xc0] sm:$0xf]
    %v1139 = vld [vmem:[%s4 + $0xc4] sm:$0xf]
    %v1140 = vld [vmem:[%s4 + $0xc8] sm:$0xf]
    %v1141 = vld [vmem:[%s4 + $0xcc] sm:$0xf]
    %v1142 = vld [vmem:[%s4 + $0xd0] sm:$0xf]
    %v1143 = vld [vmem:[%s4 + $0xd4] sm:$0xf]
    %v1144 = vld [vmem:[%s4 + $0xd8] sm:$0xf]
    %v1145 = vld [vmem:[%s4 + $0xdc] sm:$0xf]
    %v1146 = vld [vmem:[%s4 + $0xe0] sm:$0xf]
    %v1147 = vld [vmem:[%s4 + $0xe4] sm:$0xf]
    %v1148 = vld [vmem:[%s4 + $0xe8] sm:$0xf]
    %v1149 = vld [vmem:[%s4 + $0xec] sm:$0xf]
    %v1150 = vld [vmem:[%s4 + $0xf0] sm:$0xf]
    %v1151 = vld [vmem:[%s4 + $0xf4] sm:$0xf]
    %v1152 = vld [vmem:[%s4 + $0xf8] sm:$0xf]
    %v1153 = vld [vmem:[%s4 + $0xfc] sm:$0xf]
    %v1154 = vld [vmem:[%s5] sm:$0x1]
    %v1156 = vlaneseq
    %v1157 = vshrl.u32 %v1156, 7
    %v1158 = vsub.s32 0, %v1157
    %v1159 = vrot.slane %v1154, %v1158
    %v1225 = vunpack.c.l.b16 %v1090
    %v1226 = vunpack.c.l.b16 %v1091
    %v1227 = vunpack.c.l.b16 %v1092
    %v1228 = vunpack.c.l.b16 %v1093
    %v1229 = vunpack.c.l.b16 %v1094
    %v1230 = vunpack.c.l.b16 %v1095
    %v1231 = vunpack.c.l.b16 %v1096
    %v1232 = vunpack.c.l.b16 %v1097
    %v1233 = vunpack.c.l.b16 %v1098
    %v1234 = vunpack.c.l.b16 %v1099
    %v1235 = vunpack.c.l.b16 %v1100
    %v1236 = vunpack.c.l.b16 %v1101
    %v1237 = vunpack.c.l.b16 %v1102
    %v1238 = vunpack.c.l.b16 %v1103
    %v1239 = vunpack.c.l.b16 %v1104
    %v1240 = vunpack.c.l.b16 %v1105
    %v1241 = vunpack.c.l.b16 %v1106
    %v1242 = vunpack.c.l.b16 %v1107
    %v1243 = vunpack.c.l.b16 %v1108
    %v1244 = vunpack.c.l.b16 %v1109
    %v1245 = vunpack.c.l.b16 %v1110
    %v1246 = vunpack.c.l.b16 %v1111
    %v1247 = vunpack.c.l.b16 %v1112
    %v1248 = vunpack.c.l.b16 %v1113
    %v1249 = vunpack.c.l.b16 %v1114
    %v1250 = vunpack.c.l.b16 %v1115
    %v1251 = vunpack.c.l.b16 %v1116
    %v1252 = vunpack.c.l.b16 %v1117
    %v1253 = vunpack.c.l.b16 %v1118
    %v1254 = vunpack.c.l.b16 %v1119
    %v1255 = vunpack.c.l.b16 %v1120
    %v1256 = vunpack.c.l.b16 %v1121
    %v1257 = vunpack.c.l.b16 %v1122
    %v1258 = vunpack.c.l.b16 %v1123
    %v1259 = vunpack.c.l.b16 %v1124
    %v1260 = vunpack.c.l.b16 %v1125
    %v1261 = vunpack.c.l.b16 %v1126
    %v1262 = vunpack.c.l.b16 %v1127
    %v1263 = vunpack.c.l.b16 %v1128
    %v1264 = vunpack.c.l.b16 %v1129
    %v1265 = vunpack.c.l.b16 %v1130
    %v1266 = vunpack.c.l.b16 %v1131
    %v1267 = vunpack.c.l.b16 %v1132
    %v1268 = vunpack.c.l.b16 %v1133
    %v1269 = vunpack.c.l.b16 %v1134
    %v1270 = vunpack.c.l.b16 %v1135
    %v1271 = vunpack.c.l.b16 %v1136
    %v1272 = vunpack.c.l.b16 %v1137
    %v1273 = vunpack.c.l.b16 %v1138
    %v1274 = vunpack.c.l.b16 %v1139
    %v1275 = vunpack.c.l.b16 %v1140
    %v1276 = vunpack.c.l.b16 %v1141
    %v1277 = vunpack.c.l.b16 %v1142
    %v1278 = vunpack.c.l.b16 %v1143
    %v1279 = vunpack.c.l.b16 %v1144
    %v1280 = vunpack.c.l.b16 %v1145
    %v1281 = vunpack.c.l.b16 %v1146
    %v1282 = vunpack.c.l.b16 %v1147
    %v1283 = vunpack.c.l.b16 %v1148
    %v1284 = vunpack.c.l.b16 %v1149
    %v1285 = vunpack.c.l.b16 %v1150
    %v1286 = vunpack.c.l.b16 %v1151
    %v1287 = vunpack.c.l.b16 %v1152
    %v1288 = vunpack.c.l.b16 %v1153
    %v1289 = vpack.c.b16 %v1226, %v1225
    %v1290 = vpack.c.b16 %v1228, %v1227
    %v1291 = vpack.c.b16 %v1230, %v1229
    %v1292 = vpack.c.b16 %v1232, %v1231
    %v1293 = vpack.c.b16 %v1234, %v1233
    %v1294 = vpack.c.b16 %v1236, %v1235
    %v1295 = vpack.c.b16 %v1238, %v1237
    %v1296 = vpack.c.b16 %v1240, %v1239
    %v1297 = vpack.c.b16 %v1242, %v1241
    %v1298 = vpack.c.b16 %v1244, %v1243
    %v1299 = vpack.c.b16 %v1246, %v1245
    %v1300 = vpack.c.b16 %v1248, %v1247
    %v1301 = vpack.c.b16 %v1250, %v1249
    %v1302 = vpack.c.b16 %v1252, %v1251
    %v1303 = vpack.c.b16 %v1254, %v1253
    %v1304 = vpack.c.b16 %v1256, %v1255
    %v1305 = vpack.c.b16 %v1258, %v1257
    %v1306 = vpack.c.b16 %v1260, %v1259
    %v1307 = vpack.c.b16 %v1262, %v1261
    %v1308 = vpack.c.b16 %v1264, %v1263
    %v1309 = vpack.c.b16 %v1266, %v1265
    %v1310 = vpack.c.b16 %v1268, %v1267
    %v1311 = vpack.c.b16 %v1270, %v1269
    %v1312 = vpack.c.b16 %v1272, %v1271
    %v1313 = vpack.c.b16 %v1274, %v1273
    %v1314 = vpack.c.b16 %v1276, %v1275
    %v1315 = vpack.c.b16 %v1278, %v1277
    %v1316 = vpack.c.b16 %v1280, %v1279
    %v1317 = vpack.c.b16 %v1282, %v1281
    %v1318 = vpack.c.b16 %v1284, %v1283
    %v1319 = vpack.c.b16 %v1286, %v1285
    %v1320 = vpack.c.b16 %v1288, %v1287
    %1353 = vmatprep.subr.bf16.mxu0 0
    %1354 = vmatpush1.bf16.msra.mxu0 %v1289
    %1355 = vmatprep.subr.bf16.mxu0 0
    %1356 = vmatpush1.bf16.msra.mxu0 %v1290
    %1357 = vmatprep.subr.bf16.mxu0 0
    %1358 = vmatpush1.bf16.msra.mxu0 %v1291
    %1359 = vmatprep.subr.bf16.mxu0 0
    %1360 = vmatpush1.bf16.msra.mxu0 %v1292
    %1361 = vmatprep.subr.bf16.mxu0 0
    %1362 = vmatpush1.bf16.msra.mxu0 %v1293
    %1363 = vmatprep.subr.bf16.mxu0 0
    %1364 = vmatpush1.bf16.msra.mxu0 %v1294
    %1365 = vmatprep.subr.bf16.mxu0 0
    %1366 = vmatpush1.bf16.msra.mxu0 %v1295
    %1367 = vmatprep.subr.bf16.mxu0 0
    %1368 = vmatpush1.bf16.msra.mxu0 %v1296
    %1369 = vmatprep.subr.bf16.mxu0 0
    %1370 = vmatpush1.bf16.msra.mxu0 %v1297
    %1371 = vmatprep.subr.bf16.mxu0 0
    %1372 = vmatpush1.bf16.msra.mxu0 %v1298
    %1373 = vmatprep.subr.bf16.mxu0 0
    %1374 = vmatpush1.bf16.msra.mxu0 %v1299
    %1375 = vmatprep.subr.bf16.mxu0 0
    %1376 = vmatpush1.bf16.msra.mxu0 %v1300
    %1377 = vmatprep.subr.bf16.mxu0 0
    %1378 = vmatpush1.bf16.msra.mxu0 %v1301
    %1379 = vmatprep.subr.bf16.mxu0 0
    %1380 = vmatpush1.bf16.msra.mxu0 %v1302
    %1381 = vmatprep.subr.bf16.mxu0 0
    %1382 = vmatpush1.bf16.msra.mxu0 %v1303
    %1383 = vmatprep.subr.bf16.mxu0 0
    %1384 = vmatpush1.bf16.msra.mxu0 %v1304
    %1385 = vmatprep.mubr.bf16.mxu0 %v1087
    %1386 = vmatmul.mubr.bf16.gmra.mrb[0].mxu0 %v1086
    %v1387 = vpop.f32.mrb[0].mxu0
    %v1388 = vadd.f32 %v1159, %v1387
    %v1389 = vpop.f32.mrb[0].mxu0
    %v1390 = vpop.f32.mrb[0].mxu0
    %v1391 = vadd.f32 %v1159, %v1390
    %v1392 = vpop.f32.mrb[0].mxu0
    %1393 = vdwg.mxu0
    %1394 = vmatprep.subr.bf16.mxu0 0
    %1395 = vmatpush1.bf16.msra.mxu0 %v1305
    %1396 = vmatprep.subr.bf16.mxu0 0
    %1397 = vmatpush1.bf16.msra.mxu0 %v1306
    %1398 = vmatprep.subr.bf16.mxu0 0
    %1399 = vmatpush1.bf16.msra.mxu0 %v1307
    %1400 = vmatprep.subr.bf16.mxu0 0
    %1401 = vmatpush1.bf16.msra.mxu0 %v1308
    %1402 = vmatprep.subr.bf16.mxu0 0
    %1403 = vmatpush1.bf16.msra.mxu0 %v1309
    %1404 = vmatprep.subr.bf16.mxu0 0
    %1405 = vmatpush1.bf16.msra.mxu0 %v1310
    %1406 = vmatprep.subr.bf16.mxu0 0
    %1407 = vmatpush1.bf16.msra.mxu0 %v1311
    %1408 = vmatprep.subr.bf16.mxu0 0
    %1409 = vmatpush1.bf16.msra.mxu0 %v1312
    %1410 = vmatprep.subr.bf16.mxu0 0
    %1411 = vmatpush1.bf16.msra.mxu0 %v1313
    %1412 = vmatprep.subr.bf16.mxu0 0
    %1413 = vmatpush1.bf16.msra.mxu0 %v1314
    %1414 = vmatprep.subr.bf16.mxu0 0
    %1415 = vmatpush1.bf16.msra.mxu0 %v1315
    %1416 = vmatprep.subr.bf16.mxu0 0
    %1417 = vmatpush1.bf16.msra.mxu0 %v1316
    %1418 = vmatprep.subr.bf16.mxu0 0
    %1419 = vmatpush1.bf16.msra.mxu0 %v1317
    %1420 = vmatprep.subr.bf16.mxu0 0
    %1421 = vmatpush1.bf16.msra.mxu0 %v1318
    %1422 = vmatprep.subr.bf16.mxu0 0
    %1423 = vmatpush1.bf16.msra.mxu0 %v1319
    %1424 = vmatprep.subr.bf16.mxu0 0
    %1425 = vmatpush1.bf16.msra.mxu0 %v1320
    %1426 = vmatprep.mubr.bf16.mxu0 %v1089
    %1427 = vmatmul.mubr.bf16.gmra.mrb[0].mxu0 %v1088
    %v1428 = vpop.f32.mrb[0].mxu0
    %v1429 = vadd.f32 %v1388, %v1428
    %v1430 = vpop.f32.mrb[0].mxu0
    %v1431 = vpop.f32.mrb[0].mxu0
    %v1432 = vadd.f32 %v1391, %v1431
    %v1433 = vpop.f32.mrb[0].mxu0
    %1434 = vdwg.mxu0
    %vm1435 = vcmask 130048
    %v1436 = vsel %vm1435, %v1429, -inf
    %1437 = vmax.xlane.f32.xlu0 %v1436
    %v1438 = vpop.xlane.xlu0 %1437
    %v1439 = vsel %vm1435, %v1432, -inf
    %1440 = vmax.xlane.f32.xlu0 %v1439
    %v1441 = vpop.xlane.xlu0 %1440
    %v1442 = vsub.f32 %v1429, %v1438
    %v1443 = vsub.f32 %v1432, %v1441
    %v1444 = vmul.f32 %v1442, 1.442695
    %v1445 = vpow.pop %v1444
    %v1446 = vmul.f32 %v1443, 1.442695
    %v1447 = vpow.pop %v1446
    %v1448 = vsel %vm1435, %v1445, 0.0
    %1449 = vadd.xlane.f32.xlu0 %v1448
    %v1450 = vpop.xlane.xlu0 %1449
    %v1451 = vsel %vm1435, %v1447, 0.0
    %1452 = vadd.xlane.f32.xlu0 %v1451
    %v1453 = vpop.xlane.xlu0 %1452
    %v1454 = vrcp.pop %v1450
    %v1455 = vmul.f32 %v1445, %v1454
    %v1456 = vrcp.pop %v1453
    %v1457 = vmul.f32 %v1447, %v1456
    %1458 = vst.msk [vmem:[%s10] sm:$0xff] %vm1435, %v1455
    %1459 = vst.msk [vmem:[%s10 + $0x8] sm:$0xff] %vm1435, %v1457
    %v1460 = vpack.c.bf16 %v1457, %v1455
    %v1461 = vld [vmem:[%s6] sm:$0xff]
    %v1462 = vld [vmem:[%s6 + $0x8] sm:$0xff]
    %v1463 = vld [vmem:[%s6 + $0x10] sm:$0xff]
    %v1464 = vld [vmem:[%s6 + $0x18] sm:$0xff]
    %v1465 = vld [vmem:[%s7] sm:$0xf]
    %v1467 = vlaneseq
    %v1468 = vshrl.u32 %v1467, 7
    %v1469 = vsub.s32 0, %v1468
    %v1470 = vrot.slane %v1465, %v1469
    %v1471 = vlaneseq
    %v1472 = vshrl.u32 %v1471, 7
    %v1473 = vsub.s32 1, %v1472
    %v1474 = vrot.slane %v1465, %v1473
    %v1475 = vlaneseq
    %v1476 = vshrl.u32 %v1475, 7
    %v1477 = vsub.s32 2, %v1476
    %v1478 = vrot.slane %v1465, %v1477
    %v1479 = vlaneseq
    %v1480 = vshrl.u32 %v1479, 7
    %v1481 = vsub.s32 3, %v1480
    %v1482 = vrot.slane %v1465, %v1481
    %v1491 = vunpack.c.l.b16 %v1461
    %v1492 = vunpack.c.h.b16 %v1461
    %v1493 = vunpack.c.l.b16 %v1462
    %v1494 = vunpack.c.h.b16 %v1462
    %v1495 = vunpack.c.l.b16 %v1463
    %v1496 = vunpack.c.h.b16 %v1463
    %v1497 = vunpack.c.l.b16 %v1464
    %v1498 = vunpack.c.h.b16 %v1464
    %v1499 = vpack.c.b16 %v1495, %v1491
    %v1500 = vpack.c.b16 %v1496, %v1492
    %v1501 = vpack.c.b16 %v1497, %v1493
    %v1502 = vpack.c.b16 %v1498, %v1494
    %v1508 = vsel %vm1435, %v1460, 0
    %1510 = vmatprep.subr.bf16.mxu0 %v1500
    %1511 = vmatpush1.bf16.msra.mxu0 %v1499
    %1512 = vmatprep.subr.bf16.mxu0 0
    %1513 = vmatpush1.bf16.msra.mxu0 0
    %1514 = vmatprep.subr.bf16.mxu0 0
    %1515 = vmatpush1.bf16.msra.mxu0 0
    %1516 = vmatprep.subr.bf16.mxu0 0
    %1517 = vmatpush1.bf16.msra.mxu0 0
    %1518 = vmatprep.subr.bf16.mxu0 0
    %1519 = vmatpush1.bf16.msra.mxu0 0
    %1520 = vmatprep.subr.bf16.mxu0 0
    %1521 = vmatpush1.bf16.msra.mxu0 0
    %1522 = vmatprep.subr.bf16.mxu0 0
    %1523 = vmatpush1.bf16.msra.mxu0 0
    %1524 = vmatprep.subr.bf16.mxu0 0
    %1525 = vmatpush1.bf16.msra.mxu0 0
    %1526 = vmatprep.subr.bf16.mxu0 0
    %1527 = vmatpush1.bf16.msra.mxu0 0
    %1528 = vmatprep.subr.bf16.mxu0 0
    %1529 = vmatpush1.bf16.msra.mxu0 0
    %1530 = vmatprep.subr.bf16.mxu0 0
    %1531 = vmatpush1.bf16.msra.mxu0 0
    %1532 = vmatprep.subr.bf16.mxu0 0
    %1533 = vmatpush1.bf16.msra.mxu0 0
    %1534 = vmatprep.subr.bf16.mxu0 0
    %1535 = vmatpush1.bf16.msra.mxu0 0
    %1536 = vmatprep.subr.bf16.mxu0 0
    %1537 = vmatpush1.bf16.msra.mxu0 0
    %1538 = vmatprep.subr.bf16.mxu0 0
    %1539 = vmatpush1.bf16.msra.mxu0 0
    %1540 = vmatprep.subr.bf16.mxu0 0
    %1541 = vmatpush1.bf16.msra.mxu0 0
    %1542 = vmatprep.mubr.bf16.mxu0 0
    %1543 = vmatmul.mubr.bf16.gmra.mrb[0].mxu0 %v1508
    %v1544 = vpop.f32.mrb[0].mxu0
    %v1545 = vadd.f32 %v1470, %v1544
    %v1546 = vpop.f32.mrb[0].mxu0
    %v1547 = vadd.f32 %v1474, %v1546
    %v1548 = vpop.f32.mrb[0].mxu0
    %v1549 = vadd.f32 %v1470, %v1548
    %v1550 = vpop.f32.mrb[0].mxu0
    %v1551 = vadd.f32 %v1474, %v1550
    %1552 = vdwg.mxu0
    %1553 = vmatprep.subr.bf16.mxu0 %v1502
    %1554 = vmatpush1.bf16.msra.mxu0 %v1501
    %1555 = vmatprep.subr.bf16.mxu0 0
    %1556 = vmatpush1.bf16.msra.mxu0 0
    %1557 = vmatprep.subr.bf16.mxu0 0
    %1558 = vmatpush1.bf16.msra.mxu0 0
    %1559 = vmatprep.subr.bf16.mxu0 0
    %1560 = vmatpush1.bf16.msra.mxu0 0
    %1561 = vmatprep.subr.bf16.mxu0 0
    %1562 = vmatpush1.bf16.msra.mxu0 0
    %1563 = vmatprep.subr.bf16.mxu0 0
    %1564 = vmatpush1.bf16.msra.mxu0 0
    %1565 = vmatprep.subr.bf16.mxu0 0
    %1566 = vmatpush1.bf16.msra.mxu0 0
    %1567 = vmatprep.subr.bf16.mxu0 0
    %1568 = vmatpush1.bf16.msra.mxu0 0
    %1569 = vmatprep.subr.bf16.mxu0 0
    %1570 = vmatpush1.bf16.msra.mxu0 0
    %1571 = vmatprep.subr.bf16.mxu0 0
    %1572 = vmatpush1.bf16.msra.mxu0 0
    %1573 = vmatprep.subr.bf16.mxu0 0
    %1574 = vmatpush1.bf16.msra.mxu0 0
    %1575 = vmatprep.subr.bf16.mxu0 0
    %1576 = vmatpush1.bf16.msra.mxu0 0
    %1577 = vmatprep.subr.bf16.mxu0 0
    %1578 = vmatpush1.bf16.msra.mxu0 0
    %1579 = vmatprep.subr.bf16.mxu0 0
    %1580 = vmatpush1.bf16.msra.mxu0 0
    %1581 = vmatprep.subr.bf16.mxu0 0
    %1582 = vmatpush1.bf16.msra.mxu0 0
    %1583 = vmatprep.subr.bf16.mxu0 0
    %1584 = vmatpush1.bf16.msra.mxu0 0
    %1585 = vmatprep.mubr.bf16.mxu0 0
    %1586 = vmatmul.mubr.bf16.gmra.mrb[0].mxu0 %v1508
    %v1587 = vpop.f32.mrb[0].mxu0
    %v1588 = vadd.f32 %v1478, %v1587
    %v1589 = vpop.f32.mrb[0].mxu0
    %v1590 = vadd.f32 %v1482, %v1589
    %v1591 = vpop.f32.mrb[0].mxu0
    %v1592 = vadd.f32 %v1478, %v1591
    %v1593 = vpop.f32.mrb[0].mxu0
    %v1594 = vadd.f32 %v1482, %v1593
    %1595 = vdwg.mxu0
    %v1596 = vmax.f32 %v1545, 0.0
    %v1597 = vmax.f32 %v1547, 0.0
    %v1598 = vmax.f32 %v1588, 0.0
    %v1599 = vmax.f32 %v1590, 0.0
    %v1600 = vmax.f32 %v1549, 0.0
    %v1601 = vmax.f32 %v1551, 0.0
    %v1602 = vmax.f32 %v1592, 0.0
    %v1603 = vmax.f32 %v1594, 0.0
    %v1604 = vpack.c.bf16 %v1600, %v1596
    %v1605 = vpack.c.bf16 %v1601, %v1597
    %v1606 = vpack.c.bf16 %v1602, %v1598
    %v1607 = vpack.c.bf16 %v1603, %v1599
    %v1608 = vld [vmem:[#allocation4] sm:$0xff]
    %v1609 = vld [vmem:[#allocation4 + $0x8] sm:$0xff]
    %v1610 = vld [vmem:[#allocation4 + $0x10] sm:$0xff]
    %v1611 = vld [vmem:[#allocation4 + $0x18] sm:$0xff]
    %v1612 = vld [vmem:[#allocation4 + $0x20] sm:$0xff]
    %v1613 = vld [vmem:[#allocation4 + $0x28] sm:$0xff]
    %v1614 = vld [vmem:[#allocation4 + $0x30] sm:$0xff]
    %v1615 = vld [vmem:[#allocation4 + $0x38] sm:$0xff]
    %v1616 = vld [vmem:[#allocation4 + $0x40] sm:$0xff]
    %v1617 = vld [vmem:[#allocation4 + $0x48] sm:$0xff]
    %v1618 = vld [vmem:[#allocation4 + $0x50] sm:$0xff]
    %v1619 = vld [vmem:[#allocation4 + $0x58] sm:$0xff]
    %v1620 = vld [vmem:[#allocation4 + $0x60] sm:$0xff]
    %v1621 = vld [vmem:[#allocation4 + $0x68] sm:$0xff]
    %v1622 = vld [vmem:[#allocation4 + $0x70] sm:$0xff]
    %v1623 = vld [vmem:[#allocation4 + $0x78] sm:$0xff]
    %v1624 = vld [vmem:[#allocation4 + $0x80] sm:$0xff]
    %v1625 = vld [vmem:[#allocation4 + $0x88] sm:$0xff]
    %v1626 = vld [vmem:[#allocation4 + $0x90] sm:$0xff]
    %v1627 = vld [vmem:[#allocation4 + $0x98] sm:$0xff]
    %v1628 = vld [vmem:[#allocation4 + $0xa0] sm:$0xff]
    %v1629 = vld [vmem:[#allocation4 + $0xa8] sm:$0xff]
    %v1630 = vld [vmem:[#allocation4 + $0xb0] sm:$0xff]
    %v1631 = vld [vmem:[#allocation4 + $0xb8] sm:$0xff]
    %v1632 = vld [vmem:[#allocation4 + $0xc0] sm:$0xff]
    %v1633 = vld [vmem:[#allocation4 + $0xc8] sm:$0xff]
    %v1634 = vld [vmem:[#allocation4 + $0xd0] sm:$0xff]
    %v1635 = vld [vmem:[#allocation4 + $0xd8] sm:$0xff]
    %v1636 = vld [vmem:[#allocation4 + $0xe0] sm:$0xff]
    %v1637 = vld [vmem:[#allocation4 + $0xe8] sm:$0xff]
    %v1638 = vld [vmem:[#allocation4 + $0xf0] sm:$0xff]
    %v1639 = vld [vmem:[#allocation4 + $0xf8] sm:$0xff]
    %v1640 = vld [vmem:[#allocation4 + $0x100] sm:$0xff]
    %v1641 = vld [vmem:[#allocation4 + $0x108] sm:$0xff]
    %v1642 = vld [vmem:[#allocation4 + $0x110] sm:$0xff]
    %v1643 = vld [vmem:[#allocation4 + $0x118] sm:$0xff]
    %v1644 = vld [vmem:[#allocation4 + $0x120] sm:$0xff]
    %v1645 = vld [vmem:[#allocation4 + $0x128] sm:$0xff]
    %v1646 = vld [vmem:[#allocation4 + $0x130] sm:$0xff]
    %v1647 = vld [vmem:[#allocation4 + $0x138] sm:$0xff]
    %v1648 = vld [vmem:[#allocation4 + $0x140] sm:$0xff]
    %v1649 = vld [vmem:[#allocation4 + $0x148] sm:$0xff]
    %v1650 = vld [vmem:[#allocation4 + $0x150] sm:$0xff]
    %v1651 = vld [vmem:[#allocation4 + $0x158] sm:$0xff]
    %v1652 = vld [vmem:[#allocation4 + $0x160] sm:$0xff]
    %v1653 = vld [vmem:[#allocation4 + $0x168] sm:$0xff]
    %v1654 = vld [vmem:[#allocation4 + $0x170] sm:$0xff]
    %v1655 = vld [vmem:[#allocation4 + $0x178] sm:$0xff]
    %v1656 = vld [vmem:[#allocation4 + $0x180] sm:$0xff]
    %v1657 = vld [vmem:[#allocation4 + $0x188] sm:$0xff]
    %v1658 = vld [vmem:[#allocation4 + $0x190] sm:$0xff]
    %v1659 = vld [vmem:[#allocation4 + $0x198] sm:$0xff]
    %v1660 = vld [vmem:[#allocation4 + $0x1a0] sm:$0xff]
    %v1661 = vld [vmem:[#allocation4 + $0x1a8] sm:$0xff]
    %v1662 = vld [vmem:[#allocation4 + $0x1b0] sm:$0xff]
    %v1663 = vld [vmem:[#allocation4 + $0x1b8] sm:$0xff]
    %v1664 = vld [vmem:[#allocation4 + $0x1c0] sm:$0xff]
    %v1665 = vld [vmem:[#allocation4 + $0x1c8] sm:$0xff]
    %v1666 = vld [vmem:[#allocation4 + $0x1d0] sm:$0xff]
    %v1667 = vld [vmem:[#allocation4 + $0x1d8] sm:$0xff]
    %v1668 = vld [vmem:[#allocation4 + $0x1e0] sm:$0xff]
    %v1669 = vld [vmem:[#allocation4 + $0x1e8] sm:$0xff]
    %v1670 = vld [vmem:[#allocation4 + $0x1f0] sm:$0xff]
    %v1671 = vld [vmem:[#allocation4 + $0x1f8] sm:$0xff]
    %v1672 = vld [vmem:[#allocation4 + $0x200] sm:$0xff]
    %v1673 = vld [vmem:[#allocation4 + $0x208] sm:$0xff]
    %v1674 = vld [vmem:[#allocation4 + $0x210] sm:$0xff]
    %v1675 = vld [vmem:[#allocation4 + $0x218] sm:$0xff]
    %v1676 = vld [vmem:[#allocation4 + $0x220] sm:$0xff]
    %v1677 = vld [vmem:[#allocation4 + $0x228] sm:$0xff]
    %v1678 = vld [vmem:[#allocation4 + $0x230] sm:$0xff]
    %v1679 = vld [vmem:[#allocation4 + $0x238] sm:$0xff]
    %v1680 = vld [vmem:[#allocation4 + $0x240] sm:$0xff]
    %v1681 = vld [vmem:[#allocation4 + $0x248] sm:$0xff]
    %v1682 = vld [vmem:[#allocation4 + $0x250] sm:$0xff]
    %v1683 = vld [vmem:[#allocation4 + $0x258] sm:$0xff]
    %v1684 = vld [vmem:[#allocation4 + $0x260] sm:$0xff]
    %v1685 = vld [vmem:[#allocation4 + $0x268] sm:$0xff]
    %v1686 = vld [vmem:[#allocation4 + $0x270] sm:$0xff]
    %v1687 = vld [vmem:[#allocation4 + $0x278] sm:$0xff]
    %v1688 = vld [vmem:[#allocation4 + $0x280] sm:$0xff]
    %v1689 = vld [vmem:[#allocation4 + $0x288] sm:$0xff]
    %v1690 = vld [vmem:[#allocation4 + $0x290] sm:$0xff]
    %v1691 = vld [vmem:[#allocation4 + $0x298] sm:$0xff]
    %v1692 = vld [vmem:[#allocation4 + $0x2a0] sm:$0xff]
    %v1693 = vld [vmem:[#allocation4 + $0x2a8] sm:$0xff]
    %v1694 = vld [vmem:[#allocation4 + $0x2b0] sm:$0xff]
    %v1695 = vld [vmem:[#allocation4 + $0x2b8] sm:$0xff]
    %v1696 = vld [vmem:[#allocation4 + $0x2c0] sm:$0xff]
    %v1697 = vld [vmem:[#allocation4 + $0x2c8] sm:$0xff]
    %v1698 = vld [vmem:[#allocation4 + $0x2d0] sm:$0xff]
    %v1699 = vld [vmem:[#allocation4 + $0x2d8] sm:$0xff]
    %v1700 = vld [vmem:[#allocation4 + $0x2e0] sm:$0xff]
    %v1701 = vld [vmem:[#allocation4 + $0x2e8] sm:$0xff]
    %v1702 = vld [vmem:[#allocation4 + $0x2f0] sm:$0xff]
    %v1703 = vld [vmem:[#allocation4 + $0x2f8] sm:$0xff]
    %v1704 = vld [vmem:[#allocation4 + $0x300] sm:$0xff]
    %v1705 = vld [vmem:[#allocation4 + $0x308] sm:$0xff]
    %v1706 = vld [vmem:[#allocation4 + $0x310] sm:$0xff]
    %v1707 = vld [vmem:[#allocation4 + $0x318] sm:$0xff]
    %v1708 = vld [vmem:[#allocation4 + $0x320] sm:$0xff]
    %v1709 = vld [vmem:[#allocation4 + $0x328] sm:$0xff]
    %v1710 = vld [vmem:[#allocation4 + $0x330] sm:$0xff]
    %v1711 = vld [vmem:[#allocation4 + $0x338] sm:$0xff]
    %v1712 = vld [vmem:[#allocation4 + $0x340] sm:$0xff]
    %v1713 = vld [vmem:[#allocation4 + $0x348] sm:$0xff]
    %v1714 = vld [vmem:[#allocation4 + $0x350] sm:$0xff]
    %v1715 = vld [vmem:[#allocation4 + $0x358] sm:$0xff]
    %v1716 = vld [vmem:[#allocation4 + $0x360] sm:$0xff]
    %v1717 = vld [vmem:[#allocation4 + $0x368] sm:$0xff]
    %v1718 = vld [vmem:[#allocation4 + $0x370] sm:$0xff]
    %v1719 = vld [vmem:[#allocation4 + $0x378] sm:$0xff]
    %v1720 = vld [vmem:[#allocation4 + $0x380] sm:$0xff]
    %v1721 = vld [vmem:[#allocation4 + $0x388] sm:$0xff]
    %v1722 = vld [vmem:[#allocation4 + $0x390] sm:$0xff]
    %v1723 = vld [vmem:[#allocation4 + $0x398] sm:$0xff]
    %v1724 = vld [vmem:[#allocation4 + $0x3a0] sm:$0xff]
    %v1725 = vld [vmem:[#allocation4 + $0x3a8] sm:$0xff]
    %v1726 = vld [vmem:[#allocation4 + $0x3b0] sm:$0xff]
    %v1727 = vld [vmem:[#allocation4 + $0x3b8] sm:$0xff]
    %v1728 = vld [vmem:[#allocation4 + $0x3c0] sm:$0xff]
    %v1729 = vld [vmem:[#allocation4 + $0x3c8] sm:$0xff]
    %v1730 = vld [vmem:[#allocation4 + $0x3d0] sm:$0xff]
    %v1731 = vld [vmem:[#allocation4 + $0x3d8] sm:$0xff]
    %v1732 = vld [vmem:[#allocation4 + $0x3e0] sm:$0xff]
    %v1733 = vld [vmem:[#allocation4 + $0x3e8] sm:$0xff]
    %v1734 = vld [vmem:[#allocation4 + $0x3f0] sm:$0xff]
    %v1735 = vld [vmem:[#allocation4 + $0x3f8] sm:$0xff]
    %v1736 = vld [vmem:[%s9] sm:$0xf]
    %v1738 = vlaneseq
    %v1739 = vshrl.u32 %v1738, 7
    %v1740 = vsub.s32 0, %v1739
    %v1741 = vrot.slane %v1736, %v1740
    %v1742 = vlaneseq
    %v1743 = vshrl.u32 %v1742, 7
    %v1744 = vsub.s32 1, %v1743
    %v1745 = vrot.slane %v1736, %v1744
    %v1746 = vlaneseq
    %v1747 = vshrl.u32 %v1746, 7
    %v1748 = vsub.s32 2, %v1747
    %v1749 = vrot.slane %v1736, %v1748
    %v1750 = vlaneseq
    %v1751 = vshrl.u32 %v1750, 7
    %v1752 = vsub.s32 3, %v1751
    %v1753 = vrot.slane %v1736, %v1752
    %v1886 = vunpack.c.l.b16 %v1608
    %v1887 = vunpack.c.h.b16 %v1608
    %v1888 = vunpack.c.l.b16 %v1609
    %v1889 = vunpack.c.h.b16 %v1609
    %v1890 = vunpack.c.l.b16 %v1610
    %v1891 = vunpack.c.h.b16 %v1610
    %v1892 = vunpack.c.l.b16 %v1611
    %v1893 = vunpack.c.h.b16 %v1611
    %v1894 = vunpack.c.l.b16 %v1612
    %v1895 = vunpack.c.h.b16 %v1612
    %v1896 = vunpack.c.l.b16 %v1613
    %v1897 = vunpack.c.h.b16 %v1613
    %v1898 = vunpack.c.l.b16 %v1614
    %v1899 = vunpack.c.h.b16 %v1614
    %v1900 = vunpack.c.l.b16 %v1615
    %v1901 = vunpack.c.h.b16 %v1615
    %v1902 = vunpack.c.l.b16 %v1616
    %v1903 = vunpack.c.h.b16 %v1616
    %v1904 = vunpack.c.l.b16 %v1617
    %v1905 = vunpack.c.h.b16 %v1617
    %v1906 = vunpack.c.l.b16 %v1618
    %v1907 = vunpack.c.h.b16 %v1618
    %v1908 = vunpack.c.l.b16 %v1619
    %v1909 = vunpack.c.h.b16 %v1619
    %v1910 = vunpack.c.l.b16 %v1620
    %v1911 = vunpack.c.h.b16 %v1620
    %v1912 = vunpack.c.l.b16 %v1621
    %v1913 = vunpack.c.h.b16 %v1621
    %v1914 = vunpack.c.l.b16 %v1622
    %v1915 = vunpack.c.h.b16 %v1622
    %v1916 = vunpack.c.l.b16 %v1623
    %v1917 = vunpack.c.h.b16 %v1623
    %v1918 = vunpack.c.l.b16 %v1624
    %v1919 = vunpack.c.h.b16 %v1624
    %v1920 = vunpack.c.l.b16 %v1625
    %v1921 = vunpack.c.h.b16 %v1625
    %v1922 = vunpack.c.l.b16 %v1626
    %v1923 = vunpack.c.h.b16 %v1626
    %v1924 = vunpack.c.l.b16 %v1627
    %v1925 = vunpack.c.h.b16 %v1627
    %v1926 = vunpack.c.l.b16 %v1628
    %v1927 = vunpack.c.h.b16 %v1628
    %v1928 = vunpack.c.l.b16 %v1629
    %v1929 = vunpack.c.h.b16 %v1629
    %v1930 = vunpack.c.l.b16 %v1630
    %v1931 = vunpack.c.h.b16 %v1630
    %v1932 = vunpack.c.l.b16 %v1631
    %v1933 = vunpack.c.h.b16 %v1631
    %v1934 = vunpack.c.l.b16 %v1632
    %v1935 = vunpack.c.h.b16 %v1632
    %v1936 = vunpack.c.l.b16 %v1633
    %v1937 = vunpack.c.h.b16 %v1633
    %v1938 = vunpack.c.l.b16 %v1634
    %v1939 = vunpack.c.h.b16 %v1634
    %v1940 = vunpack.c.l.b16 %v1635
    %v1941 = vunpack.c.h.b16 %v1635
    %v1942 = vunpack.c.l.b16 %v1636
    %v1943 = vunpack.c.h.b16 %v1636
    %v1944 = vunpack.c.l.b16 %v1637
    %v1945 = vunpack.c.h.b16 %v1637
    %v1946 = vunpack.c.l.b16 %v1638
    %v1947 = vunpack.c.h.b16 %v1638
    %v1948 = vunpack.c.l.b16 %v1639
    %v1949 = vunpack.c.h.b16 %v1639
    %v1950 = vunpack.c.l.b16 %v1640
    %v1951 = vunpack.c.h.b16 %v1640
    %v1952 = vunpack.c.l.b16 %v1641
    %v1953 = vunpack.c.h.b16 %v1641
    %v1954 = vunpack.c.l.b16 %v1642
    %v1955 = vunpack.c.h.b16 %v1642
    %v1956 = vunpack.c.l.b16 %v1643
    %v1957 = vunpack.c.h.b16 %v1643
    %v1958 = vunpack.c.l.b16 %v1644
    %v1959 = vunpack.c.h.b16 %v1644
    %v1960 = vunpack.c.l.b16 %v1645
    %v1961 = vunpack.c.h.b16 %v1645
    %v1962 = vunpack.c.l.b16 %v1646
    %v1963 = vunpack.c.h.b16 %v1646
    %v1964 = vunpack.c.l.b16 %v1647
    %v1965 = vunpack.c.h.b16 %v1647
    %v1966 = vunpack.c.l.b16 %v1648
    %v1967 = vunpack.c.h.b16 %v1648
    %v1968 = vunpack.c.l.b16 %v1649
    %v1969 = vunpack.c.h.b16 %v1649
    %v1970 = vunpack.c.l.b16 %v1650
    %v1971 = vunpack.c.h.b16 %v1650
    %v1972 = vunpack.c.l.b16 %v1651
    %v1973 = vunpack.c.h.b16 %v1651
    %v1974 = vunpack.c.l.b16 %v1652
    %v1975 = vunpack.c.h.b16 %v1652
    %v1976 = vunpack.c.l.b16 %v1653
    %v1977 = vunpack.c.h.b16 %v1653
    %v1978 = vunpack.c.l.b16 %v1654
    %v1979 = vunpack.c.h.b16 %v1654
    %v1980 = vunpack.c.l.b16 %v1655
    %v1981 = vunpack.c.h.b16 %v1655
    %v1982 = vunpack.c.l.b16 %v1656
    %v1983 = vunpack.c.h.b16 %v1656
    %v1984 = vunpack.c.l.b16 %v1657
    %v1985 = vunpack.c.h.b16 %v1657
    %v1986 = vunpack.c.l.b16 %v1658
    %v1987 = vunpack.c.h.b16 %v1658
    %v1988 = vunpack.c.l.b16 %v1659
    %v1989 = vunpack.c.h.b16 %v1659
    %v1990 = vunpack.c.l.b16 %v1660
    %v1991 = vunpack.c.h.b16 %v1660
    %v1992 = vunpack.c.l.b16 %v1661
    %v1993 = vunpack.c.h.b16 %v1661
    %v1994 = vunpack.c.l.b16 %v1662
    %v1995 = vunpack.c.h.b16 %v1662
    %v1996 = vunpack.c.l.b16 %v1663
    %v1997 = vunpack.c.h.b16 %v1663
    %v1998 = vunpack.c.l.b16 %v1664
    %v1999 = vunpack.c.h.b16 %v1664
    %v2000 = vunpack.c.l.b16 %v1665
    %v2001 = vunpack.c.h.b16 %v1665
    %v2002 = vunpack.c.l.b16 %v1666
    %v2003 = vunpack.c.h.b16 %v1666
    %v2004 = vunpack.c.l.b16 %v1667
    %v2005 = vunpack.c.h.b16 %v1667
    %v2006 = vunpack.c.l.b16 %v1668
    %v2007 = vunpack.c.h.b16 %v1668
    %v2008 = vunpack.c.l.b16 %v1669
    %v2009 = vunpack.c.h.b16 %v1669
    %v2010 = vunpack.c.l.b16 %v1670
    %v2011 = vunpack.c.h.b16 %v1670
    %v2012 = vunpack.c.l.b16 %v1671
    %v2013 = vunpack.c.h.b16 %v1671
    %v2014 = vunpack.c.l.b16 %v1672
    %v2015 = vunpack.c.h.b16 %v1672
    %v2016 = vunpack.c.l.b16 %v1673
    %v2017 = vunpack.c.h.b16 %v1673
    %v2018 = vunpack.c.l.b16 %v1674
    %v2019 = vunpack.c.h.b16 %v1674
    %v2020 = vunpack.c.l.b16 %v1675
    %v2021 = vunpack.c.h.b16 %v1675
    %v2022 = vunpack.c.l.b16 %v1676
    %v2023 = vunpack.c.h.b16 %v1676
    %v2024 = vunpack.c.l.b16 %v1677
    %v2025 = vunpack.c.h.b16 %v1677
    %v2026 = vunpack.c.l.b16 %v1678
    %v2027 = vunpack.c.h.b16 %v1678
    %v2028 = vunpack.c.l.b16 %v1679
    %v2029 = vunpack.c.h.b16 %v1679
    %v2030 = vunpack.c.l.b16 %v1680
    %v2031 = vunpack.c.h.b16 %v1680
    %v2032 = vunpack.c.l.b16 %v1681
    %v2033 = vunpack.c.h.b16 %v1681
    %v2034 = vunpack.c.l.b16 %v1682
    %v2035 = vunpack.c.h.b16 %v1682
    %v2036 = vunpack.c.l.b16 %v1683
    %v2037 = vunpack.c.h.b16 %v1683
    %v2038 = vunpack.c.l.b16 %v1684
    %v2039 = vunpack.c.h.b16 %v1684
    %v2040 = vunpack.c.l.b16 %v1685
    %v2041 = vunpack.c.h.b16 %v1685
    %v2042 = vunpack.c.l.b16 %v1686
    %v2043 = vunpack.c.h.b16 %v1686
    %v2044 = vunpack.c.l.b16 %v1687
    %v2045 = vunpack.c.h.b16 %v1687
    %v2046 = vunpack.c.l.b16 %v1688
    %v2047 = vunpack.c.h.b16 %v1688
    %v2048 = vunpack.c.l.b16 %v1689
    %v2049 = vunpack.c.h.b16 %v1689
    %v2050 = vunpack.c.l.b16 %v1690
    %v2051 = vunpack.c.h.b16 %v1690
    %v2052 = vunpack.c.l.b16 %v1691
    %v2053 = vunpack.c.h.b16 %v1691
    %v2054 = vunpack.c.l.b16 %v1692
    %v2055 = vunpack.c.h.b16 %v1692
    %v2056 = vunpack.c.l.b16 %v1693
    %v2057 = vunpack.c.h.b16 %v1693
    %v2058 = vunpack.c.l.b16 %v1694
    %v2059 = vunpack.c.h.b16 %v1694
    %v2060 = vunpack.c.l.b16 %v1695
    %v2061 = vunpack.c.h.b16 %v1695
    %v2062 = vunpack.c.l.b16 %v1696
    %v2063 = vunpack.c.h.b16 %v1696
    %v2064 = vunpack.c.l.b16 %v1697
    %v2065 = vunpack.c.h.b16 %v1697
    %v2066 = vunpack.c.l.b16 %v1698
    %v2067 = vunpack.c.h.b16 %v1698
    %v2068 = vunpack.c.l.b16 %v1699
    %v2069 = vunpack.c.h.b16 %v1699
    %v2070 = vunpack.c.l.b16 %v1700
    %v2071 = vunpack.c.h.b16 %v1700
    %v2072 = vunpack.c.l.b16 %v1701
    %v2073 = vunpack.c.h.b16 %v1701
    %v2074 = vunpack.c.l.b16 %v1702
    %v2075 = vunpack.c.h.b16 %v1702
    %v2076 = vunpack.c.l.b16 %v1703
    %v2077 = vunpack.c.h.b16 %v1703
    %v2078 = vunpack.c.l.b16 %v1704
    %v2079 = vunpack.c.h.b16 %v1704
    %v2080 = vunpack.c.l.b16 %v1705
    %v2081 = vunpack.c.h.b16 %v1705
    %v2082 = vunpack.c.l.b16 %v1706
    %v2083 = vunpack.c.h.b16 %v1706
    %v2084 = vunpack.c.l.b16 %v1707
    %v2085 = vunpack.c.h.b16 %v1707
    %v2086 = vunpack.c.l.b16 %v1708
    %v2087 = vunpack.c.h.b16 %v1708
    %v2088 = vunpack.c.l.b16 %v1709
    %v2089 = vunpack.c.h.b16 %v1709
    %v2090 = vunpack.c.l.b16 %v1710
    %v2091 = vunpack.c.h.b16 %v1710
    %v2092 = vunpack.c.l.b16 %v1711
    %v2093 = vunpack.c.h.b16 %v1711
    %v2094 = vunpack.c.l.b16 %v1712
    %v2095 = vunpack.c.h.b16 %v1712
    %v2096 = vunpack.c.l.b16 %v1713
    %v2097 = vunpack.c.h.b16 %v1713
    %v2098 = vunpack.c.l.b16 %v1714
    %v2099 = vunpack.c.h.b16 %v1714
    %v2100 = vunpack.c.l.b16 %v1715
    %v2101 = vunpack.c.h.b16 %v1715
    %v2102 = vunpack.c.l.b16 %v1716
    %v2103 = vunpack.c.h.b16 %v1716
    %v2104 = vunpack.c.l.b16 %v1717
    %v2105 = vunpack.c.h.b16 %v1717
    %v2106 = vunpack.c.l.b16 %v1718
    %v2107 = vunpack.c.h.b16 %v1718
    %v2108 = vunpack.c.l.b16 %v1719
    %v2109 = vunpack.c.h.b16 %v1719
    %v2110 = vunpack.c.l.b16 %v1720
    %v2111 = vunpack.c.h.b16 %v1720
    %v2112 = vunpack.c.l.b16 %v1721
    %v2113 = vunpack.c.h.b16 %v1721
    %v2114 = vunpack.c.l.b16 %v1722
    %v2115 = vunpack.c.h.b16 %v1722
    %v2116 = vunpack.c.l.b16 %v1723
    %v2117 = vunpack.c.h.b16 %v1723
    %v2118 = vunpack.c.l.b16 %v1724
    %v2119 = vunpack.c.h.b16 %v1724
    %v2120 = vunpack.c.l.b16 %v1725
    %v2121 = vunpack.c.h.b16 %v1725
    %v2122 = vunpack.c.l.b16 %v1726
    %v2123 = vunpack.c.h.b16 %v1726
    %v2124 = vunpack.c.l.b16 %v1727
    %v2125 = vunpack.c.h.b16 %v1727
    %v2126 = vunpack.c.l.b16 %v1728
    %v2127 = vunpack.c.h.b16 %v1728
    %v2128 = vunpack.c.l.b16 %v1729
    %v2129 = vunpack.c.h.b16 %v1729
    %v2130 = vunpack.c.l.b16 %v1730
    %v2131 = vunpack.c.h.b16 %v1730
    %v2132 = vunpack.c.l.b16 %v1731
    %v2133 = vunpack.c.h.b16 %v1731
    %v2134 = vunpack.c.l.b16 %v1732
    %v2135 = vunpack.c.h.b16 %v1732
    %v2136 = vunpack.c.l.b16 %v1733
    %v2137 = vunpack.c.h.b16 %v1733
    %v2138 = vunpack.c.l.b16 %v1734
    %v2139 = vunpack.c.h.b16 %v1734
    %v2140 = vunpack.c.l.b16 %v1735
    %v2141 = vunpack.c.h.b16 %v1735
    %v2142 = vpack.c.b16 %v1890, %v1886
    %v2143 = vpack.c.b16 %v1891, %v1887
    %v2144 = vpack.c.b16 %v1892, %v1888
    %v2145 = vpack.c.b16 %v1893, %v1889
    %v2146 = vpack.c.b16 %v1898, %v1894
    %v2147 = vpack.c.b16 %v1899, %v1895
    %v2148 = vpack.c.b16 %v1900, %v1896
    %v2149 = vpack.c.b16 %v1901, %v1897
    %v2150 = vpack.c.b16 %v1906, %v1902
    %v2151 = vpack.c.b16 %v1907, %v1903
    %v2152 = vpack.c.b16 %v1908, %v1904
    %v2153 = vpack.c.b16 %v1909, %v1905
    %v2154 = vpack.c.b16 %v1914, %v1910
    %v2155 = vpack.c.b16 %v1915, %v1911
    %v2156 = vpack.c.b16 %v1916, %v1912
    %v2157 = vpack.c.b16 %v1917, %v1913
    %v2158 = vpack.c.b16 %v1922, %v1918
    %v2159 = vpack.c.b16 %v1923, %v1919
    %v2160 = vpack.c.b16 %v1924, %v1920
    %v2161 = vpack.c.b16 %v1925, %v1921
    %v2162 = vpack.c.b16 %v1930, %v1926
    %v2163 = vpack.c.b16 %v1931, %v1927
    %v2164 = vpack.c.b16 %v1932, %v1928
    %v2165 = vpack.c.b16 %v1933, %v1929
    %v2166 = vpack.c.b16 %v1938, %v1934
    %v2167 = vpack.c.b16 %v1939, %v1935
    %v2168 = vpack.c.b16 %v1940, %v1936
    %v2169 = vpack.c.b16 %v1941, %v1937
    %v2170 = vpack.c.b16 %v1946, %v1942
    %v2171 = vpack.c.b16 %v1947, %v1943
    %v2172 = vpack.c.b16 %v1948, %v1944
    %v2173 = vpack.c.b16 %v1949, %v1945
    %v2174 = vpack.c.b16 %v1954, %v1950
    %v2175 = vpack.c.b16 %v1955, %v1951
    %v2176 = vpack.c.b16 %v1956, %v1952
    %v2177 = vpack.c.b16 %v1957, %v1953
    %v2178 = vpack.c.b16 %v1962, %v1958
    %v2179 = vpack.c.b16 %v1963, %v1959
    %v2180 = vpack.c.b16 %v1964, %v1960
    %v2181 = vpack.c.b16 %v1965, %v1961
    %v2182 = vpack.c.b16 %v1970, %v1966
    %v2183 = vpack.c.b16 %v1971, %v1967
    %v2184 = vpack.c.b16 %v1972, %v1968
    %v2185 = vpack.c.b16 %v1973, %v1969
    %v2186 = vpack.c.b16 %v1978, %v1974
    %v2187 = vpack.c.b16 %v1979, %v1975
    %v2188 = vpack.c.b16 %v1980, %v1976
    %v2189 = vpack.c.b16 %v1981, %v1977
    %v2190 = vpack.c.b16 %v1986, %v1982
    %v2191 = vpack.c.b16 %v1987, %v1983
    %v2192 = vpack.c.b16 %v1988, %v1984
    %v2193 = vpack.c.b16 %v1989, %v1985
    %v2194 = vpack.c.b16 %v1994, %v1990
    %v2195 = vpack.c.b16 %v1995, %v1991
    %v2196 = vpack.c.b16 %v1996, %v1992
    %v2197 = vpack.c.b16 %v1997, %v1993
    %v2198 = vpack.c.b16 %v2002, %v1998
    %v2199 = vpack.c.b16 %v2003, %v1999
    %v2200 = vpack.c.b16 %v2004, %v2000
    %v2201 = vpack.c.b16 %v2005, %v2001
    %v2202 = vpack.c.b16 %v2010, %v2006
    %v2203 = vpack.c.b16 %v2011, %v2007
    %v2204 = vpack.c.b16 %v2012, %v2008
    %v2205 = vpack.c.b16 %v2013, %v2009
    %v2206 = vpack.c.b16 %v2018, %v2014
    %v2207 = vpack.c.b16 %v2019, %v2015
    %v2208 = vpack.c.b16 %v2020, %v2016
    %v2209 = vpack.c.b16 %v2021, %v2017
    %v2210 = vpack.c.b16 %v2026, %v2022
    %v2211 = vpack.c.b16 %v2027, %v2023
    %v2212 = vpack.c.b16 %v2028, %v2024
    %v2213 = vpack.c.b16 %v2029, %v2025
    %v2214 = vpack.c.b16 %v2034, %v2030
    %v2215 = vpack.c.b16 %v2035, %v2031
    %v2216 = vpack.c.b16 %v2036, %v2032
    %v2217 = vpack.c.b16 %v2037, %v2033
    %v2218 = vpack.c.b16 %v2042, %v2038
    %v2219 = vpack.c.b16 %v2043, %v2039
    %v2220 = vpack.c.b16 %v2044, %v2040
    %v2221 = vpack.c.b16 %v2045, %v2041
    %v2222 = vpack.c.b16 %v2050, %v2046
    %v2223 = vpack.c.b16 %v2051, %v2047
    %v2224 = vpack.c.b16 %v2052, %v2048
    %v2225 = vpack.c.b16 %v2053, %v2049
    %v2226 = vpack.c.b16 %v2058, %v2054
    %v2227 = vpack.c.b16 %v2059, %v2055
    %v2228 = vpack.c.b16 %v2060, %v2056
    %v2229 = vpack.c.b16 %v2061, %v2057
    %v2230 = vpack.c.b16 %v2066, %v2062
    %v2231 = vpack.c.b16 %v2067, %v2063
    %v2232 = vpack.c.b16 %v2068, %v2064
    %v2233 = vpack.c.b16 %v2069, %v2065
    %v2234 = vpack.c.b16 %v2074, %v2070
    %v2235 = vpack.c.b16 %v2075, %v2071
    %v2236 = vpack.c.b16 %v2076, %v2072
    %v2237 = vpack.c.b16 %v2077, %v2073
    %v2238 = vpack.c.b16 %v2082, %v2078
    %v2239 = vpack.c.b16 %v2083, %v2079
    %v2240 = vpack.c.b16 %v2084, %v2080
    %v2241 = vpack.c.b16 %v2085, %v2081
    %v2242 = vpack.c.b16 %v2090, %v2086
    %v2243 = vpack.c.b16 %v2091, %v2087
    %v2244 = vpack.c.b16 %v2092, %v2088
    %v2245 = vpack.c.b16 %v2093, %v2089
    %v2246 = vpack.c.b16 %v2098, %v2094
    %v2247 = vpack.c.b16 %v2099, %v2095
    %v2248 = vpack.c.b16 %v2100, %v2096
    %v2249 = vpack.c.b16 %v2101, %v2097
    %v2250 = vpack.c.b16 %v2106, %v2102
    %v2251 = vpack.c.b16 %v2107, %v2103
    %v2252 = vpack.c.b16 %v2108, %v2104
    %v2253 = vpack.c.b16 %v2109, %v2105
    %v2254 = vpack.c.b16 %v2114, %v2110
    %v2255 = vpack.c.b16 %v2115, %v2111
    %v2256 = vpack.c.b16 %v2116, %v2112
    %v2257 = vpack.c.b16 %v2117, %v2113
    %v2258 = vpack.c.b16 %v2122, %v2118
    %v2259 = vpack.c.b16 %v2123, %v2119
    %v2260 = vpack.c.b16 %v2124, %v2120
    %v2261 = vpack.c.b16 %v2125, %v2121
    %v2262 = vpack.c.b16 %v2130, %v2126
    %v2263 = vpack.c.b16 %v2131, %v2127
    %v2264 = vpack.c.b16 %v2132, %v2128
    %v2265 = vpack.c.b16 %v2133, %v2129
    %v2266 = vpack.c.b16 %v2138, %v2134
    %v2267 = vpack.c.b16 %v2139, %v2135
    %v2268 = vpack.c.b16 %v2140, %v2136
    %v2269 = vpack.c.b16 %v2141, %v2137
    %2398 = vmatprep.subr.bf16.mxu0 %v2143
    %2399 = vmatpush1.bf16.msra.mxu0 %v2142
    %2400 = vmatprep.subr.bf16.mxu0 %v2147
    %2401 = vmatpush1.bf16.msra.mxu0 %v2146
    %2402 = vmatprep.subr.bf16.mxu0 %v2151
    %2403 = vmatpush1.bf16.msra.mxu0 %v2150
    %2404 = vmatprep.subr.bf16.mxu0 %v2155
    %2405 = vmatpush1.bf16.msra.mxu0 %v2154
    %2406 = vmatprep.subr.bf16.mxu0 %v2159
    %2407 = vmatpush1.bf16.msra.mxu0 %v2158
    %2408 = vmatprep.subr.bf16.mxu0 %v2163
    %2409 = vmatpush1.bf16.msra.mxu0 %v2162
    %2410 = vmatprep.subr.bf16.mxu0 %v2167
    %2411 = vmatpush1.bf16.msra.mxu0 %v2166
    %2412 = vmatprep.subr.bf16.mxu0 %v2171
    %2413 = vmatpush1.bf16.msra.mxu0 %v2170
    %2414 = vmatprep.subr.bf16.mxu0 %v2175
    %2415 = vmatpush1.bf16.msra.mxu0 %v2174
    %2416 = vmatprep.subr.bf16.mxu0 %v2179
    %2417 = vmatpush1.bf16.msra.mxu0 %v2178
    %2418 = vmatprep.subr.bf16.mxu0 %v2183
    %2419 = vmatpush1.bf16.msra.mxu0 %v2182
    %2420 = vmatprep.subr.bf16.mxu0 %v2187
    %2421 = vmatpush1.bf16.msra.mxu0 %v2186
    %2422 = vmatprep.subr.bf16.mxu0 %v2191
    %2423 = vmatpush1.bf16.msra.mxu0 %v2190
    %2424 = vmatprep.subr.bf16.mxu0 %v2195
    %2425 = vmatpush1.bf16.msra.mxu0 %v2194
    %2426 = vmatprep.subr.bf16.mxu0 %v2199
    %2427 = vmatpush1.bf16.msra.mxu0 %v2198
    %2428 = vmatprep.subr.bf16.mxu0 %v2203
    %2429 = vmatpush1.bf16.msra.mxu0 %v2202
    %2430 = vmatprep.mubr.bf16.mxu0 %v1605
    %2431 = vmatmul.mubr.bf16.gmra.mrb[0].mxu0 %v1604
    %v2432 = vpop.f32.mrb[0].mxu0
    %v2433 = vadd.f32 %v1741, %v2432
    %v2434 = vpop.f32.mrb[0].mxu0
    %v2435 = vadd.f32 %v1745, %v2434
    %v2436 = vpop.f32.mrb[0].mxu0
    %v2437 = vadd.f32 %v1741, %v2436
    %v2438 = vpop.f32.mrb[0].mxu0
    %v2439 = vadd.f32 %v1745, %v2438
    %2440 = vdwg.mxu0
    %2441 = vmatprep.subr.bf16.mxu0 %v2207
    %2442 = vmatpush1.bf16.msra.mxu0 %v2206
    %2443 = vmatprep.subr.bf16.mxu0 %v2211
    %2444 = vmatpush1.bf16.msra.mxu0 %v2210
    %2445 = vmatprep.subr.bf16.mxu0 %v2215
    %2446 = vmatpush1.bf16.msra.mxu0 %v2214
    %2447 = vmatprep.subr.bf16.mxu0 %v2219
    %2448 = vmatpush1.bf16.msra.mxu0 %v2218
    %2449 = vmatprep.subr.bf16.mxu0 %v2223
    %2450 = vmatpush1.bf16.msra.mxu0 %v2222
    %2451 = vmatprep.subr.bf16.mxu0 %v2227
    %2452 = vmatpush1.bf16.msra.mxu0 %v2226
    %2453 = vmatprep.subr.bf16.mxu0 %v2231
    %2454 = vmatpush1.bf16.msra.mxu0 %v2230
    %2455 = vmatprep.subr.bf16.mxu0 %v2235
    %2456 = vmatpush1.bf16.msra.mxu0 %v2234
    %2457 = vmatprep.subr.bf16.mxu0 %v2239
    %2458 = vmatpush1.bf16.msra.mxu0 %v2238
    %2459 = vmatprep.subr.bf16.mxu0 %v2243
    %2460 = vmatpush1.bf16.msra.mxu0 %v2242
    %2461 = vmatprep.subr.bf16.mxu0 %v2247
    %2462 = vmatpush1.bf16.msra.mxu0 %v2246
    %2463 = vmatprep.subr.bf16.mxu0 %v2251
    %2464 = vmatpush1.bf16.msra.mxu0 %v2250
    %2465 = vmatprep.subr.bf16.mxu0 %v2255
    %2466 = vmatpush1.bf16.msra.mxu0 %v2254
    %2467 = vmatprep.subr.bf16.mxu0 %v2259
    %2468 = vmatpush1.bf16.msra.mxu0 %v2258
    %2469 = vmatprep.subr.bf16.mxu0 %v2263
    %2470 = vmatpush1.bf16.msra.mxu0 %v2262
    %2471 = vmatprep.subr.bf16.mxu0 %v2267
    %2472 = vmatpush1.bf16.msra.mxu0 %v2266
    %2473 = vmatprep.mubr.bf16.mxu0 %v1607
    %2474 = vmatmul.mubr.bf16.gmra.mrb[0].mxu0 %v1606
    %v2475 = vpop.f32.mrb[0].mxu0
    %v2476 = vadd.f32 %v2433, %v2475
    %v2477 = vpop.f32.mrb[0].mxu0
    %v2478 = vadd.f32 %v2435, %v2477
    %v2479 = vpop.f32.mrb[0].mxu0
    %v2480 = vadd.f32 %v2437, %v2479
    %v2481 = vpop.f32.mrb[0].mxu0
    %v2482 = vadd.f32 %v2439, %v2481
    %2483 = vdwg.mxu0
    %2484 = vmatprep.subr.bf16.mxu0 %v2145
    %2485 = vmatpush1.bf16.msra.mxu0 %v2144
    %2486 = vmatprep.subr.bf16.mxu0 %v2149
    %2487 = vmatpush1.bf16.msra.mxu0 %v2148
    %2488 = vmatprep.subr.bf16.mxu0 %v2153
    %2489 = vmatpush1.bf16.msra.mxu0 %v2152
    %2490 = vmatprep.subr.bf16.mxu0 %v2157
    %2491 = vmatpush1.bf16.msra.mxu0 %v2156
    %2492 = vmatprep.subr.bf16.mxu0 %v2161
    %2493 = vmatpush1.bf16.msra.mxu0 %v2160
    %2494 = vmatprep.subr.bf16.mxu0 %v2165
    %2495 = vmatpush1.bf16.msra.mxu0 %v2164
    %2496 = vmatprep.subr.bf16.mxu0 %v2169
    %2497 = vmatpush1.bf16.msra.mxu0 %v2168
    %2498 = vmatprep.subr.bf16.mxu0 %v2173
    %2499 = vmatpush1.bf16.msra.mxu0 %v2172
    %2500 = vmatprep.subr.bf16.mxu0 %v2177
    %2501 = vmatpush1.bf16.msra.mxu0 %v2176
    %2502 = vmatprep.subr.bf16.mxu0 %v2181
    %2503 = vmatpush1.bf16.msra.mxu0 %v2180
    %2504 = vmatprep.subr.bf16.mxu0 %v2185
    %2505 = vmatpush1.bf16.msra.mxu0 %v2184
    %2506 = vmatprep.subr.bf16.mxu0 %v2189
    %2507 = vmatpush1.bf16.msra.mxu0 %v2188
    %2508 = vmatprep.subr.bf16.mxu0 %v2193
    %2509 = vmatpush1.bf16.msra.mxu0 %v2192
    %2510 = vmatprep.subr.bf16.mxu0 %v2197
    %2511 = vmatpush1.bf16.msra.mxu0 %v2196
    %2512 = vmatprep.subr.bf16.mxu0 %v2201
    %2513 = vmatpush1.bf16.msra.mxu0 %v2200
    %2514 = vmatprep.subr.bf16.mxu0 %v2205
    %2515 = vmatpush1.bf16.msra.mxu0 %v2204
    %2516 = vmatprep.mubr.bf16.mxu0 %v1605
    %2517 = vmatmul.mubr.bf16.gmra.mrb[0].mxu0 %v1604
    %v2518 = vpop.f32.mrb[0].mxu0
    %v2519 = vadd.f32 %v1749, %v2518
    %v2520 = vpop.f32.mrb[0].mxu0
    %v2521 = vadd.f32 %v1753, %v2520
    %v2522 = vpop.f32.mrb[0].mxu0
    %v2523 = vadd.f32 %v1749, %v2522
    %v2524 = vpop.f32.mrb[0].mxu0
    %v2525 = vadd.f32 %v1753, %v2524
    %2526 = vdwg.mxu0
    %2527 = vmatprep.subr.bf16.mxu0 %v2209
    %2528 = vmatpush1.bf16.msra.mxu0 %v2208
    %2529 = vmatprep.subr.bf16.mxu0 %v2213
    %2530 = vmatpush1.bf16.msra.mxu0 %v2212
    %2531 = vmatprep.subr.bf16.mxu0 %v2217
    %2532 = vmatpush1.bf16.msra.mxu0 %v2216
    %2533 = vmatprep.subr.bf16.mxu0 %v2221
    %2534 = vmatpush1.bf16.msra.mxu0 %v2220
    %2535 = vmatprep.subr.bf16.mxu0 %v2225
    %2536 = vmatpush1.bf16.msra.mxu0 %v2224
    %2537 = vmatprep.subr.bf16.mxu0 %v2229
    %2538 = vmatpush1.bf16.msra.mxu0 %v2228
    %2539 = vmatprep.subr.bf16.mxu0 %v2233
    %2540 = vmatpush1.bf16.msra.mxu0 %v2232
    %2541 = vmatprep.subr.bf16.mxu0 %v2237
    %2542 = vmatpush1.bf16.msra.mxu0 %v2236
    %2543 = vmatprep.subr.bf16.mxu0 %v2241
    %2544 = vmatpush1.bf16.msra.mxu0 %v2240
    %2545 = vmatprep.subr.bf16.mxu0 %v2245
    %2546 = vmatpush1.bf16.msra.mxu0 %v2244
    %2547 = vmatprep.subr.bf16.mxu0 %v2249
    %2548 = vmatpush1.bf16.msra.mxu0 %v2248
    %2549 = vmatprep.subr.bf16.mxu0 %v2253
    %2550 = vmatpush1.bf16.msra.mxu0 %v2252
    %2551 = vmatprep.subr.bf16.mxu0 %v2257
    %2552 = vmatpush1.bf16.msra.mxu0 %v2256
    %2553 = vmatprep.subr.bf16.mxu0 %v2261
    %2554 = vmatpush1.bf16.msra.mxu0 %v2260
    %2555 = vmatprep.subr.bf16.mxu0 %v2265
    %2556 = vmatpush1.bf16.msra.mxu0 %v2264
    %2557 = vmatprep.subr.bf16.mxu0 %v2269
    %2558 = vmatpush1.bf16.msra.mxu0 %v2268
    %2559 = vmatprep.mubr.bf16.mxu0 %v1607
    %2560 = vmatmul.mubr.bf16.gmra.mrb[0].mxu0 %v1606
    %v2561 = vpop.f32.mrb[0].mxu0
    %v2562 = vadd.f32 %v2519, %v2561
    %v2563 = vpop.f32.mrb[0].mxu0
    %v2564 = vadd.f32 %v2521, %v2563
    %v2565 = vpop.f32.mrb[0].mxu0
    %v2566 = vadd.f32 %v2523, %v2565
    %v2567 = vpop.f32.mrb[0].mxu0
    %v2568 = vadd.f32 %v2525, %v2567
    %2569 = vdwg.mxu0
    %v2570 = vmax.f32 %v2476, 0.0
    %v2571 = vmax.f32 %v2478, 0.0
    %v2572 = vmax.f32 %v2562, 0.0
    %v2573 = vmax.f32 %v2564, 0.0
    %v2574 = vmax.f32 %v2480, 0.0
    %v2575 = vmax.f32 %v2482, 0.0
    %v2576 = vmax.f32 %v2566, 0.0
    %v2577 = vmax.f32 %v2568, 0.0
    %v2578 = vpack.c.bf16 %v2574, %v2570
    %v2579 = vpack.c.bf16 %v2575, %v2571
    %v2580 = vpack.c.bf16 %v2576, %v2572
    %v2581 = vpack.c.bf16 %v2577, %v2573
    %v2586 = vunpack.c.l.b16 %v2578
    %v2587 = vunpack.c.l.b16 %v2579
    %v2588 = vunpack.c.l.b16 %v2580
    %v2589 = vunpack.c.l.b16 %v2581
    %v2590 = vunpack.c.h.b16 %v2578
    %v2591 = vunpack.c.h.b16 %v2579
    %v2592 = vunpack.c.h.b16 %v2580
    %v2593 = vunpack.c.h.b16 %v2581
    %v2594 = vpack.c.b16 %v2587, %v2586
    %v2595 = vpack.c.b16 %v2589, %v2588
    %v2596 = vpack.c.b16 %v2591, %v2590
    %v2597 = vpack.c.b16 %v2593, %v2592
    %2602 = vst [vmem:[%s11] sm:$0xff] %v2594
    %2603 = vst [vmem:[%s11 + $0x8] sm:$0xff] %v2595
    %2604 = vst [vmem:[%s11 + $0x10] sm:$0xff] %v2596
    %2605 = vst [vmem:[%s11 + $0x18] sm:$0xff] %v2597
    // Predicated region
    $region50: #{archetypal_head_forward.4} parent=1 // pred_check
      _
    $region51: #{archetypal_head_forward.4} parent=1 // pred_check_branch
      %2607 = sbr.rel (0) target = $region53
    $region52: #{archetypal_head_forward.4} parent=1 // pred_region
      _
    $region53: #{archetypal_head_forward.4} parent=1 // pred_fallthru
      _
    // Predicated region
    $region54: #{archetypal_head_forward.4} parent=1 // pred_check
      _
    $region55: #{archetypal_head_forward.4} parent=1 // pred_check_branch
      %2609 = sbr.rel (0) target = $region57
    $region56: #{archetypal_head_forward.4} parent=1 // pred_region
      _
    $region57: #{archetypal_head_forward.4} parent=1 // pred_fallthru
      _
    // Predicated region
    $region58: #{archetypal_head_forward.4} parent=1 // pred_check
      _
    $region59: #{archetypal_head_forward.4} parent=1 // pred_check_branch
      %2611 = sbr.rel (0) target = $region61
    $region60: #{archetypal_head_forward.4} parent=1 // pred_region
      _
    $region61: #{archetypal_head_forward.4} parent=1 // pred_fallthru
      _
    // Predicated region
    $region62: #{archetypal_head_forward.4} parent=1 // pred_check
      _
    $region63: #{archetypal_head_forward.4} parent=1 // pred_check_branch
      %2613 = sbr.rel (0) target = $region65
    $region64: #{archetypal_head_forward.4} parent=1 // pred_region
      _
    $region65: #{archetypal_head_forward.4} parent=1 // pred_fallthru
      _
    %2614 = vsyncpa [#allocation3], 1
    %2615 = vsyncpa [#allocation5], 1

</llo_original>
